<compile_context>
chip_gen: v7x
topology: tpu7x:2x2x1
jax: 0.10.0
libtpu: 0.0.40
codegen_flags: <defaults>
</compile_context>

<pallas_src>
import functools

import jax
import jax.numpy as jnp
from jax import lax
from jax.experimental import pallas as pl
from jax.experimental.pallas import tpu as pltpu

C = 3                       # matches the module-level constant in the PyTorch file
OC, KH, KW = 9, 5, 5
STRIDE, PAD = 2, 2


def _conv_relu_kernel(ph_ref, w_ref, b_ref, o_ref, *, h_out, w_out):
    # ph_ref: (tb, 4, Hh, Wh) polyphase planes of the zero-padded input (VMEM),
    #         plane index = (kh % 2) * 2 + (kw % 2), Hh = h_out + 2, Wh = w_out + 2
    # w_ref : (OC, KH*KW) float32 in SMEM (scalar reads, broadcast on the VPU)
    # b_ref : (OC,)       float32 in SMEM
    # o_ref : (tb, OC, h_out, w_out)
    accs = [None] * OC
    k = 0
    for kh in range(KH):
        dh = kh // 2
        for kw in range(KW):
            dw = kw // 2
            plane = (kh % 2) * 2 + (kw % 2)
            # unit-stride shifted window of the polyphase plane == stride-2 tap
            tap = ph_ref[:, plane, dh:dh + h_out, dw:dw + w_out]
            for oc in range(OC):
                term = tap * w_ref[oc, k]
                accs[oc] = term if accs[oc] is None else accs[oc] + term
            k += 1
    for oc in range(OC):
        o_ref[:, oc, :, :] = jnp.maximum(accs[oc] + b_ref[oc], 0.0).astype(o_ref.dtype)


def model_level1_i1_forward(x, weight, bias):
    """x: (N, C, H, W) float32. weight: (9, 1, 5, 5). bias: (9,)."""
    N, Ct, H, W = x.shape
    B = N * Ct                                    # folded batch, 1 in-channel each
    H_out = (H + 2 * PAD - KH) // STRIDE + 1
    W_out = (W + 2 * PAD - KW) // STRIDE + 1
    Hh, Wh = H_out + 2, W_out + 2                 # rows/cols per polyphase plane

    # ---- glue: zero-pad + polyphase (space-to-depth) split, ~1x input bytes ----
    x2 = x.reshape(B, H, W)
    x_pad = jnp.pad(
        x2, ((0, 0), (PAD, 2 * Hh - H - PAD), (PAD, 2 * Wh - W - PAD)))
    # (B, 2*Hh, 2*Wh) -> (B, Hh, 2, Wh, 2) -> (B, 2, 2, Hh, Wh) -> (B, 4, Hh, Wh)
    phases = x_pad.reshape(B, Hh, 2, Wh, 2)
    phases = jnp.transpose(phases, (0, 2, 4, 1, 3)).reshape(B, 4, Hh, Wh)

    # ---- tile selection: big batch tiles, bounded VMEM, >= 2 grid steps ----
    def rup(a, b):
        return (a + b - 1) // b * b

    tile_bytes = (4 * rup(Hh, 8) * rup(Wh, 128)
                  + OC * rup(H_out, 8) * rup(W_out, 128)) * 4
    vmem_budget = 6 * 1024 * 1024                 # per step; 2x (double-buffered)
                                                  # stays under v5e/v6e/v7x default
                                                  # scoped-VMEM limits
    tb = max(1, min(B, vmem_budget // max(tile_bytes, 1), 256))
    if tb >= B and B > 1:
        tb = (B + 1) // 2                         # keep >= 2 parallel grid steps
    B_pad = rup(B, tb)
    if B_pad != B:
        phases = jnp.pad(phases, ((0, B_pad - B), (0, 0), (0, 0), (0, 0)))

    w2 = weight.reshape(OC, KH * KW).astype(jnp.float32)   # SMEM scalar table
    b2 = bias.astype(jnp.float32)

    kernel = functools.partial(_conv_relu_kernel, h_out=H_out, w_out=W_out)

    # TODO(synk): for very large images, flattening (H_out, W_out) into a single
    # lane dimension would fill output vregs further, but needs an in-kernel
    # sublane->lane relayout; the (tb, OC, H_out, W_out) layout keeps stores in
    # final NCHW order with no post-transpose over the (2.25x-input-size) result.
    out = pl.pallas_call(
        kernel,
        out_shape=jax.ShapeDtypeStruct((B_pad, OC, H_out, W_out), x.dtype),
        grid_spec=pltpu.PrefetchScalarGridSpec(
            num_scalar_prefetch=0,
            grid=(B_pad // tb,),
            in_specs=[
                pl.BlockSpec((tb, 4, Hh, Wh), lambda i: (i, 0, 0, 0)),
                pl.BlockSpec(memory_space=pltpu.MemorySpace.SMEM),   # weights
                pl.BlockSpec(memory_space=pltpu.MemorySpace.SMEM),   # bias
            ],
            out_specs=pl.BlockSpec((tb, OC, H_out, W_out),
                                   lambda i: (i, 0, 0, 0)),
        ),
        compiler_params=pltpu.CompilerParams(
            dimension_semantics=("parallel",)),
    )(phases, w2, b2)

    out = out[:B]                                 # (N*C, 9, H_out, W_out)
    # matches PyTorch's contiguous view(-1, 9*C, H_out, W_out)
    return out.reshape(N, OC * Ct, H_out, W_out)


def _reference_forward(x, weight, bias):
    """Pure-JAX reference using lax.conv (same semantics as the PyTorch module)."""
    N, Ct, H, W = x.shape
    x2 = x.reshape(N * Ct, 1, H, W)
    y = lax.conv_general_dilated(
        x2, weight, window_strides=(STRIDE, STRIDE),
        padding=((PAD, PAD), (PAD, PAD)),
        dimension_numbers=("NCHW", "OIHW", "NCHW"))
    y = jnp.maximum(y + bias.reshape(1, -1, 1, 1), 0.0)
    return y.reshape(N, OC * Ct, y.shape[2], y.shape[3])


if __name__ == "__main__":
    key = jax.random.PRNGKey(0)
    kx, kw, kb = jax.random.split(key, 3)

    N, H, W = 2, 16, 16
    x = jax.random.normal(kx, (N, C, H, W), dtype=jnp.float32)

    # deterministic synthetic parameters (Conv2d(1, 9, 5) shapes)
    weight = jax.random.normal(kw, (9, 1, 5, 5), dtype=jnp.float32) * 0.1
    bias = jax.random.normal(kb, (9,), dtype=jnp.float32) * 0.1

    out = model_level1_i1_forward(x, weight, bias)
    out = jax.block_until_ready(out)

    ref = jax.block_until_ready(_reference_forward(x, weight, bias))
    assert out.shape == (N, 9 * C, 8, 8), out.shape
    assert jnp.allclose(out, ref, atol=1e-4, rtol=1e-4), "mismatch vs reference"

    print("KERNEL_OK")
</pallas_src>

<mosaic_0001>
module attributes {stable_mosaic.version = 11 : i64} {
  func.func @_conv_relu_kernel(%arg0: i32, %arg1: memref<3x4x10x10xf32, #tpu.memory_space<vmem>>, %arg2: memref<9x25xf32, #tpu.memory_space<smem>>, %arg3: memref<9xf32, #tpu.memory_space<smem>>, %arg4: memref<3x9x8x8xf32, #tpu.memory_space<vmem>>) attributes {dimension_semantics = [#tpu.dimension_semantics<parallel>], iteration_bounds = array<i64: 2>, scalar_prefetch = 0 : i64, scratch_operands = 0 : i64, tpu.core_type = #tpu.core_type<tc>, window_params = [{transform_indices = @transform_0, window_bounds = array<i64: 3, 4, 10, 10>}, {transform_indices = @transform_1, window_bounds = array<i64: 9, 25>}, {transform_indices = @transform_2, window_bounds = array<i64: 9>}, {transform_indices = @transform_3, window_bounds = array<i64: 3, 9, 8, 8>}]} {
    %c0 = arith.constant 0 : index
    %c0_0 = arith.constant 0 : index
    %c0_1 = arith.constant 0 : index
    %c0_2 = arith.constant 0 : index
    %0 = vector.load %arg1[%c0, %c0_0, %c0_1, %c0_2] : memref<3x4x10x10xf32, #tpu.memory_space<vmem>>, vector<3x1x8x8xf32>
    %1 = vector.shape_cast %0 : vector<3x1x8x8xf32> to vector<3x8x8xf32>
    %c0_3 = arith.constant 0 : index
    %c0_4 = arith.constant 0 : index
    %2 = memref.load %arg2[%c0_3, %c0_4] : memref<9x25xf32, #tpu.memory_space<smem>>
    %3 = vector.broadcast %2 : f32 to vector<3x8x8xf32>
    %4 = arith.mulf %1, %3 : vector<3x8x8xf32>
    %c1 = arith.constant 1 : index
    %c0_5 = arith.constant 0 : index
    %5 = memref.load %arg2[%c1, %c0_5] : memref<9x25xf32, #tpu.memory_space<smem>>
    %6 = vector.broadcast %5 : f32 to vector<3x8x8xf32>
    %7 = arith.mulf %1, %6 : vector<3x8x8xf32>
    %c2 = arith.constant 2 : index
    %c0_6 = arith.constant 0 : index
    %8 = memref.load %arg2[%c2, %c0_6] : memref<9x25xf32, #tpu.memory_space<smem>>
    %9 = vector.broadcast %8 : f32 to vector<3x8x8xf32>
    %10 = arith.mulf %1, %9 : vector<3x8x8xf32>
    %c3 = arith.constant 3 : index
    %c0_7 = arith.constant 0 : index
    %11 = memref.load %arg2[%c3, %c0_7] : memref<9x25xf32, #tpu.memory_space<smem>>
    %12 = vector.broadcast %11 : f32 to vector<3x8x8xf32>
    %13 = arith.mulf %1, %12 : vector<3x8x8xf32>
    %c4 = arith.constant 4 : index
    %c0_8 = arith.constant 0 : index
    %14 = memref.load %arg2[%c4, %c0_8] : memref<9x25xf32, #tpu.memory_space<smem>>
    %15 = vector.broadcast %14 : f32 to vector<3x8x8xf32>
    %16 = arith.mulf %1, %15 : vector<3x8x8xf32>
    %c5 = arith.constant 5 : index
    %c0_9 = arith.constant 0 : index
    %17 = memref.load %arg2[%c5, %c0_9] : memref<9x25xf32, #tpu.memory_space<smem>>
    %18 = vector.broadcast %17 : f32 to vector<3x8x8xf32>
    %19 = arith.mulf %1, %18 : vector<3x8x8xf32>
    %c6 = arith.constant 6 : index
    %c0_10 = arith.constant 0 : index
    %20 = memref.load %arg2[%c6, %c0_10] : memref<9x25xf32, #tpu.memory_space<smem>>
    %21 = vector.broadcast %20 : f32 to vector<3x8x8xf32>
    %22 = arith.mulf %1, %21 : vector<3x8x8xf32>
    %c7 = arith.constant 7 : index
    %c0_11 = arith.constant 0 : index
    %23 = memref.load %arg2[%c7, %c0_11] : memref<9x25xf32, #tpu.memory_space<smem>>
    %24 = vector.broadcast %23 : f32 to vector<3x8x8xf32>
    %25 = arith.mulf %1, %24 : vector<3x8x8xf32>
    %c8 = arith.constant 8 : index
    %c0_12 = arith.constant 0 : index
    %26 = memref.load %arg2[%c8, %c0_12] : memref<9x25xf32, #tpu.memory_space<smem>>
    %27 = vector.broadcast %26 : f32 to vector<3x8x8xf32>
    %28 = arith.mulf %1, %27 : vector<3x8x8xf32>
    %c0_13 = arith.constant 0 : index
    %c1_14 = arith.constant 1 : index
    %c0_15 = arith.constant 0 : index
    %c0_16 = arith.constant 0 : index
    %29 = vector.load %arg1[%c0_13, %c1_14, %c0_15, %c0_16] : memref<3x4x10x10xf32, #tpu.memory_space<vmem>>, vector<3x1x8x8xf32>
    %30 = vector.shape_cast %29 : vector<3x1x8x8xf32> to vector<3x8x8xf32>
    %c0_17 = arith.constant 0 : index
    %c1_18 = arith.constant 1 : index
    %31 = memref.load %arg2[%c0_17, %c1_18] : memref<9x25xf32, #tpu.memory_space<smem>>
    %32 = vector.broadcast %31 : f32 to vector<3x8x8xf32>
    %33 = arith.mulf %30, %32 : vector<3x8x8xf32>
    %34 = arith.addf %4, %33 : vector<3x8x8xf32>
    %c1_19 = arith.constant 1 : index
    %c1_20 = arith.constant 1 : index
    %35 = memref.load %arg2[%c1_19, %c1_20] : memref<9x25xf32, #tpu.memory_space<smem>>
    %36 = vector.broadcast %35 : f32 to vector<3x8x8xf32>
    %37 = arith.mulf %30, %36 : vector<3x8x8xf32>
    %38 = arith.addf %7, %37 : vector<3x8x8xf32>
    %c2_21 = arith.constant 2 : index
    %c1_22 = arith.constant 1 : index
    %39 = memref.load %arg2[%c2_21, %c1_22] : memref<9x25xf32, #tpu.memory_space<smem>>
    %40 = vector.broadcast %39 : f32 to vector<3x8x8xf32>
    %41 = arith.mulf %30, %40 : vector<3x8x8xf32>
    %42 = arith.addf %10, %41 : vector<3x8x8xf32>
    %c3_23 = arith.constant 3 : index
    %c1_24 = arith.constant 1 : index
    %43 = memref.load %arg2[%c3_23, %c1_24] : memref<9x25xf32, #tpu.memory_space<smem>>
    %44 = vector.broadcast %43 : f32 to vector<3x8x8xf32>
    %45 = arith.mulf %30, %44 : vector<3x8x8xf32>
    %46 = arith.addf %13, %45 : vector<3x8x8xf32>
    %c4_25 = arith.constant 4 : index
    %c1_26 = arith.constant 1 : index
    %47 = memref.load %arg2[%c4_25, %c1_26] : memref<9x25xf32, #tpu.memory_space<smem>>
    %48 = vector.broadcast %47 : f32 to vector<3x8x8xf32>
    %49 = arith.mulf %30, %48 : vector<3x8x8xf32>
    %50 = arith.addf %16, %49 : vector<3x8x8xf32>
    %c5_27 = arith.constant 5 : index
    %c1_28 = arith.constant 1 : index
    %51 = memref.load %arg2[%c5_27, %c1_28] : memref<9x25xf32, #tpu.memory_space<smem>>
    %52 = vector.broadcast %51 : f32 to vector<3x8x8xf32>
    %53 = arith.mulf %30, %52 : vector<3x8x8xf32>
    %54 = arith.addf %19, %53 : vector<3x8x8xf32>
    %c6_29 = arith.constant 6 : index
    %c1_30 = arith.constant 1 : index
    %55 = memref.load %arg2[%c6_29, %c1_30] : memref<9x25xf32, #tpu.memory_space<smem>>
    %56 = vector.broadcast %55 : f32 to vector<3x8x8xf32>
    %57 = arith.mulf %30, %56 : vector<3x8x8xf32>
    %58 = arith.addf %22, %57 : vector<3x8x8xf32>
    %c7_31 = arith.constant 7 : index
    %c1_32 = arith.constant 1 : index
    %59 = memref.load %arg2[%c7_31, %c1_32] : memref<9x25xf32, #tpu.memory_space<smem>>
    %60 = vector.broadcast %59 : f32 to vector<3x8x8xf32>
    %61 = arith.mulf %30, %60 : vector<3x8x8xf32>
    %62 = arith.addf %25, %61 : vector<3x8x8xf32>
    %c8_33 = arith.constant 8 : index
    %c1_34 = arith.constant 1 : index
    %63 = memref.load %arg2[%c8_33, %c1_34] : memref<9x25xf32, #tpu.memory_space<smem>>
    %64 = vector.broadcast %63 : f32 to vector<3x8x8xf32>
    %65 = arith.mulf %30, %64 : vector<3x8x8xf32>
    %66 = arith.addf %28, %65 : vector<3x8x8xf32>
    %c0_35 = arith.constant 0 : index
    %c0_36 = arith.constant 0 : index
    %c0_37 = arith.constant 0 : index
    %c1_38 = arith.constant 1 : index
    %67 = vector.load %arg1[%c0_35, %c0_36, %c0_37, %c1_38] : memref<3x4x10x10xf32, #tpu.memory_space<vmem>>, vector<3x1x8x8xf32>
    %68 = vector.shape_cast %67 : vector<3x1x8x8xf32> to vector<3x8x8xf32>
    %c0_39 = arith.constant 0 : index
    %c2_40 = arith.constant 2 : index
    %69 = memref.load %arg2[%c0_39, %c2_40] : memref<9x25xf32, #tpu.memory_space<smem>>
    %70 = vector.broadcast %69 : f32 to vector<3x8x8xf32>
    %71 = arith.mulf %68, %70 : vector<3x8x8xf32>
    %72 = arith.addf %34, %71 : vector<3x8x8xf32>
    %c1_41 = arith.constant 1 : index
    %c2_42 = arith.constant 2 : index
    %73 = memref.load %arg2[%c1_41, %c2_42] : memref<9x25xf32, #tpu.memory_space<smem>>
    %74 = vector.broadcast %73 : f32 to vector<3x8x8xf32>
    %75 = arith.mulf %68, %74 : vector<3x8x8xf32>
    %76 = arith.addf %38, %75 : vector<3x8x8xf32>
    %c2_43 = arith.constant 2 : index
    %c2_44 = arith.constant 2 : index
    %77 = memref.load %arg2[%c2_43, %c2_44] : memref<9x25xf32, #tpu.memory_space<smem>>
    %78 = vector.broadcast %77 : f32 to vector<3x8x8xf32>
    %79 = arith.mulf %68, %78 : vector<3x8x8xf32>
    %80 = arith.addf %42, %79 : vector<3x8x8xf32>
    %c3_45 = arith.constant 3 : index
    %c2_46 = arith.constant 2 : index
    %81 = memref.load %arg2[%c3_45, %c2_46] : memref<9x25xf32, #tpu.memory_space<smem>>
    %82 = vector.broadcast %81 : f32 to vector<3x8x8xf32>
    %83 = arith.mulf %68, %82 : vector<3x8x8xf32>
    %84 = arith.addf %46, %83 : vector<3x8x8xf32>
    %c4_47 = arith.constant 4 : index
    %c2_48 = arith.constant 2 : index
    %85 = memref.load %arg2[%c4_47, %c2_48] : memref<9x25xf32, #tpu.memory_space<smem>>
    %86 = vector.broadcast %85 : f32 to vector<3x8x8xf32>
    %87 = arith.mulf %68, %86 : vector<3x8x8xf32>
    %88 = arith.addf %50, %87 : vector<3x8x8xf32>
    %c5_49 = arith.constant 5 : index
    %c2_50 = arith.constant 2 : index
    %89 = memref.load %arg2[%c5_49, %c2_50] : memref<9x25xf32, #tpu.memory_space<smem>>
    %90 = vector.broadcast %89 : f32 to vector<3x8x8xf32>
    %91 = arith.mulf %68, %90 : vector<3x8x8xf32>
    %92 = arith.addf %54, %91 : vector<3x8x8xf32>
    %c6_51 = arith.constant 6 : index
    %c2_52 = arith.constant 2 : index
    %93 = memref.load %arg2[%c6_51, %c2_52] : memref<9x25xf32, #tpu.memory_space<smem>>
    %94 = vector.broadcast %93 : f32 to vector<3x8x8xf32>
    %95 = arith.mulf %68, %94 : vector<3x8x8xf32>
    %96 = arith.addf %58, %95 : vector<3x8x8xf32>
    %c7_53 = arith.constant 7 : index
    %c2_54 = arith.constant 2 : index
    %97 = memref.load %arg2[%c7_53, %c2_54] : memref<9x25xf32, #tpu.memory_space<smem>>
    %98 = vector.broadcast %97 : f32 to vector<3x8x8xf32>
    %99 = arith.mulf %68, %98 : vector<3x8x8xf32>
    %100 = arith.addf %62, %99 : vector<3x8x8xf32>
    %c8_55 = arith.constant 8 : index
    %c2_56 = arith.constant 2 : index
    %101 = memref.load %arg2[%c8_55, %c2_56] : memref<9x25xf32, #tpu.memory_space<smem>>
    %102 = vector.broadcast %101 : f32 to vector<3x8x8xf32>
    %103 = arith.mulf %68, %102 : vector<3x8x8xf32>
    %104 = arith.addf %66, %103 : vector<3x8x8xf32>
    %c0_57 = arith.constant 0 : index
    %c1_58 = arith.constant 1 : index
    %c0_59 = arith.constant 0 : index
    %c1_60 = arith.constant 1 : index
    %105 = vector.load %arg1[%c0_57, %c1_58, %c0_59, %c1_60] : memref<3x4x10x10xf32, #tpu.memory_space<vmem>>, vector<3x1x8x8xf32>
    %106 = vector.shape_cast %105 : vector<3x1x8x8xf32> to vector<3x8x8xf32>
    %c0_61 = arith.constant 0 : index
    %c3_62 = arith.constant 3 : index
    %107 = memref.load %arg2[%c0_61, %c3_62] : memref<9x25xf32, #tpu.memory_space<smem>>
    %108 = vector.broadcast %107 : f32 to vector<3x8x8xf32>
    %109 = arith.mulf %106, %108 : vector<3x8x8xf32>
    %110 = arith.addf %72, %109 : vector<3x8x8xf32>
    %c1_63 = arith.constant 1 : index
    %c3_64 = arith.constant 3 : index
    %111 = memref.load %arg2[%c1_63, %c3_64] : memref<9x25xf32, #tpu.memory_space<smem>>
    %112 = vector.broadcast %111 : f32 to vector<3x8x8xf32>
    %113 = arith.mulf %106, %112 : vector<3x8x8xf32>
    %114 = arith.addf %76, %113 : vector<3x8x8xf32>
    %c2_65 = arith.constant 2 : index
    %c3_66 = arith.constant 3 : index
    %115 = memref.load %arg2[%c2_65, %c3_66] : memref<9x25xf32, #tpu.memory_space<smem>>
    %116 = vector.broadcast %115 : f32 to vector<3x8x8xf32>
    %117 = arith.mulf %106, %116 : vector<3x8x8xf32>
    %118 = arith.addf %80, %117 : vector<3x8x8xf32>
    %c3_67 = arith.constant 3 : index
    %c3_68 = arith.constant 3 : index
    %119 = memref.load %arg2[%c3_67, %c3_68] : memref<9x25xf32, #tpu.memory_space<smem>>
    %120 = vector.broadcast %119 : f32 to vector<3x8x8xf32>
    %121 = arith.mulf %106, %120 : vector<3x8x8xf32>
    %122 = arith.addf %84, %121 : vector<3x8x8xf32>
    %c4_69 = arith.constant 4 : index
    %c3_70 = arith.constant 3 : index
    %123 = memref.load %arg2[%c4_69, %c3_70] : memref<9x25xf32, #tpu.memory_space<smem>>
    %124 = vector.broadcast %123 : f32 to vector<3x8x8xf32>
    %125 = arith.mulf %106, %124 : vector<3x8x8xf32>
    %126 = arith.addf %88, %125 : vector<3x8x8xf32>
    %c5_71 = arith.constant 5 : index
    %c3_72 = arith.constant 3 : index
    %127 = memref.load %arg2[%c5_71, %c3_72] : memref<9x25xf32, #tpu.memory_space<smem>>
    %128 = vector.broadcast %127 : f32 to vector<3x8x8xf32>
    %129 = arith.mulf %106, %128 : vector<3x8x8xf32>
    %130 = arith.addf %92, %129 : vector<3x8x8xf32>
    %c6_73 = arith.constant 6 : index
    %c3_74 = arith.constant 3 : index
    %131 = memref.load %arg2[%c6_73, %c3_74] : memref<9x25xf32, #tpu.memory_space<smem>>
    %132 = vector.broadcast %131 : f32 to vector<3x8x8xf32>
    %133 = arith.mulf %106, %132 : vector<3x8x8xf32>
    %134 = arith.addf %96, %133 : vector<3x8x8xf32>
    %c7_75 = arith.constant 7 : index
    %c3_76 = arith.constant 3 : index
    %135 = memref.load %arg2[%c7_75, %c3_76] : memref<9x25xf32, #tpu.memory_space<smem>>
    %136 = vector.broadcast %135 : f32 to vector<3x8x8xf32>
    %137 = arith.mulf %106, %136 : vector<3x8x8xf32>
    %138 = arith.addf %100, %137 : vector<3x8x8xf32>
    %c8_77 = arith.constant 8 : index
    %c3_78 = arith.constant 3 : index
    %139 = memref.load %arg2[%c8_77, %c3_78] : memref<9x25xf32, #tpu.memory_space<smem>>
    %140 = vector.broadcast %139 : f32 to vector<3x8x8xf32>
    %141 = arith.mulf %106, %140 : vector<3x8x8xf32>
    %142 = arith.addf %104, %141 : vector<3x8x8xf32>
    %c0_79 = arith.constant 0 : index
    %c0_80 = arith.constant 0 : index
    %c0_81 = arith.constant 0 : index
    %c2_82 = arith.constant 2 : index
    %143 = vector.load %arg1[%c0_79, %c0_80, %c0_81, %c2_82] : memref<3x4x10x10xf32, #tpu.memory_space<vmem>>, vector<3x1x8x8xf32>
    %144 = vector.shape_cast %143 : vector<3x1x8x8xf32> to vector<3x8x8xf32>
    %c0_83 = arith.constant 0 : index
    %c4_84 = arith.constant 4 : index
    %145 = memref.load %arg2[%c0_83, %c4_84] : memref<9x25xf32, #tpu.memory_space<smem>>
    %146 = vector.broadcast %145 : f32 to vector<3x8x8xf32>
    %147 = arith.mulf %144, %146 : vector<3x8x8xf32>
    %148 = arith.addf %110, %147 : vector<3x8x8xf32>
    %c1_85 = arith.constant 1 : index
    %c4_86 = arith.constant 4 : index
    %149 = memref.load %arg2[%c1_85, %c4_86] : memref<9x25xf32, #tpu.memory_space<smem>>
    %150 = vector.broadcast %149 : f32 to vector<3x8x8xf32>
    %151 = arith.mulf %144, %150 : vector<3x8x8xf32>
    %152 = arith.addf %114, %151 : vector<3x8x8xf32>
    %c2_87 = arith.constant 2 : index
    %c4_88 = arith.constant 4 : index
    %153 = memref.load %arg2[%c2_87, %c4_88] : memref<9x25xf32, #tpu.memory_space<smem>>
    %154 = vector.broadcast %153 : f32 to vector<3x8x8xf32>
    %155 = arith.mulf %144, %154 : vector<3x8x8xf32>
    %156 = arith.addf %118, %155 : vector<3x8x8xf32>
    %c3_89 = arith.constant 3 : index
    %c4_90 = arith.constant 4 : index
    %157 = memref.load %arg2[%c3_89, %c4_90] : memref<9x25xf32, #tpu.memory_space<smem>>
    %158 = vector.broadcast %157 : f32 to vector<3x8x8xf32>
    %159 = arith.mulf %144, %158 : vector<3x8x8xf32>
    %160 = arith.addf %122, %159 : vector<3x8x8xf32>
    %c4_91 = arith.constant 4 : index
    %c4_92 = arith.constant 4 : index
    %161 = memref.load %arg2[%c4_91, %c4_92] : memref<9x25xf32, #tpu.memory_space<smem>>
    %162 = vector.broadcast %161 : f32 to vector<3x8x8xf32>
    %163 = arith.mulf %144, %162 : vector<3x8x8xf32>
    %164 = arith.addf %126, %163 : vector<3x8x8xf32>
    %c5_93 = arith.constant 5 : index
    %c4_94 = arith.constant 4 : index
    %165 = memref.load %arg2[%c5_93, %c4_94] : memref<9x25xf32, #tpu.memory_space<smem>>
    %166 = vector.broadcast %165 : f32 to vector<3x8x8xf32>
    %167 = arith.mulf %144, %166 : vector<3x8x8xf32>
    %168 = arith.addf %130, %167 : vector<3x8x8xf32>
    %c6_95 = arith.constant 6 : index
    %c4_96 = arith.constant 4 : index
    %169 = memref.load %arg2[%c6_95, %c4_96] : memref<9x25xf32, #tpu.memory_space<smem>>
    %170 = vector.broadcast %169 : f32 to vector<3x8x8xf32>
    %171 = arith.mulf %144, %170 : vector<3x8x8xf32>
    %172 = arith.addf %134, %171 : vector<3x8x8xf32>
    %c7_97 = arith.constant 7 : index
    %c4_98 = arith.constant 4 : index
    %173 = memref.load %arg2[%c7_97, %c4_98] : memref<9x25xf32, #tpu.memory_space<smem>>
    %174 = vector.broadcast %173 : f32 to vector<3x8x8xf32>
    %175 = arith.mulf %144, %174 : vector<3x8x8xf32>
    %176 = arith.addf %138, %175 : vector<3x8x8xf32>
    %c8_99 = arith.constant 8 : index
    %c4_100 = arith.constant 4 : index
    %177 = memref.load %arg2[%c8_99, %c4_100] : memref<9x25xf32, #tpu.memory_space<smem>>
    %178 = vector.broadcast %177 : f32 to vector<3x8x8xf32>
    %179 = arith.mulf %144, %178 : vector<3x8x8xf32>
    %180 = arith.addf %142, %179 : vector<3x8x8xf32>
    %c0_101 = arith.constant 0 : index
    %c2_102 = arith.constant 2 : index
    %c0_103 = arith.constant 0 : index
    %c0_104 = arith.constant 0 : index
    %181 = vector.load %arg1[%c0_101, %c2_102, %c0_103, %c0_104] : memref<3x4x10x10xf32, #tpu.memory_space<vmem>>, vector<3x1x8x8xf32>
    %182 = vector.shape_cast %181 : vector<3x1x8x8xf32> to vector<3x8x8xf32>
    %c0_105 = arith.constant 0 : index
    %c5_106 = arith.constant 5 : index
    %183 = memref.load %arg2[%c0_105, %c5_106] : memref<9x25xf32, #tpu.memory_space<smem>>
    %184 = vector.broadcast %183 : f32 to vector<3x8x8xf32>
    %185 = arith.mulf %182, %184 : vector<3x8x8xf32>
    %186 = arith.addf %148, %185 : vector<3x8x8xf32>
    %c1_107 = arith.constant 1 : index
    %c5_108 = arith.constant 5 : index
    %187 = memref.load %arg2[%c1_107, %c5_108] : memref<9x25xf32, #tpu.memory_space<smem>>
    %188 = vector.broadcast %187 : f32 to vector<3x8x8xf32>
    %189 = arith.mulf %182, %188 : vector<3x8x8xf32>
    %190 = arith.addf %152, %189 : vector<3x8x8xf32>
    %c2_109 = arith.constant 2 : index
    %c5_110 = arith.constant 5 : index
    %191 = memref.load %arg2[%c2_109, %c5_110] : memref<9x25xf32, #tpu.memory_space<smem>>
    %192 = vector.broadcast %191 : f32 to vector<3x8x8xf32>
    %193 = arith.mulf %182, %192 : vector<3x8x8xf32>
    %194 = arith.addf %156, %193 : vector<3x8x8xf32>
    %c3_111 = arith.constant 3 : index
    %c5_112 = arith.constant 5 : index
    %195 = memref.load %arg2[%c3_111, %c5_112] : memref<9x25xf32, #tpu.memory_space<smem>>
    %196 = vector.broadcast %195 : f32 to vector<3x8x8xf32>
    %197 = arith.mulf %182, %196 : vector<3x8x8xf32>
    %198 = arith.addf %160, %197 : vector<3x8x8xf32>
    %c4_113 = arith.constant 4 : index
    %c5_114 = arith.constant 5 : index
    %199 = memref.load %arg2[%c4_113, %c5_114] : memref<9x25xf32, #tpu.memory_space<smem>>
    %200 = vector.broadcast %199 : f32 to vector<3x8x8xf32>
    %201 = arith.mulf %182, %200 : vector<3x8x8xf32>
    %202 = arith.addf %164, %201 : vector<3x8x8xf32>
    %c5_115 = arith.constant 5 : index
    %c5_116 = arith.constant 5 : index
    %203 = memref.load %arg2[%c5_115, %c5_116] : memref<9x25xf32, #tpu.memory_space<smem>>
    %204 = vector.broadcast %203 : f32 to vector<3x8x8xf32>
    %205 = arith.mulf %182, %204 : vector<3x8x8xf32>
    %206 = arith.addf %168, %205 : vector<3x8x8xf32>
    %c6_117 = arith.constant 6 : index
    %c5_118 = arith.constant 5 : index
    %207 = memref.load %arg2[%c6_117, %c5_118] : memref<9x25xf32, #tpu.memory_space<smem>>
    %208 = vector.broadcast %207 : f32 to vector<3x8x8xf32>
    %209 = arith.mulf %182, %208 : vector<3x8x8xf32>
    %210 = arith.addf %172, %209 : vector<3x8x8xf32>
    %c7_119 = arith.constant 7 : index
    %c5_120 = arith.constant 5 : index
    %211 = memref.load %arg2[%c7_119, %c5_120] : memref<9x25xf32, #tpu.memory_space<smem>>
    %212 = vector.broadcast %211 : f32 to vector<3x8x8xf32>
    %213 = arith.mulf %182, %212 : vector<3x8x8xf32>
    %214 = arith.addf %176, %213 : vector<3x8x8xf32>
    %c8_121 = arith.constant 8 : index
    %c5_122 = arith.constant 5 : index
    %215 = memref.load %arg2[%c8_121, %c5_122] : memref<9x25xf32, #tpu.memory_space<smem>>
    %216 = vector.broadcast %215 : f32 to vector<3x8x8xf32>
    %217 = arith.mulf %182, %216 : vector<3x8x8xf32>
    %218 = arith.addf %180, %217 : vector<3x8x8xf32>
    %c0_123 = arith.constant 0 : index
    %c3_124 = arith.constant 3 : index
    %c0_125 = arith.constant 0 : index
    %c0_126 = arith.constant 0 : index
    %219 = vector.load %arg1[%c0_123, %c3_124, %c0_125, %c0_126] : memref<3x4x10x10xf32, #tpu.memory_space<vmem>>, vector<3x1x8x8xf32>
    %220 = vector.shape_cast %219 : vector<3x1x8x8xf32> to vector<3x8x8xf32>
    %c0_127 = arith.constant 0 : index
    %c6_128 = arith.constant 6 : index
    %221 = memref.load %arg2[%c0_127, %c6_128] : memref<9x25xf32, #tpu.memory_space<smem>>
    %222 = vector.broadcast %221 : f32 to vector<3x8x8xf32>
    %223 = arith.mulf %220, %222 : vector<3x8x8xf32>
    %224 = arith.addf %186, %223 : vector<3x8x8xf32>
    %c1_129 = arith.constant 1 : index
    %c6_130 = arith.constant 6 : index
    %225 = memref.load %arg2[%c1_129, %c6_130] : memref<9x25xf32, #tpu.memory_space<smem>>
    %226 = vector.broadcast %225 : f32 to vector<3x8x8xf32>
    %227 = arith.mulf %220, %226 : vector<3x8x8xf32>
    %228 = arith.addf %190, %227 : vector<3x8x8xf32>
    %c2_131 = arith.constant 2 : index
    %c6_132 = arith.constant 6 : index
    %229 = memref.load %arg2[%c2_131, %c6_132] : memref<9x25xf32, #tpu.memory_space<smem>>
    %230 = vector.broadcast %229 : f32 to vector<3x8x8xf32>
    %231 = arith.mulf %220, %230 : vector<3x8x8xf32>
    %232 = arith.addf %194, %231 : vector<3x8x8xf32>
    %c3_133 = arith.constant 3 : index
    %c6_134 = arith.constant 6 : index
    %233 = memref.load %arg2[%c3_133, %c6_134] : memref<9x25xf32, #tpu.memory_space<smem>>
    %234 = vector.broadcast %233 : f32 to vector<3x8x8xf32>
    %235 = arith.mulf %220, %234 : vector<3x8x8xf32>
    %236 = arith.addf %198, %235 : vector<3x8x8xf32>
    %c4_135 = arith.constant 4 : index
    %c6_136 = arith.constant 6 : index
    %237 = memref.load %arg2[%c4_135, %c6_136] : memref<9x25xf32, #tpu.memory_space<smem>>
    %238 = vector.broadcast %237 : f32 to vector<3x8x8xf32>
    %239 = arith.mulf %220, %238 : vector<3x8x8xf32>
    %240 = arith.addf %202, %239 : vector<3x8x8xf32>
    %c5_137 = arith.constant 5 : index
    %c6_138 = arith.constant 6 : index
    %241 = memref.load %arg2[%c5_137, %c6_138] : memref<9x25xf32, #tpu.memory_space<smem>>
    %242 = vector.broadcast %241 : f32 to vector<3x8x8xf32>
    %243 = arith.mulf %220, %242 : vector<3x8x8xf32>
    %244 = arith.addf %206, %243 : vector<3x8x8xf32>
    %c6_139 = arith.constant 6 : index
    %c6_140 = arith.constant 6 : index
    %245 = memref.load %arg2[%c6_139, %c6_140] : memref<9x25xf32, #tpu.memory_space<smem>>
    %246 = vector.broadcast %245 : f32 to vector<3x8x8xf32>
    %247 = arith.mulf %220, %246 : vector<3x8x8xf32>
    %248 = arith.addf %210, %247 : vector<3x8x8xf32>
    %c7_141 = arith.constant 7 : index
    %c6_142 = arith.constant 6 : index
    %249 = memref.load %arg2[%c7_141, %c6_142] : memref<9x25xf32, #tpu.memory_space<smem>>
    %250 = vector.broadcast %249 : f32 to vector<3x8x8xf32>
    %251 = arith.mulf %220, %250 : vector<3x8x8xf32>
    %252 = arith.addf %214, %251 : vector<3x8x8xf32>
    %c8_143 = arith.constant 8 : index
    %c6_144 = arith.constant 6 : index
    %253 = memref.load %arg2[%c8_143, %c6_144] : memref<9x25xf32, #tpu.memory_space<smem>>
    %254 = vector.broadcast %253 : f32 to vector<3x8x8xf32>
    %255 = arith.mulf %220, %254 : vector<3x8x8xf32>
    %256 = arith.addf %218, %255 : vector<3x8x8xf32>
    %c0_145 = arith.constant 0 : index
    %c2_146 = arith.constant 2 : index
    %c0_147 = arith.constant 0 : index
    %c1_148 = arith.constant 1 : index
    %257 = vector.load %arg1[%c0_145, %c2_146, %c0_147, %c1_148] : memref<3x4x10x10xf32, #tpu.memory_space<vmem>>, vector<3x1x8x8xf32>
    %258 = vector.shape_cast %257 : vector<3x1x8x8xf32> to vector<3x8x8xf32>
    %c0_149 = arith.constant 0 : index
    %c7_150 = arith.constant 7 : index
    %259 = memref.load %arg2[%c0_149, %c7_150] : memref<9x25xf32, #tpu.memory_space<smem>>
    %260 = vector.broadcast %259 : f32 to vector<3x8x8xf32>
    %261 = arith.mulf %258, %260 : vector<3x8x8xf32>
    %262 = arith.addf %224, %261 : vector<3x8x8xf32>
    %c1_151 = arith.constant 1 : index
    %c7_152 = arith.constant 7 : index
    %263 = memref.load %arg2[%c1_151, %c7_152] : memref<9x25xf32, #tpu.memory_space<smem>>
    %264 = vector.broadcast %263 : f32 to vector<3x8x8xf32>
    %265 = arith.mulf %258, %264 : vector<3x8x8xf32>
    %266 = arith.addf %228, %265 : vector<3x8x8xf32>
    %c2_153 = arith.constant 2 : index
    %c7_154 = arith.constant 7 : index
    %267 = memref.load %arg2[%c2_153, %c7_154] : memref<9x25xf32, #tpu.memory_space<smem>>
    %268 = vector.broadcast %267 : f32 to vector<3x8x8xf32>
    %269 = arith.mulf %258, %268 : vector<3x8x8xf32>
    %270 = arith.addf %232, %269 : vector<3x8x8xf32>
    %c3_155 = arith.constant 3 : index
    %c7_156 = arith.constant 7 : index
    %271 = memref.load %arg2[%c3_155, %c7_156] : memref<9x25xf32, #tpu.memory_space<smem>>
    %272 = vector.broadcast %271 : f32 to vector<3x8x8xf32>
    %273 = arith.mulf %258, %272 : vector<3x8x8xf32>
    %274 = arith.addf %236, %273 : vector<3x8x8xf32>
    %c4_157 = arith.constant 4 : index
    %c7_158 = arith.constant 7 : index
    %275 = memref.load %arg2[%c4_157, %c7_158] : memref<9x25xf32, #tpu.memory_space<smem>>
    %276 = vector.broadcast %275 : f32 to vector<3x8x8xf32>
    %277 = arith.mulf %258, %276 : vector<3x8x8xf32>
    %278 = arith.addf %240, %277 : vector<3x8x8xf32>
    %c5_159 = arith.constant 5 : index
    %c7_160 = arith.constant 7 : index
    %279 = memref.load %arg2[%c5_159, %c7_160] : memref<9x25xf32, #tpu.memory_space<smem>>
    %280 = vector.broadcast %279 : f32 to vector<3x8x8xf32>
    %281 = arith.mulf %258, %280 : vector<3x8x8xf32>
    %282 = arith.addf %244, %281 : vector<3x8x8xf32>
    %c6_161 = arith.constant 6 : index
    %c7_162 = arith.constant 7 : index
    %283 = memref.load %arg2[%c6_161, %c7_162] : memref<9x25xf32, #tpu.memory_space<smem>>
    %284 = vector.broadcast %283 : f32 to vector<3x8x8xf32>
    %285 = arith.mulf %258, %284 : vector<3x8x8xf32>
    %286 = arith.addf %248, %285 : vector<3x8x8xf32>
    %c7_163 = arith.constant 7 : index
    %c7_164 = arith.constant 7 : index
    %287 = memref.load %arg2[%c7_163, %c7_164] : memref<9x25xf32, #tpu.memory_space<smem>>
    %288 = vector.broadcast %287 : f32 to vector<3x8x8xf32>
    %289 = arith.mulf %258, %288 : vector<3x8x8xf32>
    %290 = arith.addf %252, %289 : vector<3x8x8xf32>
    %c8_165 = arith.constant 8 : index
    %c7_166 = arith.constant 7 : index
    %291 = memref.load %arg2[%c8_165, %c7_166] : memref<9x25xf32, #tpu.memory_space<smem>>
    %292 = vector.broadcast %291 : f32 to vector<3x8x8xf32>
    %293 = arith.mulf %258, %292 : vector<3x8x8xf32>
    %294 = arith.addf %256, %293 : vector<3x8x8xf32>
    %c0_167 = arith.constant 0 : index
    %c3_168 = arith.constant 3 : index
    %c0_169 = arith.constant 0 : index
    %c1_170 = arith.constant 1 : index
    %295 = vector.load %arg1[%c0_167, %c3_168, %c0_169, %c1_170] : memref<3x4x10x10xf32, #tpu.memory_space<vmem>>, vector<3x1x8x8xf32>
    %296 = vector.shape_cast %295 : vector<3x1x8x8xf32> to vector<3x8x8xf32>
    %c0_171 = arith.constant 0 : index
    %c8_172 = arith.constant 8 : index
    %297 = memref.load %arg2[%c0_171, %c8_172] : memref<9x25xf32, #tpu.memory_space<smem>>
    %298 = vector.broadcast %297 : f32 to vector<3x8x8xf32>
    %299 = arith.mulf %296, %298 : vector<3x8x8xf32>
    %300 = arith.addf %262, %299 : vector<3x8x8xf32>
    %c1_173 = arith.constant 1 : index
    %c8_174 = arith.constant 8 : index
    %301 = memref.load %arg2[%c1_173, %c8_174] : memref<9x25xf32, #tpu.memory_space<smem>>
    %302 = vector.broadcast %301 : f32 to vector<3x8x8xf32>
    %303 = arith.mulf %296, %302 : vector<3x8x8xf32>
    %304 = arith.addf %266, %303 : vector<3x8x8xf32>
    %c2_175 = arith.constant 2 : index
    %c8_176 = arith.constant 8 : index
    %305 = memref.load %arg2[%c2_175, %c8_176] : memref<9x25xf32, #tpu.memory_space<smem>>
    %306 = vector.broadcast %305 : f32 to vector<3x8x8xf32>
    %307 = arith.mulf %296, %306 : vector<3x8x8xf32>
    %308 = arith.addf %270, %307 : vector<3x8x8xf32>
    %c3_177 = arith.constant 3 : index
    %c8_178 = arith.constant 8 : index
    %309 = memref.load %arg2[%c3_177, %c8_178] : memref<9x25xf32, #tpu.memory_space<smem>>
    %310 = vector.broadcast %309 : f32 to vector<3x8x8xf32>
    %311 = arith.mulf %296, %310 : vector<3x8x8xf32>
    %312 = arith.addf %274, %311 : vector<3x8x8xf32>
    %c4_179 = arith.constant 4 : index
    %c8_180 = arith.constant 8 : index
    %313 = memref.load %arg2[%c4_179, %c8_180] : memref<9x25xf32, #tpu.memory_space<smem>>
    %314 = vector.broadcast %313 : f32 to vector<3x8x8xf32>
    %315 = arith.mulf %296, %314 : vector<3x8x8xf32>
    %316 = arith.addf %278, %315 : vector<3x8x8xf32>
    %c5_181 = arith.constant 5 : index
    %c8_182 = arith.constant 8 : index
    %317 = memref.load %arg2[%c5_181, %c8_182] : memref<9x25xf32, #tpu.memory_space<smem>>
    %318 = vector.broadcast %317 : f32 to vector<3x8x8xf32>
    %319 = arith.mulf %296, %318 : vector<3x8x8xf32>
    %320 = arith.addf %282, %319 : vector<3x8x8xf32>
    %c6_183 = arith.constant 6 : index
    %c8_184 = arith.constant 8 : index
    %321 = memref.load %arg2[%c6_183, %c8_184] : memref<9x25xf32, #tpu.memory_space<smem>>
    %322 = vector.broadcast %321 : f32 to vector<3x8x8xf32>
    %323 = arith.mulf %296, %322 : vector<3x8x8xf32>
    %324 = arith.addf %286, %323 : vector<3x8x8xf32>
    %c7_185 = arith.constant 7 : index
    %c8_186 = arith.constant 8 : index
    %325 = memref.load %arg2[%c7_185, %c8_186] : memref<9x25xf32, #tpu.memory_space<smem>>
    %326 = vector.broadcast %325 : f32 to vector<3x8x8xf32>
    %327 = arith.mulf %296, %326 : vector<3x8x8xf32>
    %328 = arith.addf %290, %327 : vector<3x8x8xf32>
    %c8_187 = arith.constant 8 : index
    %c8_188 = arith.constant 8 : index
    %329 = memref.load %arg2[%c8_187, %c8_188] : memref<9x25xf32, #tpu.memory_space<smem>>
    %330 = vector.broadcast %329 : f32 to vector<3x8x8xf32>
    %331 = arith.mulf %296, %330 : vector<3x8x8xf32>
    %332 = arith.addf %294, %331 : vector<3x8x8xf32>
    %c0_189 = arith.constant 0 : index
    %c2_190 = arith.constant 2 : index
    %c0_191 = arith.constant 0 : index
    %c2_192 = arith.constant 2 : index
    %333 = vector.load %arg1[%c0_189, %c2_190, %c0_191, %c2_192] : memref<3x4x10x10xf32, #tpu.memory_space<vmem>>, vector<3x1x8x8xf32>
    %334 = vector.shape_cast %333 : vector<3x1x8x8xf32> to vector<3x8x8xf32>
    %c0_193 = arith.constant 0 : index
    %c9 = arith.constant 9 : index
    %335 = memref.load %arg2[%c0_193, %c9] : memref<9x25xf32, #tpu.memory_space<smem>>
    %336 = vector.broadcast %335 : f32 to vector<3x8x8xf32>
    %337 = arith.mulf %334, %336 : vector<3x8x8xf32>
    %338 = arith.addf %300, %337 : vector<3x8x8xf32>
    %c1_194 = arith.constant 1 : index
    %c9_195 = arith.constant 9 : index
    %339 = memref.load %arg2[%c1_194, %c9_195] : memref<9x25xf32, #tpu.memory_space<smem>>
    %340 = vector.broadcast %339 : f32 to vector<3x8x8xf32>
    %341 = arith.mulf %334, %340 : vector<3x8x8xf32>
    %342 = arith.addf %304, %341 : vector<3x8x8xf32>
    %c2_196 = arith.constant 2 : index
    %c9_197 = arith.constant 9 : index
    %343 = memref.load %arg2[%c2_196, %c9_197] : memref<9x25xf32, #tpu.memory_space<smem>>
    %344 = vector.broadcast %343 : f32 to vector<3x8x8xf32>
    %345 = arith.mulf %334, %344 : vector<3x8x8xf32>
    %346 = arith.addf %308, %345 : vector<3x8x8xf32>
    %c3_198 = arith.constant 3 : index
    %c9_199 = arith.constant 9 : index
    %347 = memref.load %arg2[%c3_198, %c9_199] : memref<9x25xf32, #tpu.memory_space<smem>>
    %348 = vector.broadcast %347 : f32 to vector<3x8x8xf32>
    %349 = arith.mulf %334, %348 : vector<3x8x8xf32>
    %350 = arith.addf %312, %349 : vector<3x8x8xf32>
    %c4_200 = arith.constant 4 : index
    %c9_201 = arith.constant 9 : index
    %351 = memref.load %arg2[%c4_200, %c9_201] : memref<9x25xf32, #tpu.memory_space<smem>>
    %352 = vector.broadcast %351 : f32 to vector<3x8x8xf32>
    %353 = arith.mulf %334, %352 : vector<3x8x8xf32>
    %354 = arith.addf %316, %353 : vector<3x8x8xf32>
    %c5_202 = arith.constant 5 : index
    %c9_203 = arith.constant 9 : index
    %355 = memref.load %arg2[%c5_202, %c9_203] : memref<9x25xf32, #tpu.memory_space<smem>>
    %356 = vector.broadcast %355 : f32 to vector<3x8x8xf32>
    %357 = arith.mulf %334, %356 : vector<3x8x8xf32>
    %358 = arith.addf %320, %357 : vector<3x8x8xf32>
    %c6_204 = arith.constant 6 : index
    %c9_205 = arith.constant 9 : index
    %359 = memref.load %arg2[%c6_204, %c9_205] : memref<9x25xf32, #tpu.memory_space<smem>>
    %360 = vector.broadcast %359 : f32 to vector<3x8x8xf32>
    %361 = arith.mulf %334, %360 : vector<3x8x8xf32>
    %362 = arith.addf %324, %361 : vector<3x8x8xf32>
    %c7_206 = arith.constant 7 : index
    %c9_207 = arith.constant 9 : index
    %363 = memref.load %arg2[%c7_206, %c9_207] : memref<9x25xf32, #tpu.memory_space<smem>>
    %364 = vector.broadcast %363 : f32 to vector<3x8x8xf32>
    %365 = arith.mulf %334, %364 : vector<3x8x8xf32>
    %366 = arith.addf %328, %365 : vector<3x8x8xf32>
    %c8_208 = arith.constant 8 : index
    %c9_209 = arith.constant 9 : index
    %367 = memref.load %arg2[%c8_208, %c9_209] : memref<9x25xf32, #tpu.memory_space<smem>>
    %368 = vector.broadcast %367 : f32 to vector<3x8x8xf32>
    %369 = arith.mulf %334, %368 : vector<3x8x8xf32>
    %370 = arith.addf %332, %369 : vector<3x8x8xf32>
    %c0_210 = arith.constant 0 : index
    %c0_211 = arith.constant 0 : index
    %c1_212 = arith.constant 1 : index
    %c0_213 = arith.constant 0 : index
    %371 = vector.load %arg1[%c0_210, %c0_211, %c1_212, %c0_213] : memref<3x4x10x10xf32, #tpu.memory_space<vmem>>, vector<3x1x8x8xf32>
    %372 = vector.shape_cast %371 : vector<3x1x8x8xf32> to vector<3x8x8xf32>
    %c0_214 = arith.constant 0 : index
    %c10 = arith.constant 10 : index
    %373 = memref.load %arg2[%c0_214, %c10] : memref<9x25xf32, #tpu.memory_space<smem>>
    %374 = vector.broadcast %373 : f32 to vector<3x8x8xf32>
    %375 = arith.mulf %372, %374 : vector<3x8x8xf32>
    %376 = arith.addf %338, %375 : vector<3x8x8xf32>
    %c1_215 = arith.constant 1 : index
    %c10_216 = arith.constant 10 : index
    %377 = memref.load %arg2[%c1_215, %c10_216] : memref<9x25xf32, #tpu.memory_space<smem>>
    %378 = vector.broadcast %377 : f32 to vector<3x8x8xf32>
    %379 = arith.mulf %372, %378 : vector<3x8x8xf32>
    %380 = arith.addf %342, %379 : vector<3x8x8xf32>
    %c2_217 = arith.constant 2 : index
    %c10_218 = arith.constant 10 : index
    %381 = memref.load %arg2[%c2_217, %c10_218] : memref<9x25xf32, #tpu.memory_space<smem>>
    %382 = vector.broadcast %381 : f32 to vector<3x8x8xf32>
    %383 = arith.mulf %372, %382 : vector<3x8x8xf32>
    %384 = arith.addf %346, %383 : vector<3x8x8xf32>
    %c3_219 = arith.constant 3 : index
    %c10_220 = arith.constant 10 : index
    %385 = memref.load %arg2[%c3_219, %c10_220] : memref<9x25xf32, #tpu.memory_space<smem>>
    %386 = vector.broadcast %385 : f32 to vector<3x8x8xf32>
    %387 = arith.mulf %372, %386 : vector<3x8x8xf32>
    %388 = arith.addf %350, %387 : vector<3x8x8xf32>
    %c4_221 = arith.constant 4 : index
    %c10_222 = arith.constant 10 : index
    %389 = memref.load %arg2[%c4_221, %c10_222] : memref<9x25xf32, #tpu.memory_space<smem>>
    %390 = vector.broadcast %389 : f32 to vector<3x8x8xf32>
    %391 = arith.mulf %372, %390 : vector<3x8x8xf32>
    %392 = arith.addf %354, %391 : vector<3x8x8xf32>
    %c5_223 = arith.constant 5 : index
    %c10_224 = arith.constant 10 : index
    %393 = memref.load %arg2[%c5_223, %c10_224] : memref<9x25xf32, #tpu.memory_space<smem>>
    %394 = vector.broadcast %393 : f32 to vector<3x8x8xf32>
    %395 = arith.mulf %372, %394 : vector<3x8x8xf32>
    %396 = arith.addf %358, %395 : vector<3x8x8xf32>
    %c6_225 = arith.constant 6 : index
    %c10_226 = arith.constant 10 : index
    %397 = memref.load %arg2[%c6_225, %c10_226] : memref<9x25xf32, #tpu.memory_space<smem>>
    %398 = vector.broadcast %397 : f32 to vector<3x8x8xf32>
    %399 = arith.mulf %372, %398 : vector<3x8x8xf32>
    %400 = arith.addf %362, %399 : vector<3x8x8xf32>
    %c7_227 = arith.constant 7 : index
    %c10_228 = arith.constant 10 : index
    %401 = memref.load %arg2[%c7_227, %c10_228] : memref<9x25xf32, #tpu.memory_space<smem>>
    %402 = vector.broadcast %401 : f32 to vector<3x8x8xf32>
    %403 = arith.mulf %372, %402 : vector<3x8x8xf32>
    %404 = arith.addf %366, %403 : vector<3x8x8xf32>
    %c8_229 = arith.constant 8 : index
    %c10_230 = arith.constant 10 : index
    %405 = memref.load %arg2[%c8_229, %c10_230] : memref<9x25xf32, #tpu.memory_space<smem>>
    %406 = vector.broadcast %405 : f32 to vector<3x8x8xf32>
    %407 = arith.mulf %372, %406 : vector<3x8x8xf32>
    %408 = arith.addf %370, %407 : vector<3x8x8xf32>
    %c0_231 = arith.constant 0 : index
    %c1_232 = arith.constant 1 : index
    %c1_233 = arith.constant 1 : index
    %c0_234 = arith.constant 0 : index
    %409 = vector.load %arg1[%c0_231, %c1_232, %c1_233, %c0_234] : memref<3x4x10x10xf32, #tpu.memory_space<vmem>>, vector<3x1x8x8xf32>
    %410 = vector.shape_cast %409 : vector<3x1x8x8xf32> to vector<3x8x8xf32>
    %c0_235 = arith.constant 0 : index
    %c11 = arith.constant 11 : index
    %411 = memref.load %arg2[%c0_235, %c11] : memref<9x25xf32, #tpu.memory_space<smem>>
    %412 = vector.broadcast %411 : f32 to vector<3x8x8xf32>
    %413 = arith.mulf %410, %412 : vector<3x8x8xf32>
    %414 = arith.addf %376, %413 : vector<3x8x8xf32>
    %c1_236 = arith.constant 1 : index
    %c11_237 = arith.constant 11 : index
    %415 = memref.load %arg2[%c1_236, %c11_237] : memref<9x25xf32, #tpu.memory_space<smem>>
    %416 = vector.broadcast %415 : f32 to vector<3x8x8xf32>
    %417 = arith.mulf %410, %416 : vector<3x8x8xf32>
    %418 = arith.addf %380, %417 : vector<3x8x8xf32>
    %c2_238 = arith.constant 2 : index
    %c11_239 = arith.constant 11 : index
    %419 = memref.load %arg2[%c2_238, %c11_239] : memref<9x25xf32, #tpu.memory_space<smem>>
    %420 = vector.broadcast %419 : f32 to vector<3x8x8xf32>
    %421 = arith.mulf %410, %420 : vector<3x8x8xf32>
    %422 = arith.addf %384, %421 : vector<3x8x8xf32>
    %c3_240 = arith.constant 3 : index
    %c11_241 = arith.constant 11 : index
    %423 = memref.load %arg2[%c3_240, %c11_241] : memref<9x25xf32, #tpu.memory_space<smem>>
    %424 = vector.broadcast %423 : f32 to vector<3x8x8xf32>
    %425 = arith.mulf %410, %424 : vector<3x8x8xf32>
    %426 = arith.addf %388, %425 : vector<3x8x8xf32>
    %c4_242 = arith.constant 4 : index
    %c11_243 = arith.constant 11 : index
    %427 = memref.load %arg2[%c4_242, %c11_243] : memref<9x25xf32, #tpu.memory_space<smem>>
    %428 = vector.broadcast %427 : f32 to vector<3x8x8xf32>
    %429 = arith.mulf %410, %428 : vector<3x8x8xf32>
    %430 = arith.addf %392, %429 : vector<3x8x8xf32>
    %c5_244 = arith.constant 5 : index
    %c11_245 = arith.constant 11 : index
    %431 = memref.load %arg2[%c5_244, %c11_245] : memref<9x25xf32, #tpu.memory_space<smem>>
    %432 = vector.broadcast %431 : f32 to vector<3x8x8xf32>
    %433 = arith.mulf %410, %432 : vector<3x8x8xf32>
    %434 = arith.addf %396, %433 : vector<3x8x8xf32>
    %c6_246 = arith.constant 6 : index
    %c11_247 = arith.constant 11 : index
    %435 = memref.load %arg2[%c6_246, %c11_247] : memref<9x25xf32, #tpu.memory_space<smem>>
    %436 = vector.broadcast %435 : f32 to vector<3x8x8xf32>
    %437 = arith.mulf %410, %436 : vector<3x8x8xf32>
    %438 = arith.addf %400, %437 : vector<3x8x8xf32>
    %c7_248 = arith.constant 7 : index
    %c11_249 = arith.constant 11 : index
    %439 = memref.load %arg2[%c7_248, %c11_249] : memref<9x25xf32, #tpu.memory_space<smem>>
    %440 = vector.broadcast %439 : f32 to vector<3x8x8xf32>
    %441 = arith.mulf %410, %440 : vector<3x8x8xf32>
    %442 = arith.addf %404, %441 : vector<3x8x8xf32>
    %c8_250 = arith.constant 8 : index
    %c11_251 = arith.constant 11 : index
    %443 = memref.load %arg2[%c8_250, %c11_251] : memref<9x25xf32, #tpu.memory_space<smem>>
    %444 = vector.broadcast %443 : f32 to vector<3x8x8xf32>
    %445 = arith.mulf %410, %444 : vector<3x8x8xf32>
    %446 = arith.addf %408, %445 : vector<3x8x8xf32>
    %c0_252 = arith.constant 0 : index
    %c0_253 = arith.constant 0 : index
    %c1_254 = arith.constant 1 : index
    %c1_255 = arith.constant 1 : index
    %447 = vector.load %arg1[%c0_252, %c0_253, %c1_254, %c1_255] : memref<3x4x10x10xf32, #tpu.memory_space<vmem>>, vector<3x1x8x8xf32>
    %448 = vector.shape_cast %447 : vector<3x1x8x8xf32> to vector<3x8x8xf32>
    %c0_256 = arith.constant 0 : index
    %c12 = arith.constant 12 : index
    %449 = memref.load %arg2[%c0_256, %c12] : memref<9x25xf32, #tpu.memory_space<smem>>
    %450 = vector.broadcast %449 : f32 to vector<3x8x8xf32>
    %451 = arith.mulf %448, %450 : vector<3x8x8xf32>
    %452 = arith.addf %414, %451 : vector<3x8x8xf32>
    %c1_257 = arith.constant 1 : index
    %c12_258 = arith.constant 12 : index
    %453 = memref.load %arg2[%c1_257, %c12_258] : memref<9x25xf32, #tpu.memory_space<smem>>
    %454 = vector.broadcast %453 : f32 to vector<3x8x8xf32>
    %455 = arith.mulf %448, %454 : vector<3x8x8xf32>
    %456 = arith.addf %418, %455 : vector<3x8x8xf32>
    %c2_259 = arith.constant 2 : index
    %c12_260 = arith.constant 12 : index
    %457 = memref.load %arg2[%c2_259, %c12_260] : memref<9x25xf32, #tpu.memory_space<smem>>
    %458 = vector.broadcast %457 : f32 to vector<3x8x8xf32>
    %459 = arith.mulf %448, %458 : vector<3x8x8xf32>
    %460 = arith.addf %422, %459 : vector<3x8x8xf32>
    %c3_261 = arith.constant 3 : index
    %c12_262 = arith.constant 12 : index
    %461 = memref.load %arg2[%c3_261, %c12_262] : memref<9x25xf32, #tpu.memory_space<smem>>
    %462 = vector.broadcast %461 : f32 to vector<3x8x8xf32>
    %463 = arith.mulf %448, %462 : vector<3x8x8xf32>
    %464 = arith.addf %426, %463 : vector<3x8x8xf32>
    %c4_263 = arith.constant 4 : index
    %c12_264 = arith.constant 12 : index
    %465 = memref.load %arg2[%c4_263, %c12_264] : memref<9x25xf32, #tpu.memory_space<smem>>
    %466 = vector.broadcast %465 : f32 to vector<3x8x8xf32>
    %467 = arith.mulf %448, %466 : vector<3x8x8xf32>
    %468 = arith.addf %430, %467 : vector<3x8x8xf32>
    %c5_265 = arith.constant 5 : index
    %c12_266 = arith.constant 12 : index
    %469 = memref.load %arg2[%c5_265, %c12_266] : memref<9x25xf32, #tpu.memory_space<smem>>
    %470 = vector.broadcast %469 : f32 to vector<3x8x8xf32>
    %471 = arith.mulf %448, %470 : vector<3x8x8xf32>
    %472 = arith.addf %434, %471 : vector<3x8x8xf32>
    %c6_267 = arith.constant 6 : index
    %c12_268 = arith.constant 12 : index
    %473 = memref.load %arg2[%c6_267, %c12_268] : memref<9x25xf32, #tpu.memory_space<smem>>
    %474 = vector.broadcast %473 : f32 to vector<3x8x8xf32>
    %475 = arith.mulf %448, %474 : vector<3x8x8xf32>
    %476 = arith.addf %438, %475 : vector<3x8x8xf32>
    %c7_269 = arith.constant 7 : index
    %c12_270 = arith.constant 12 : index
    %477 = memref.load %arg2[%c7_269, %c12_270] : memref<9x25xf32, #tpu.memory_space<smem>>
    %478 = vector.broadcast %477 : f32 to vector<3x8x8xf32>
    %479 = arith.mulf %448, %478 : vector<3x8x8xf32>
    %480 = arith.addf %442, %479 : vector<3x8x8xf32>
    %c8_271 = arith.constant 8 : index
    %c12_272 = arith.constant 12 : index
    %481 = memref.load %arg2[%c8_271, %c12_272] : memref<9x25xf32, #tpu.memory_space<smem>>
    %482 = vector.broadcast %481 : f32 to vector<3x8x8xf32>
    %483 = arith.mulf %448, %482 : vector<3x8x8xf32>
    %484 = arith.addf %446, %483 : vector<3x8x8xf32>
    %c0_273 = arith.constant 0 : index
    %c1_274 = arith.constant 1 : index
    %c1_275 = arith.constant 1 : index
    %c1_276 = arith.constant 1 : index
    %485 = vector.load %arg1[%c0_273, %c1_274, %c1_275, %c1_276] : memref<3x4x10x10xf32, #tpu.memory_space<vmem>>, vector<3x1x8x8xf32>
    %486 = vector.shape_cast %485 : vector<3x1x8x8xf32> to vector<3x8x8xf32>
    %c0_277 = arith.constant 0 : index
    %c13 = arith.constant 13 : index
    %487 = memref.load %arg2[%c0_277, %c13] : memref<9x25xf32, #tpu.memory_space<smem>>
    %488 = vector.broadcast %487 : f32 to vector<3x8x8xf32>
    %489 = arith.mulf %486, %488 : vector<3x8x8xf32>
    %490 = arith.addf %452, %489 : vector<3x8x8xf32>
    %c1_278 = arith.constant 1 : index
    %c13_279 = arith.constant 13 : index
    %491 = memref.load %arg2[%c1_278, %c13_279] : memref<9x25xf32, #tpu.memory_space<smem>>
    %492 = vector.broadcast %491 : f32 to vector<3x8x8xf32>
    %493 = arith.mulf %486, %492 : vector<3x8x8xf32>
    %494 = arith.addf %456, %493 : vector<3x8x8xf32>
    %c2_280 = arith.constant 2 : index
    %c13_281 = arith.constant 13 : index
    %495 = memref.load %arg2[%c2_280, %c13_281] : memref<9x25xf32, #tpu.memory_space<smem>>
    %496 = vector.broadcast %495 : f32 to vector<3x8x8xf32>
    %497 = arith.mulf %486, %496 : vector<3x8x8xf32>
    %498 = arith.addf %460, %497 : vector<3x8x8xf32>
    %c3_282 = arith.constant 3 : index
    %c13_283 = arith.constant 13 : index
    %499 = memref.load %arg2[%c3_282, %c13_283] : memref<9x25xf32, #tpu.memory_space<smem>>
    %500 = vector.broadcast %499 : f32 to vector<3x8x8xf32>
    %501 = arith.mulf %486, %500 : vector<3x8x8xf32>
    %502 = arith.addf %464, %501 : vector<3x8x8xf32>
    %c4_284 = arith.constant 4 : index
    %c13_285 = arith.constant 13 : index
    %503 = memref.load %arg2[%c4_284, %c13_285] : memref<9x25xf32, #tpu.memory_space<smem>>
    %504 = vector.broadcast %503 : f32 to vector<3x8x8xf32>
    %505 = arith.mulf %486, %504 : vector<3x8x8xf32>
    %506 = arith.addf %468, %505 : vector<3x8x8xf32>
    %c5_286 = arith.constant 5 : index
    %c13_287 = arith.constant 13 : index
    %507 = memref.load %arg2[%c5_286, %c13_287] : memref<9x25xf32, #tpu.memory_space<smem>>
    %508 = vector.broadcast %507 : f32 to vector<3x8x8xf32>
    %509 = arith.mulf %486, %508 : vector<3x8x8xf32>
    %510 = arith.addf %472, %509 : vector<3x8x8xf32>
    %c6_288 = arith.constant 6 : index
    %c13_289 = arith.constant 13 : index
    %511 = memref.load %arg2[%c6_288, %c13_289] : memref<9x25xf32, #tpu.memory_space<smem>>
    %512 = vector.broadcast %511 : f32 to vector<3x8x8xf32>
    %513 = arith.mulf %486, %512 : vector<3x8x8xf32>
    %514 = arith.addf %476, %513 : vector<3x8x8xf32>
    %c7_290 = arith.constant 7 : index
    %c13_291 = arith.constant 13 : index
    %515 = memref.load %arg2[%c7_290, %c13_291] : memref<9x25xf32, #tpu.memory_space<smem>>
    %516 = vector.broadcast %515 : f32 to vector<3x8x8xf32>
    %517 = arith.mulf %486, %516 : vector<3x8x8xf32>
    %518 = arith.addf %480, %517 : vector<3x8x8xf32>
    %c8_292 = arith.constant 8 : index
    %c13_293 = arith.constant 13 : index
    %519 = memref.load %arg2[%c8_292, %c13_293] : memref<9x25xf32, #tpu.memory_space<smem>>
    %520 = vector.broadcast %519 : f32 to vector<3x8x8xf32>
    %521 = arith.mulf %486, %520 : vector<3x8x8xf32>
    %522 = arith.addf %484, %521 : vector<3x8x8xf32>
    %c0_294 = arith.constant 0 : index
    %c0_295 = arith.constant 0 : index
    %c1_296 = arith.constant 1 : index
    %c2_297 = arith.constant 2 : index
    %523 = vector.load %arg1[%c0_294, %c0_295, %c1_296, %c2_297] : memref<3x4x10x10xf32, #tpu.memory_space<vmem>>, vector<3x1x8x8xf32>
    %524 = vector.shape_cast %523 : vector<3x1x8x8xf32> to vector<3x8x8xf32>
    %c0_298 = arith.constant 0 : index
    %c14 = arith.constant 14 : index
    %525 = memref.load %arg2[%c0_298, %c14] : memref<9x25xf32, #tpu.memory_space<smem>>
    %526 = vector.broadcast %525 : f32 to vector<3x8x8xf32>
    %527 = arith.mulf %524, %526 : vector<3x8x8xf32>
    %528 = arith.addf %490, %527 : vector<3x8x8xf32>
    %c1_299 = arith.constant 1 : index
    %c14_300 = arith.constant 14 : index
    %529 = memref.load %arg2[%c1_299, %c14_300] : memref<9x25xf32, #tpu.memory_space<smem>>
    %530 = vector.broadcast %529 : f32 to vector<3x8x8xf32>
    %531 = arith.mulf %524, %530 : vector<3x8x8xf32>
    %532 = arith.addf %494, %531 : vector<3x8x8xf32>
    %c2_301 = arith.constant 2 : index
    %c14_302 = arith.constant 14 : index
    %533 = memref.load %arg2[%c2_301, %c14_302] : memref<9x25xf32, #tpu.memory_space<smem>>
    %534 = vector.broadcast %533 : f32 to vector<3x8x8xf32>
    %535 = arith.mulf %524, %534 : vector<3x8x8xf32>
    %536 = arith.addf %498, %535 : vector<3x8x8xf32>
    %c3_303 = arith.constant 3 : index
    %c14_304 = arith.constant 14 : index
    %537 = memref.load %arg2[%c3_303, %c14_304] : memref<9x25xf32, #tpu.memory_space<smem>>
    %538 = vector.broadcast %537 : f32 to vector<3x8x8xf32>
    %539 = arith.mulf %524, %538 : vector<3x8x8xf32>
    %540 = arith.addf %502, %539 : vector<3x8x8xf32>
    %c4_305 = arith.constant 4 : index
    %c14_306 = arith.constant 14 : index
    %541 = memref.load %arg2[%c4_305, %c14_306] : memref<9x25xf32, #tpu.memory_space<smem>>
    %542 = vector.broadcast %541 : f32 to vector<3x8x8xf32>
    %543 = arith.mulf %524, %542 : vector<3x8x8xf32>
    %544 = arith.addf %506, %543 : vector<3x8x8xf32>
    %c5_307 = arith.constant 5 : index
    %c14_308 = arith.constant 14 : index
    %545 = memref.load %arg2[%c5_307, %c14_308] : memref<9x25xf32, #tpu.memory_space<smem>>
    %546 = vector.broadcast %545 : f32 to vector<3x8x8xf32>
    %547 = arith.mulf %524, %546 : vector<3x8x8xf32>
    %548 = arith.addf %510, %547 : vector<3x8x8xf32>
    %c6_309 = arith.constant 6 : index
    %c14_310 = arith.constant 14 : index
    %549 = memref.load %arg2[%c6_309, %c14_310] : memref<9x25xf32, #tpu.memory_space<smem>>
    %550 = vector.broadcast %549 : f32 to vector<3x8x8xf32>
    %551 = arith.mulf %524, %550 : vector<3x8x8xf32>
    %552 = arith.addf %514, %551 : vector<3x8x8xf32>
    %c7_311 = arith.constant 7 : index
    %c14_312 = arith.constant 14 : index
    %553 = memref.load %arg2[%c7_311, %c14_312] : memref<9x25xf32, #tpu.memory_space<smem>>
    %554 = vector.broadcast %553 : f32 to vector<3x8x8xf32>
    %555 = arith.mulf %524, %554 : vector<3x8x8xf32>
    %556 = arith.addf %518, %555 : vector<3x8x8xf32>
    %c8_313 = arith.constant 8 : index
    %c14_314 = arith.constant 14 : index
    %557 = memref.load %arg2[%c8_313, %c14_314] : memref<9x25xf32, #tpu.memory_space<smem>>
    %558 = vector.broadcast %557 : f32 to vector<3x8x8xf32>
    %559 = arith.mulf %524, %558 : vector<3x8x8xf32>
    %560 = arith.addf %522, %559 : vector<3x8x8xf32>
    %c0_315 = arith.constant 0 : index
    %c2_316 = arith.constant 2 : index
    %c1_317 = arith.constant 1 : index
    %c0_318 = arith.constant 0 : index
    %561 = vector.load %arg1[%c0_315, %c2_316, %c1_317, %c0_318] : memref<3x4x10x10xf32, #tpu.memory_space<vmem>>, vector<3x1x8x8xf32>
    %562 = vector.shape_cast %561 : vector<3x1x8x8xf32> to vector<3x8x8xf32>
    %c0_319 = arith.constant 0 : index
    %c15 = arith.constant 15 : index
    %563 = memref.load %arg2[%c0_319, %c15] : memref<9x25xf32, #tpu.memory_space<smem>>
    %564 = vector.broadcast %563 : f32 to vector<3x8x8xf32>
    %565 = arith.mulf %562, %564 : vector<3x8x8xf32>
    %566 = arith.addf %528, %565 : vector<3x8x8xf32>
    %c1_320 = arith.constant 1 : index
    %c15_321 = arith.constant 15 : index
    %567 = memref.load %arg2[%c1_320, %c15_321] : memref<9x25xf32, #tpu.memory_space<smem>>
    %568 = vector.broadcast %567 : f32 to vector<3x8x8xf32>
    %569 = arith.mulf %562, %568 : vector<3x8x8xf32>
    %570 = arith.addf %532, %569 : vector<3x8x8xf32>
    %c2_322 = arith.constant 2 : index
    %c15_323 = arith.constant 15 : index
    %571 = memref.load %arg2[%c2_322, %c15_323] : memref<9x25xf32, #tpu.memory_space<smem>>
    %572 = vector.broadcast %571 : f32 to vector<3x8x8xf32>
    %573 = arith.mulf %562, %572 : vector<3x8x8xf32>
    %574 = arith.addf %536, %573 : vector<3x8x8xf32>
    %c3_324 = arith.constant 3 : index
    %c15_325 = arith.constant 15 : index
    %575 = memref.load %arg2[%c3_324, %c15_325] : memref<9x25xf32, #tpu.memory_space<smem>>
    %576 = vector.broadcast %575 : f32 to vector<3x8x8xf32>
    %577 = arith.mulf %562, %576 : vector<3x8x8xf32>
    %578 = arith.addf %540, %577 : vector<3x8x8xf32>
    %c4_326 = arith.constant 4 : index
    %c15_327 = arith.constant 15 : index
    %579 = memref.load %arg2[%c4_326, %c15_327] : memref<9x25xf32, #tpu.memory_space<smem>>
    %580 = vector.broadcast %579 : f32 to vector<3x8x8xf32>
    %581 = arith.mulf %562, %580 : vector<3x8x8xf32>
    %582 = arith.addf %544, %581 : vector<3x8x8xf32>
    %c5_328 = arith.constant 5 : index
    %c15_329 = arith.constant 15 : index
    %583 = memref.load %arg2[%c5_328, %c15_329] : memref<9x25xf32, #tpu.memory_space<smem>>
    %584 = vector.broadcast %583 : f32 to vector<3x8x8xf32>
    %585 = arith.mulf %562, %584 : vector<3x8x8xf32>
    %586 = arith.addf %548, %585 : vector<3x8x8xf32>
    %c6_330 = arith.constant 6 : index
    %c15_331 = arith.constant 15 : index
    %587 = memref.load %arg2[%c6_330, %c15_331] : memref<9x25xf32, #tpu.memory_space<smem>>
    %588 = vector.broadcast %587 : f32 to vector<3x8x8xf32>
    %589 = arith.mulf %562, %588 : vector<3x8x8xf32>
    %590 = arith.addf %552, %589 : vector<3x8x8xf32>
    %c7_332 = arith.constant 7 : index
    %c15_333 = arith.constant 15 : index
    %591 = memref.load %arg2[%c7_332, %c15_333] : memref<9x25xf32, #tpu.memory_space<smem>>
    %592 = vector.broadcast %591 : f32 to vector<3x8x8xf32>
    %593 = arith.mulf %562, %592 : vector<3x8x8xf32>
    %594 = arith.addf %556, %593 : vector<3x8x8xf32>
    %c8_334 = arith.constant 8 : index
    %c15_335 = arith.constant 15 : index
    %595 = memref.load %arg2[%c8_334, %c15_335] : memref<9x25xf32, #tpu.memory_space<smem>>
    %596 = vector.broadcast %595 : f32 to vector<3x8x8xf32>
    %597 = arith.mulf %562, %596 : vector<3x8x8xf32>
    %598 = arith.addf %560, %597 : vector<3x8x8xf32>
    %c0_336 = arith.constant 0 : index
    %c3_337 = arith.constant 3 : index
    %c1_338 = arith.constant 1 : index
    %c0_339 = arith.constant 0 : index
    %599 = vector.load %arg1[%c0_336, %c3_337, %c1_338, %c0_339] : memref<3x4x10x10xf32, #tpu.memory_space<vmem>>, vector<3x1x8x8xf32>
    %600 = vector.shape_cast %599 : vector<3x1x8x8xf32> to vector<3x8x8xf32>
    %c0_340 = arith.constant 0 : index
    %c16 = arith.constant 16 : index
    %601 = memref.load %arg2[%c0_340, %c16] : memref<9x25xf32, #tpu.memory_space<smem>>
    %602 = vector.broadcast %601 : f32 to vector<3x8x8xf32>
    %603 = arith.mulf %600, %602 : vector<3x8x8xf32>
    %604 = arith.addf %566, %603 : vector<3x8x8xf32>
    %c1_341 = arith.constant 1 : index
    %c16_342 = arith.constant 16 : index
    %605 = memref.load %arg2[%c1_341, %c16_342] : memref<9x25xf32, #tpu.memory_space<smem>>
    %606 = vector.broadcast %605 : f32 to vector<3x8x8xf32>
    %607 = arith.mulf %600, %606 : vector<3x8x8xf32>
    %608 = arith.addf %570, %607 : vector<3x8x8xf32>
    %c2_343 = arith.constant 2 : index
    %c16_344 = arith.constant 16 : index
    %609 = memref.load %arg2[%c2_343, %c16_344] : memref<9x25xf32, #tpu.memory_space<smem>>
    %610 = vector.broadcast %609 : f32 to vector<3x8x8xf32>
    %611 = arith.mulf %600, %610 : vector<3x8x8xf32>
    %612 = arith.addf %574, %611 : vector<3x8x8xf32>
    %c3_345 = arith.constant 3 : index
    %c16_346 = arith.constant 16 : index
    %613 = memref.load %arg2[%c3_345, %c16_346] : memref<9x25xf32, #tpu.memory_space<smem>>
    %614 = vector.broadcast %613 : f32 to vector<3x8x8xf32>
    %615 = arith.mulf %600, %614 : vector<3x8x8xf32>
    %616 = arith.addf %578, %615 : vector<3x8x8xf32>
    %c4_347 = arith.constant 4 : index
    %c16_348 = arith.constant 16 : index
    %617 = memref.load %arg2[%c4_347, %c16_348] : memref<9x25xf32, #tpu.memory_space<smem>>
    %618 = vector.broadcast %617 : f32 to vector<3x8x8xf32>
    %619 = arith.mulf %600, %618 : vector<3x8x8xf32>
    %620 = arith.addf %582, %619 : vector<3x8x8xf32>
    %c5_349 = arith.constant 5 : index
    %c16_350 = arith.constant 16 : index
    %621 = memref.load %arg2[%c5_349, %c16_350] : memref<9x25xf32, #tpu.memory_space<smem>>
    %622 = vector.broadcast %621 : f32 to vector<3x8x8xf32>
    %623 = arith.mulf %600, %622 : vector<3x8x8xf32>
    %624 = arith.addf %586, %623 : vector<3x8x8xf32>
    %c6_351 = arith.constant 6 : index
    %c16_352 = arith.constant 16 : index
    %625 = memref.load %arg2[%c6_351, %c16_352] : memref<9x25xf32, #tpu.memory_space<smem>>
    %626 = vector.broadcast %625 : f32 to vector<3x8x8xf32>
    %627 = arith.mulf %600, %626 : vector<3x8x8xf32>
    %628 = arith.addf %590, %627 : vector<3x8x8xf32>
    %c7_353 = arith.constant 7 : index
    %c16_354 = arith.constant 16 : index
    %629 = memref.load %arg2[%c7_353, %c16_354] : memref<9x25xf32, #tpu.memory_space<smem>>
    %630 = vector.broadcast %629 : f32 to vector<3x8x8xf32>
    %631 = arith.mulf %600, %630 : vector<3x8x8xf32>
    %632 = arith.addf %594, %631 : vector<3x8x8xf32>
    %c8_355 = arith.constant 8 : index
    %c16_356 = arith.constant 16 : index
    %633 = memref.load %arg2[%c8_355, %c16_356] : memref<9x25xf32, #tpu.memory_space<smem>>
    %634 = vector.broadcast %633 : f32 to vector<3x8x8xf32>
    %635 = arith.mulf %600, %634 : vector<3x8x8xf32>
    %636 = arith.addf %598, %635 : vector<3x8x8xf32>
    %c0_357 = arith.constant 0 : index
    %c2_358 = arith.constant 2 : index
    %c1_359 = arith.constant 1 : index
    %c1_360 = arith.constant 1 : index
    %637 = vector.load %arg1[%c0_357, %c2_358, %c1_359, %c1_360] : memref<3x4x10x10xf32, #tpu.memory_space<vmem>>, vector<3x1x8x8xf32>
    %638 = vector.shape_cast %637 : vector<3x1x8x8xf32> to vector<3x8x8xf32>
    %c0_361 = arith.constant 0 : index
    %c17 = arith.constant 17 : index
    %639 = memref.load %arg2[%c0_361, %c17] : memref<9x25xf32, #tpu.memory_space<smem>>
    %640 = vector.broadcast %639 : f32 to vector<3x8x8xf32>
    %641 = arith.mulf %638, %640 : vector<3x8x8xf32>
    %642 = arith.addf %604, %641 : vector<3x8x8xf32>
    %c1_362 = arith.constant 1 : index
    %c17_363 = arith.constant 17 : index
    %643 = memref.load %arg2[%c1_362, %c17_363] : memref<9x25xf32, #tpu.memory_space<smem>>
    %644 = vector.broadcast %643 : f32 to vector<3x8x8xf32>
    %645 = arith.mulf %638, %644 : vector<3x8x8xf32>
    %646 = arith.addf %608, %645 : vector<3x8x8xf32>
    %c2_364 = arith.constant 2 : index
    %c17_365 = arith.constant 17 : index
    %647 = memref.load %arg2[%c2_364, %c17_365] : memref<9x25xf32, #tpu.memory_space<smem>>
    %648 = vector.broadcast %647 : f32 to vector<3x8x8xf32>
    %649 = arith.mulf %638, %648 : vector<3x8x8xf32>
    %650 = arith.addf %612, %649 : vector<3x8x8xf32>
    %c3_366 = arith.constant 3 : index
    %c17_367 = arith.constant 17 : index
    %651 = memref.load %arg2[%c3_366, %c17_367] : memref<9x25xf32, #tpu.memory_space<smem>>
    %652 = vector.broadcast %651 : f32 to vector<3x8x8xf32>
    %653 = arith.mulf %638, %652 : vector<3x8x8xf32>
    %654 = arith.addf %616, %653 : vector<3x8x8xf32>
    %c4_368 = arith.constant 4 : index
    %c17_369 = arith.constant 17 : index
    %655 = memref.load %arg2[%c4_368, %c17_369] : memref<9x25xf32, #tpu.memory_space<smem>>
    %656 = vector.broadcast %655 : f32 to vector<3x8x8xf32>
    %657 = arith.mulf %638, %656 : vector<3x8x8xf32>
    %658 = arith.addf %620, %657 : vector<3x8x8xf32>
    %c5_370 = arith.constant 5 : index
    %c17_371 = arith.constant 17 : index
    %659 = memref.load %arg2[%c5_370, %c17_371] : memref<9x25xf32, #tpu.memory_space<smem>>
    %660 = vector.broadcast %659 : f32 to vector<3x8x8xf32>
    %661 = arith.mulf %638, %660 : vector<3x8x8xf32>
    %662 = arith.addf %624, %661 : vector<3x8x8xf32>
    %c6_372 = arith.constant 6 : index
    %c17_373 = arith.constant 17 : index
    %663 = memref.load %arg2[%c6_372, %c17_373] : memref<9x25xf32, #tpu.memory_space<smem>>
    %664 = vector.broadcast %663 : f32 to vector<3x8x8xf32>
    %665 = arith.mulf %638, %664 : vector<3x8x8xf32>
    %666 = arith.addf %628, %665 : vector<3x8x8xf32>
    %c7_374 = arith.constant 7 : index
    %c17_375 = arith.constant 17 : index
    %667 = memref.load %arg2[%c7_374, %c17_375] : memref<9x25xf32, #tpu.memory_space<smem>>
    %668 = vector.broadcast %667 : f32 to vector<3x8x8xf32>
    %669 = arith.mulf %638, %668 : vector<3x8x8xf32>
    %670 = arith.addf %632, %669 : vector<3x8x8xf32>
    %c8_376 = arith.constant 8 : index
    %c17_377 = arith.constant 17 : index
    %671 = memref.load %arg2[%c8_376, %c17_377] : memref<9x25xf32, #tpu.memory_space<smem>>
    %672 = vector.broadcast %671 : f32 to vector<3x8x8xf32>
    %673 = arith.mulf %638, %672 : vector<3x8x8xf32>
    %674 = arith.addf %636, %673 : vector<3x8x8xf32>
    %c0_378 = arith.constant 0 : index
    %c3_379 = arith.constant 3 : index
    %c1_380 = arith.constant 1 : index
    %c1_381 = arith.constant 1 : index
    %675 = vector.load %arg1[%c0_378, %c3_379, %c1_380, %c1_381] : memref<3x4x10x10xf32, #tpu.memory_space<vmem>>, vector<3x1x8x8xf32>
    %676 = vector.shape_cast %675 : vector<3x1x8x8xf32> to vector<3x8x8xf32>
    %c0_382 = arith.constant 0 : index
    %c18 = arith.constant 18 : index
    %677 = memref.load %arg2[%c0_382, %c18] : memref<9x25xf32, #tpu.memory_space<smem>>
    %678 = vector.broadcast %677 : f32 to vector<3x8x8xf32>
    %679 = arith.mulf %676, %678 : vector<3x8x8xf32>
    %680 = arith.addf %642, %679 : vector<3x8x8xf32>
    %c1_383 = arith.constant 1 : index
    %c18_384 = arith.constant 18 : index
    %681 = memref.load %arg2[%c1_383, %c18_384] : memref<9x25xf32, #tpu.memory_space<smem>>
    %682 = vector.broadcast %681 : f32 to vector<3x8x8xf32>
    %683 = arith.mulf %676, %682 : vector<3x8x8xf32>
    %684 = arith.addf %646, %683 : vector<3x8x8xf32>
    %c2_385 = arith.constant 2 : index
    %c18_386 = arith.constant 18 : index
    %685 = memref.load %arg2[%c2_385, %c18_386] : memref<9x25xf32, #tpu.memory_space<smem>>
    %686 = vector.broadcast %685 : f32 to vector<3x8x8xf32>
    %687 = arith.mulf %676, %686 : vector<3x8x8xf32>
    %688 = arith.addf %650, %687 : vector<3x8x8xf32>
    %c3_387 = arith.constant 3 : index
    %c18_388 = arith.constant 18 : index
    %689 = memref.load %arg2[%c3_387, %c18_388] : memref<9x25xf32, #tpu.memory_space<smem>>
    %690 = vector.broadcast %689 : f32 to vector<3x8x8xf32>
    %691 = arith.mulf %676, %690 : vector<3x8x8xf32>
    %692 = arith.addf %654, %691 : vector<3x8x8xf32>
    %c4_389 = arith.constant 4 : index
    %c18_390 = arith.constant 18 : index
    %693 = memref.load %arg2[%c4_389, %c18_390] : memref<9x25xf32, #tpu.memory_space<smem>>
    %694 = vector.broadcast %693 : f32 to vector<3x8x8xf32>
    %695 = arith.mulf %676, %694 : vector<3x8x8xf32>
    %696 = arith.addf %658, %695 : vector<3x8x8xf32>
    %c5_391 = arith.constant 5 : index
    %c18_392 = arith.constant 18 : index
    %697 = memref.load %arg2[%c5_391, %c18_392] : memref<9x25xf32, #tpu.memory_space<smem>>
    %698 = vector.broadcast %697 : f32 to vector<3x8x8xf32>
    %699 = arith.mulf %676, %698 : vector<3x8x8xf32>
    %700 = arith.addf %662, %699 : vector<3x8x8xf32>
    %c6_393 = arith.constant 6 : index
    %c18_394 = arith.constant 18 : index
    %701 = memref.load %arg2[%c6_393, %c18_394] : memref<9x25xf32, #tpu.memory_space<smem>>
    %702 = vector.broadcast %701 : f32 to vector<3x8x8xf32>
    %703 = arith.mulf %676, %702 : vector<3x8x8xf32>
    %704 = arith.addf %666, %703 : vector<3x8x8xf32>
    %c7_395 = arith.constant 7 : index
    %c18_396 = arith.constant 18 : index
    %705 = memref.load %arg2[%c7_395, %c18_396] : memref<9x25xf32, #tpu.memory_space<smem>>
    %706 = vector.broadcast %705 : f32 to vector<3x8x8xf32>
    %707 = arith.mulf %676, %706 : vector<3x8x8xf32>
    %708 = arith.addf %670, %707 : vector<3x8x8xf32>
    %c8_397 = arith.constant 8 : index
    %c18_398 = arith.constant 18 : index
    %709 = memref.load %arg2[%c8_397, %c18_398] : memref<9x25xf32, #tpu.memory_space<smem>>
    %710 = vector.broadcast %709 : f32 to vector<3x8x8xf32>
    %711 = arith.mulf %676, %710 : vector<3x8x8xf32>
    %712 = arith.addf %674, %711 : vector<3x8x8xf32>
    %c0_399 = arith.constant 0 : index
    %c2_400 = arith.constant 2 : index
    %c1_401 = arith.constant 1 : index
    %c2_402 = arith.constant 2 : index
    %713 = vector.load %arg1[%c0_399, %c2_400, %c1_401, %c2_402] : memref<3x4x10x10xf32, #tpu.memory_space<vmem>>, vector<3x1x8x8xf32>
    %714 = vector.shape_cast %713 : vector<3x1x8x8xf32> to vector<3x8x8xf32>
    %c0_403 = arith.constant 0 : index
    %c19 = arith.constant 19 : index
    %715 = memref.load %arg2[%c0_403, %c19] : memref<9x25xf32, #tpu.memory_space<smem>>
    %716 = vector.broadcast %715 : f32 to vector<3x8x8xf32>
    %717 = arith.mulf %714, %716 : vector<3x8x8xf32>
    %718 = arith.addf %680, %717 : vector<3x8x8xf32>
    %c1_404 = arith.constant 1 : index
    %c19_405 = arith.constant 19 : index
    %719 = memref.load %arg2[%c1_404, %c19_405] : memref<9x25xf32, #tpu.memory_space<smem>>
    %720 = vector.broadcast %719 : f32 to vector<3x8x8xf32>
    %721 = arith.mulf %714, %720 : vector<3x8x8xf32>
    %722 = arith.addf %684, %721 : vector<3x8x8xf32>
    %c2_406 = arith.constant 2 : index
    %c19_407 = arith.constant 19 : index
    %723 = memref.load %arg2[%c2_406, %c19_407] : memref<9x25xf32, #tpu.memory_space<smem>>
    %724 = vector.broadcast %723 : f32 to vector<3x8x8xf32>
    %725 = arith.mulf %714, %724 : vector<3x8x8xf32>
    %726 = arith.addf %688, %725 : vector<3x8x8xf32>
    %c3_408 = arith.constant 3 : index
    %c19_409 = arith.constant 19 : index
    %727 = memref.load %arg2[%c3_408, %c19_409] : memref<9x25xf32, #tpu.memory_space<smem>>
    %728 = vector.broadcast %727 : f32 to vector<3x8x8xf32>
    %729 = arith.mulf %714, %728 : vector<3x8x8xf32>
    %730 = arith.addf %692, %729 : vector<3x8x8xf32>
    %c4_410 = arith.constant 4 : index
    %c19_411 = arith.constant 19 : index
    %731 = memref.load %arg2[%c4_410, %c19_411] : memref<9x25xf32, #tpu.memory_space<smem>>
    %732 = vector.broadcast %731 : f32 to vector<3x8x8xf32>
    %733 = arith.mulf %714, %732 : vector<3x8x8xf32>
    %734 = arith.addf %696, %733 : vector<3x8x8xf32>
    %c5_412 = arith.constant 5 : index
    %c19_413 = arith.constant 19 : index
    %735 = memref.load %arg2[%c5_412, %c19_413] : memref<9x25xf32, #tpu.memory_space<smem>>
    %736 = vector.broadcast %735 : f32 to vector<3x8x8xf32>
    %737 = arith.mulf %714, %736 : vector<3x8x8xf32>
    %738 = arith.addf %700, %737 : vector<3x8x8xf32>
    %c6_414 = arith.constant 6 : index
    %c19_415 = arith.constant 19 : index
    %739 = memref.load %arg2[%c6_414, %c19_415] : memref<9x25xf32, #tpu.memory_space<smem>>
    %740 = vector.broadcast %739 : f32 to vector<3x8x8xf32>
    %741 = arith.mulf %714, %740 : vector<3x8x8xf32>
    %742 = arith.addf %704, %741 : vector<3x8x8xf32>
    %c7_416 = arith.constant 7 : index
    %c19_417 = arith.constant 19 : index
    %743 = memref.load %arg2[%c7_416, %c19_417] : memref<9x25xf32, #tpu.memory_space<smem>>
    %744 = vector.broadcast %743 : f32 to vector<3x8x8xf32>
    %745 = arith.mulf %714, %744 : vector<3x8x8xf32>
    %746 = arith.addf %708, %745 : vector<3x8x8xf32>
    %c8_418 = arith.constant 8 : index
    %c19_419 = arith.constant 19 : index
    %747 = memref.load %arg2[%c8_418, %c19_419] : memref<9x25xf32, #tpu.memory_space<smem>>
    %748 = vector.broadcast %747 : f32 to vector<3x8x8xf32>
    %749 = arith.mulf %714, %748 : vector<3x8x8xf32>
    %750 = arith.addf %712, %749 : vector<3x8x8xf32>
    %c0_420 = arith.constant 0 : index
    %c0_421 = arith.constant 0 : index
    %c2_422 = arith.constant 2 : index
    %c0_423 = arith.constant 0 : index
    %751 = vector.load %arg1[%c0_420, %c0_421, %c2_422, %c0_423] : memref<3x4x10x10xf32, #tpu.memory_space<vmem>>, vector<3x1x8x8xf32>
    %752 = vector.shape_cast %751 : vector<3x1x8x8xf32> to vector<3x8x8xf32>
    %c0_424 = arith.constant 0 : index
    %c20 = arith.constant 20 : index
    %753 = memref.load %arg2[%c0_424, %c20] : memref<9x25xf32, #tpu.memory_space<smem>>
    %754 = vector.broadcast %753 : f32 to vector<3x8x8xf32>
    %755 = arith.mulf %752, %754 : vector<3x8x8xf32>
    %756 = arith.addf %718, %755 : vector<3x8x8xf32>
    %c1_425 = arith.constant 1 : index
    %c20_426 = arith.constant 20 : index
    %757 = memref.load %arg2[%c1_425, %c20_426] : memref<9x25xf32, #tpu.memory_space<smem>>
    %758 = vector.broadcast %757 : f32 to vector<3x8x8xf32>
    %759 = arith.mulf %752, %758 : vector<3x8x8xf32>
    %760 = arith.addf %722, %759 : vector<3x8x8xf32>
    %c2_427 = arith.constant 2 : index
    %c20_428 = arith.constant 20 : index
    %761 = memref.load %arg2[%c2_427, %c20_428] : memref<9x25xf32, #tpu.memory_space<smem>>
    %762 = vector.broadcast %761 : f32 to vector<3x8x8xf32>
    %763 = arith.mulf %752, %762 : vector<3x8x8xf32>
    %764 = arith.addf %726, %763 : vector<3x8x8xf32>
    %c3_429 = arith.constant 3 : index
    %c20_430 = arith.constant 20 : index
    %765 = memref.load %arg2[%c3_429, %c20_430] : memref<9x25xf32, #tpu.memory_space<smem>>
    %766 = vector.broadcast %765 : f32 to vector<3x8x8xf32>
    %767 = arith.mulf %752, %766 : vector<3x8x8xf32>
    %768 = arith.addf %730, %767 : vector<3x8x8xf32>
    %c4_431 = arith.constant 4 : index
    %c20_432 = arith.constant 20 : index
    %769 = memref.load %arg2[%c4_431, %c20_432] : memref<9x25xf32, #tpu.memory_space<smem>>
    %770 = vector.broadcast %769 : f32 to vector<3x8x8xf32>
    %771 = arith.mulf %752, %770 : vector<3x8x8xf32>
    %772 = arith.addf %734, %771 : vector<3x8x8xf32>
    %c5_433 = arith.constant 5 : index
    %c20_434 = arith.constant 20 : index
    %773 = memref.load %arg2[%c5_433, %c20_434] : memref<9x25xf32, #tpu.memory_space<smem>>
    %774 = vector.broadcast %773 : f32 to vector<3x8x8xf32>
    %775 = arith.mulf %752, %774 : vector<3x8x8xf32>
    %776 = arith.addf %738, %775 : vector<3x8x8xf32>
    %c6_435 = arith.constant 6 : index
    %c20_436 = arith.constant 20 : index
    %777 = memref.load %arg2[%c6_435, %c20_436] : memref<9x25xf32, #tpu.memory_space<smem>>
    %778 = vector.broadcast %777 : f32 to vector<3x8x8xf32>
    %779 = arith.mulf %752, %778 : vector<3x8x8xf32>
    %780 = arith.addf %742, %779 : vector<3x8x8xf32>
    %c7_437 = arith.constant 7 : index
    %c20_438 = arith.constant 20 : index
    %781 = memref.load %arg2[%c7_437, %c20_438] : memref<9x25xf32, #tpu.memory_space<smem>>
    %782 = vector.broadcast %781 : f32 to vector<3x8x8xf32>
    %783 = arith.mulf %752, %782 : vector<3x8x8xf32>
    %784 = arith.addf %746, %783 : vector<3x8x8xf32>
    %c8_439 = arith.constant 8 : index
    %c20_440 = arith.constant 20 : index
    %785 = memref.load %arg2[%c8_439, %c20_440] : memref<9x25xf32, #tpu.memory_space<smem>>
    %786 = vector.broadcast %785 : f32 to vector<3x8x8xf32>
    %787 = arith.mulf %752, %786 : vector<3x8x8xf32>
    %788 = arith.addf %750, %787 : vector<3x8x8xf32>
    %c0_441 = arith.constant 0 : index
    %c1_442 = arith.constant 1 : index
    %c2_443 = arith.constant 2 : index
    %c0_444 = arith.constant 0 : index
    %789 = vector.load %arg1[%c0_441, %c1_442, %c2_443, %c0_444] : memref<3x4x10x10xf32, #tpu.memory_space<vmem>>, vector<3x1x8x8xf32>
    %790 = vector.shape_cast %789 : vector<3x1x8x8xf32> to vector<3x8x8xf32>
    %c0_445 = arith.constant 0 : index
    %c21 = arith.constant 21 : index
    %791 = memref.load %arg2[%c0_445, %c21] : memref<9x25xf32, #tpu.memory_space<smem>>
    %792 = vector.broadcast %791 : f32 to vector<3x8x8xf32>
    %793 = arith.mulf %790, %792 : vector<3x8x8xf32>
    %794 = arith.addf %756, %793 : vector<3x8x8xf32>
    %c1_446 = arith.constant 1 : index
    %c21_447 = arith.constant 21 : index
    %795 = memref.load %arg2[%c1_446, %c21_447] : memref<9x25xf32, #tpu.memory_space<smem>>
    %796 = vector.broadcast %795 : f32 to vector<3x8x8xf32>
    %797 = arith.mulf %790, %796 : vector<3x8x8xf32>
    %798 = arith.addf %760, %797 : vector<3x8x8xf32>
    %c2_448 = arith.constant 2 : index
    %c21_449 = arith.constant 21 : index
    %799 = memref.load %arg2[%c2_448, %c21_449] : memref<9x25xf32, #tpu.memory_space<smem>>
    %800 = vector.broadcast %799 : f32 to vector<3x8x8xf32>
    %801 = arith.mulf %790, %800 : vector<3x8x8xf32>
    %802 = arith.addf %764, %801 : vector<3x8x8xf32>
    %c3_450 = arith.constant 3 : index
    %c21_451 = arith.constant 21 : index
    %803 = memref.load %arg2[%c3_450, %c21_451] : memref<9x25xf32, #tpu.memory_space<smem>>
    %804 = vector.broadcast %803 : f32 to vector<3x8x8xf32>
    %805 = arith.mulf %790, %804 : vector<3x8x8xf32>
    %806 = arith.addf %768, %805 : vector<3x8x8xf32>
    %c4_452 = arith.constant 4 : index
    %c21_453 = arith.constant 21 : index
    %807 = memref.load %arg2[%c4_452, %c21_453] : memref<9x25xf32, #tpu.memory_space<smem>>
    %808 = vector.broadcast %807 : f32 to vector<3x8x8xf32>
    %809 = arith.mulf %790, %808 : vector<3x8x8xf32>
    %810 = arith.addf %772, %809 : vector<3x8x8xf32>
    %c5_454 = arith.constant 5 : index
    %c21_455 = arith.constant 21 : index
    %811 = memref.load %arg2[%c5_454, %c21_455] : memref<9x25xf32, #tpu.memory_space<smem>>
    %812 = vector.broadcast %811 : f32 to vector<3x8x8xf32>
    %813 = arith.mulf %790, %812 : vector<3x8x8xf32>
    %814 = arith.addf %776, %813 : vector<3x8x8xf32>
    %c6_456 = arith.constant 6 : index
    %c21_457 = arith.constant 21 : index
    %815 = memref.load %arg2[%c6_456, %c21_457] : memref<9x25xf32, #tpu.memory_space<smem>>
    %816 = vector.broadcast %815 : f32 to vector<3x8x8xf32>
    %817 = arith.mulf %790, %816 : vector<3x8x8xf32>
    %818 = arith.addf %780, %817 : vector<3x8x8xf32>
    %c7_458 = arith.constant 7 : index
    %c21_459 = arith.constant 21 : index
    %819 = memref.load %arg2[%c7_458, %c21_459] : memref<9x25xf32, #tpu.memory_space<smem>>
    %820 = vector.broadcast %819 : f32 to vector<3x8x8xf32>
    %821 = arith.mulf %790, %820 : vector<3x8x8xf32>
    %822 = arith.addf %784, %821 : vector<3x8x8xf32>
    %c8_460 = arith.constant 8 : index
    %c21_461 = arith.constant 21 : index
    %823 = memref.load %arg2[%c8_460, %c21_461] : memref<9x25xf32, #tpu.memory_space<smem>>
    %824 = vector.broadcast %823 : f32 to vector<3x8x8xf32>
    %825 = arith.mulf %790, %824 : vector<3x8x8xf32>
    %826 = arith.addf %788, %825 : vector<3x8x8xf32>
    %c0_462 = arith.constant 0 : index
    %c0_463 = arith.constant 0 : index
    %c2_464 = arith.constant 2 : index
    %c1_465 = arith.constant 1 : index
    %827 = vector.load %arg1[%c0_462, %c0_463, %c2_464, %c1_465] : memref<3x4x10x10xf32, #tpu.memory_space<vmem>>, vector<3x1x8x8xf32>
    %828 = vector.shape_cast %827 : vector<3x1x8x8xf32> to vector<3x8x8xf32>
    %c0_466 = arith.constant 0 : index
    %c22 = arith.constant 22 : index
    %829 = memref.load %arg2[%c0_466, %c22] : memref<9x25xf32, #tpu.memory_space<smem>>
    %830 = vector.broadcast %829 : f32 to vector<3x8x8xf32>
    %831 = arith.mulf %828, %830 : vector<3x8x8xf32>
    %832 = arith.addf %794, %831 : vector<3x8x8xf32>
    %c1_467 = arith.constant 1 : index
    %c22_468 = arith.constant 22 : index
    %833 = memref.load %arg2[%c1_467, %c22_468] : memref<9x25xf32, #tpu.memory_space<smem>>
    %834 = vector.broadcast %833 : f32 to vector<3x8x8xf32>
    %835 = arith.mulf %828, %834 : vector<3x8x8xf32>
    %836 = arith.addf %798, %835 : vector<3x8x8xf32>
    %c2_469 = arith.constant 2 : index
    %c22_470 = arith.constant 22 : index
    %837 = memref.load %arg2[%c2_469, %c22_470] : memref<9x25xf32, #tpu.memory_space<smem>>
    %838 = vector.broadcast %837 : f32 to vector<3x8x8xf32>
    %839 = arith.mulf %828, %838 : vector<3x8x8xf32>
    %840 = arith.addf %802, %839 : vector<3x8x8xf32>
    %c3_471 = arith.constant 3 : index
    %c22_472 = arith.constant 22 : index
    %841 = memref.load %arg2[%c3_471, %c22_472] : memref<9x25xf32, #tpu.memory_space<smem>>
    %842 = vector.broadcast %841 : f32 to vector<3x8x8xf32>
    %843 = arith.mulf %828, %842 : vector<3x8x8xf32>
    %844 = arith.addf %806, %843 : vector<3x8x8xf32>
    %c4_473 = arith.constant 4 : index
    %c22_474 = arith.constant 22 : index
    %845 = memref.load %arg2[%c4_473, %c22_474] : memref<9x25xf32, #tpu.memory_space<smem>>
    %846 = vector.broadcast %845 : f32 to vector<3x8x8xf32>
    %847 = arith.mulf %828, %846 : vector<3x8x8xf32>
    %848 = arith.addf %810, %847 : vector<3x8x8xf32>
    %c5_475 = arith.constant 5 : index
    %c22_476 = arith.constant 22 : index
    %849 = memref.load %arg2[%c5_475, %c22_476] : memref<9x25xf32, #tpu.memory_space<smem>>
    %850 = vector.broadcast %849 : f32 to vector<3x8x8xf32>
    %851 = arith.mulf %828, %850 : vector<3x8x8xf32>
    %852 = arith.addf %814, %851 : vector<3x8x8xf32>
    %c6_477 = arith.constant 6 : index
    %c22_478 = arith.constant 22 : index
    %853 = memref.load %arg2[%c6_477, %c22_478] : memref<9x25xf32, #tpu.memory_space<smem>>
    %854 = vector.broadcast %853 : f32 to vector<3x8x8xf32>
    %855 = arith.mulf %828, %854 : vector<3x8x8xf32>
    %856 = arith.addf %818, %855 : vector<3x8x8xf32>
    %c7_479 = arith.constant 7 : index
    %c22_480 = arith.constant 22 : index
    %857 = memref.load %arg2[%c7_479, %c22_480] : memref<9x25xf32, #tpu.memory_space<smem>>
    %858 = vector.broadcast %857 : f32 to vector<3x8x8xf32>
    %859 = arith.mulf %828, %858 : vector<3x8x8xf32>
    %860 = arith.addf %822, %859 : vector<3x8x8xf32>
    %c8_481 = arith.constant 8 : index
    %c22_482 = arith.constant 22 : index
    %861 = memref.load %arg2[%c8_481, %c22_482] : memref<9x25xf32, #tpu.memory_space<smem>>
    %862 = vector.broadcast %861 : f32 to vector<3x8x8xf32>
    %863 = arith.mulf %828, %862 : vector<3x8x8xf32>
    %864 = arith.addf %826, %863 : vector<3x8x8xf32>
    %c0_483 = arith.constant 0 : index
    %c1_484 = arith.constant 1 : index
    %c2_485 = arith.constant 2 : index
    %c1_486 = arith.constant 1 : index
    %865 = vector.load %arg1[%c0_483, %c1_484, %c2_485, %c1_486] : memref<3x4x10x10xf32, #tpu.memory_space<vmem>>, vector<3x1x8x8xf32>
    %866 = vector.shape_cast %865 : vector<3x1x8x8xf32> to vector<3x8x8xf32>
    %c0_487 = arith.constant 0 : index
    %c23 = arith.constant 23 : index
    %867 = memref.load %arg2[%c0_487, %c23] : memref<9x25xf32, #tpu.memory_space<smem>>
    %868 = vector.broadcast %867 : f32 to vector<3x8x8xf32>
    %869 = arith.mulf %866, %868 : vector<3x8x8xf32>
    %870 = arith.addf %832, %869 : vector<3x8x8xf32>
    %c1_488 = arith.constant 1 : index
    %c23_489 = arith.constant 23 : index
    %871 = memref.load %arg2[%c1_488, %c23_489] : memref<9x25xf32, #tpu.memory_space<smem>>
    %872 = vector.broadcast %871 : f32 to vector<3x8x8xf32>
    %873 = arith.mulf %866, %872 : vector<3x8x8xf32>
    %874 = arith.addf %836, %873 : vector<3x8x8xf32>
    %c2_490 = arith.constant 2 : index
    %c23_491 = arith.constant 23 : index
    %875 = memref.load %arg2[%c2_490, %c23_491] : memref<9x25xf32, #tpu.memory_space<smem>>
    %876 = vector.broadcast %875 : f32 to vector<3x8x8xf32>
    %877 = arith.mulf %866, %876 : vector<3x8x8xf32>
    %878 = arith.addf %840, %877 : vector<3x8x8xf32>
    %c3_492 = arith.constant 3 : index
    %c23_493 = arith.constant 23 : index
    %879 = memref.load %arg2[%c3_492, %c23_493] : memref<9x25xf32, #tpu.memory_space<smem>>
    %880 = vector.broadcast %879 : f32 to vector<3x8x8xf32>
    %881 = arith.mulf %866, %880 : vector<3x8x8xf32>
    %882 = arith.addf %844, %881 : vector<3x8x8xf32>
    %c4_494 = arith.constant 4 : index
    %c23_495 = arith.constant 23 : index
    %883 = memref.load %arg2[%c4_494, %c23_495] : memref<9x25xf32, #tpu.memory_space<smem>>
    %884 = vector.broadcast %883 : f32 to vector<3x8x8xf32>
    %885 = arith.mulf %866, %884 : vector<3x8x8xf32>
    %886 = arith.addf %848, %885 : vector<3x8x8xf32>
    %c5_496 = arith.constant 5 : index
    %c23_497 = arith.constant 23 : index
    %887 = memref.load %arg2[%c5_496, %c23_497] : memref<9x25xf32, #tpu.memory_space<smem>>
    %888 = vector.broadcast %887 : f32 to vector<3x8x8xf32>
    %889 = arith.mulf %866, %888 : vector<3x8x8xf32>
    %890 = arith.addf %852, %889 : vector<3x8x8xf32>
    %c6_498 = arith.constant 6 : index
    %c23_499 = arith.constant 23 : index
    %891 = memref.load %arg2[%c6_498, %c23_499] : memref<9x25xf32, #tpu.memory_space<smem>>
    %892 = vector.broadcast %891 : f32 to vector<3x8x8xf32>
    %893 = arith.mulf %866, %892 : vector<3x8x8xf32>
    %894 = arith.addf %856, %893 : vector<3x8x8xf32>
    %c7_500 = arith.constant 7 : index
    %c23_501 = arith.constant 23 : index
    %895 = memref.load %arg2[%c7_500, %c23_501] : memref<9x25xf32, #tpu.memory_space<smem>>
    %896 = vector.broadcast %895 : f32 to vector<3x8x8xf32>
    %897 = arith.mulf %866, %896 : vector<3x8x8xf32>
    %898 = arith.addf %860, %897 : vector<3x8x8xf32>
    %c8_502 = arith.constant 8 : index
    %c23_503 = arith.constant 23 : index
    %899 = memref.load %arg2[%c8_502, %c23_503] : memref<9x25xf32, #tpu.memory_space<smem>>
    %900 = vector.broadcast %899 : f32 to vector<3x8x8xf32>
    %901 = arith.mulf %866, %900 : vector<3x8x8xf32>
    %902 = arith.addf %864, %901 : vector<3x8x8xf32>
    %c0_504 = arith.constant 0 : index
    %c0_505 = arith.constant 0 : index
    %c2_506 = arith.constant 2 : index
    %c2_507 = arith.constant 2 : index
    %903 = vector.load %arg1[%c0_504, %c0_505, %c2_506, %c2_507] : memref<3x4x10x10xf32, #tpu.memory_space<vmem>>, vector<3x1x8x8xf32>
    %904 = vector.shape_cast %903 : vector<3x1x8x8xf32> to vector<3x8x8xf32>
    %c0_508 = arith.constant 0 : index
    %c24 = arith.constant 24 : index
    %905 = memref.load %arg2[%c0_508, %c24] : memref<9x25xf32, #tpu.memory_space<smem>>
    %906 = vector.broadcast %905 : f32 to vector<3x8x8xf32>
    %907 = arith.mulf %904, %906 : vector<3x8x8xf32>
    %908 = arith.addf %870, %907 : vector<3x8x8xf32>
    %c1_509 = arith.constant 1 : index
    %c24_510 = arith.constant 24 : index
    %909 = memref.load %arg2[%c1_509, %c24_510] : memref<9x25xf32, #tpu.memory_space<smem>>
    %910 = vector.broadcast %909 : f32 to vector<3x8x8xf32>
    %911 = arith.mulf %904, %910 : vector<3x8x8xf32>
    %912 = arith.addf %874, %911 : vector<3x8x8xf32>
    %c2_511 = arith.constant 2 : index
    %c24_512 = arith.constant 24 : index
    %913 = memref.load %arg2[%c2_511, %c24_512] : memref<9x25xf32, #tpu.memory_space<smem>>
    %914 = vector.broadcast %913 : f32 to vector<3x8x8xf32>
    %915 = arith.mulf %904, %914 : vector<3x8x8xf32>
    %916 = arith.addf %878, %915 : vector<3x8x8xf32>
    %c3_513 = arith.constant 3 : index
    %c24_514 = arith.constant 24 : index
    %917 = memref.load %arg2[%c3_513, %c24_514] : memref<9x25xf32, #tpu.memory_space<smem>>
    %918 = vector.broadcast %917 : f32 to vector<3x8x8xf32>
    %919 = arith.mulf %904, %918 : vector<3x8x8xf32>
    %920 = arith.addf %882, %919 : vector<3x8x8xf32>
    %c4_515 = arith.constant 4 : index
    %c24_516 = arith.constant 24 : index
    %921 = memref.load %arg2[%c4_515, %c24_516] : memref<9x25xf32, #tpu.memory_space<smem>>
    %922 = vector.broadcast %921 : f32 to vector<3x8x8xf32>
    %923 = arith.mulf %904, %922 : vector<3x8x8xf32>
    %924 = arith.addf %886, %923 : vector<3x8x8xf32>
    %c5_517 = arith.constant 5 : index
    %c24_518 = arith.constant 24 : index
    %925 = memref.load %arg2[%c5_517, %c24_518] : memref<9x25xf32, #tpu.memory_space<smem>>
    %926 = vector.broadcast %925 : f32 to vector<3x8x8xf32>
    %927 = arith.mulf %904, %926 : vector<3x8x8xf32>
    %928 = arith.addf %890, %927 : vector<3x8x8xf32>
    %c6_519 = arith.constant 6 : index
    %c24_520 = arith.constant 24 : index
    %929 = memref.load %arg2[%c6_519, %c24_520] : memref<9x25xf32, #tpu.memory_space<smem>>
    %930 = vector.broadcast %929 : f32 to vector<3x8x8xf32>
    %931 = arith.mulf %904, %930 : vector<3x8x8xf32>
    %932 = arith.addf %894, %931 : vector<3x8x8xf32>
    %c7_521 = arith.constant 7 : index
    %c24_522 = arith.constant 24 : index
    %933 = memref.load %arg2[%c7_521, %c24_522] : memref<9x25xf32, #tpu.memory_space<smem>>
    %934 = vector.broadcast %933 : f32 to vector<3x8x8xf32>
    %935 = arith.mulf %904, %934 : vector<3x8x8xf32>
    %936 = arith.addf %898, %935 : vector<3x8x8xf32>
    %c8_523 = arith.constant 8 : index
    %c24_524 = arith.constant 24 : index
    %937 = memref.load %arg2[%c8_523, %c24_524] : memref<9x25xf32, #tpu.memory_space<smem>>
    %938 = vector.broadcast %937 : f32 to vector<3x8x8xf32>
    %939 = arith.mulf %904, %938 : vector<3x8x8xf32>
    %940 = arith.addf %902, %939 : vector<3x8x8xf32>
    %c0_525 = arith.constant 0 : index
    %941 = memref.load %arg3[%c0_525] : memref<9xf32, #tpu.memory_space<smem>>
    %942 = vector.broadcast %941 : f32 to vector<3x8x8xf32>
    %943 = arith.addf %908, %942 : vector<3x8x8xf32>
    %cst = arith.constant 0.000000e+00 : f32
    %944 = vector.broadcast %cst : f32 to vector<3x8x8xf32>
    %945 = arith.maximumf %943, %944 : vector<3x8x8xf32>
    %c0_526 = arith.constant 0 : index
    %c0_527 = arith.constant 0 : index
    %c0_528 = arith.constant 0 : index
    %c0_529 = arith.constant 0 : index
    %946 = vector.load %arg4[%c0_526, %c0_527, %c0_528, %c0_529] : memref<3x9x8x8xf32, #tpu.memory_space<vmem>>, vector<3x1x8x8xf32>
    %947 = vector.shape_cast %946 : vector<3x1x8x8xf32> to vector<3x8x8xf32>
    %948 = vector.shape_cast %945 : vector<3x8x8xf32> to vector<3x1x8x8xf32>
    tpu.vector_store %arg4[%c0_526, %c0_527, %c0_528, %c0_529], %948 {strides = array<i32>} : memref<3x9x8x8xf32, #tpu.memory_space<vmem>>, vector<3x1x8x8xf32>,
    %c1_530 = arith.constant 1 : index
    %949 = memref.load %arg3[%c1_530] : memref<9xf32, #tpu.memory_space<smem>>
    %950 = vector.broadcast %949 : f32 to vector<3x8x8xf32>
    %951 = arith.addf %912, %950 : vector<3x8x8xf32>
    %cst_531 = arith.constant 0.000000e+00 : f32
    %952 = vector.broadcast %cst_531 : f32 to vector<3x8x8xf32>
    %953 = arith.maximumf %951, %952 : vector<3x8x8xf32>
    %c0_532 = arith.constant 0 : index
    %c1_533 = arith.constant 1 : index
    %c0_534 = arith.constant 0 : index
    %c0_535 = arith.constant 0 : index
    %954 = vector.load %arg4[%c0_532, %c1_533, %c0_534, %c0_535] : memref<3x9x8x8xf32, #tpu.memory_space<vmem>>, vector<3x1x8x8xf32>
    %955 = vector.shape_cast %954 : vector<3x1x8x8xf32> to vector<3x8x8xf32>
    %956 = vector.shape_cast %953 : vector<3x8x8xf32> to vector<3x1x8x8xf32>
    tpu.vector_store %arg4[%c0_532, %c1_533, %c0_534, %c0_535], %956 {strides = array<i32>} : memref<3x9x8x8xf32, #tpu.memory_space<vmem>>, vector<3x1x8x8xf32>,
    %c2_536 = arith.constant 2 : index
    %957 = memref.load %arg3[%c2_536] : memref<9xf32, #tpu.memory_space<smem>>
    %958 = vector.broadcast %957 : f32 to vector<3x8x8xf32>
    %959 = arith.addf %916, %958 : vector<3x8x8xf32>
    %cst_537 = arith.constant 0.000000e+00 : f32
    %960 = vector.broadcast %cst_537 : f32 to vector<3x8x8xf32>
    %961 = arith.maximumf %959, %960 : vector<3x8x8xf32>
    %c0_538 = arith.constant 0 : index
    %c2_539 = arith.constant 2 : index
    %c0_540 = arith.constant 0 : index
    %c0_541 = arith.constant 0 : index
    %962 = vector.load %arg4[%c0_538, %c2_539, %c0_540, %c0_541] : memref<3x9x8x8xf32, #tpu.memory_space<vmem>>, vector<3x1x8x8xf32>
    %963 = vector.shape_cast %962 : vector<3x1x8x8xf32> to vector<3x8x8xf32>
    %964 = vector.shape_cast %961 : vector<3x8x8xf32> to vector<3x1x8x8xf32>
    tpu.vector_store %arg4[%c0_538, %c2_539, %c0_540, %c0_541], %964 {strides = array<i32>} : memref<3x9x8x8xf32, #tpu.memory_space<vmem>>, vector<3x1x8x8xf32>,
    %c3_542 = arith.constant 3 : index
    %965 = memref.load %arg3[%c3_542] : memref<9xf32, #tpu.memory_space<smem>>
    %966 = vector.broadcast %965 : f32 to vector<3x8x8xf32>
    %967 = arith.addf %920, %966 : vector<3x8x8xf32>
    %cst_543 = arith.constant 0.000000e+00 : f32
    %968 = vector.broadcast %cst_543 : f32 to vector<3x8x8xf32>
    %969 = arith.maximumf %967, %968 : vector<3x8x8xf32>
    %c0_544 = arith.constant 0 : index
    %c3_545 = arith.constant 3 : index
    %c0_546 = arith.constant 0 : index
    %c0_547 = arith.constant 0 : index
    %970 = vector.load %arg4[%c0_544, %c3_545, %c0_546, %c0_547] : memref<3x9x8x8xf32, #tpu.memory_space<vmem>>, vector<3x1x8x8xf32>
    %971 = vector.shape_cast %970 : vector<3x1x8x8xf32> to vector<3x8x8xf32>
    %972 = vector.shape_cast %969 : vector<3x8x8xf32> to vector<3x1x8x8xf32>
    tpu.vector_store %arg4[%c0_544, %c3_545, %c0_546, %c0_547], %972 {strides = array<i32>} : memref<3x9x8x8xf32, #tpu.memory_space<vmem>>, vector<3x1x8x8xf32>,
    %c4_548 = arith.constant 4 : index
    %973 = memref.load %arg3[%c4_548] : memref<9xf32, #tpu.memory_space<smem>>
    %974 = vector.broadcast %973 : f32 to vector<3x8x8xf32>
    %975 = arith.addf %924, %974 : vector<3x8x8xf32>
    %cst_549 = arith.constant 0.000000e+00 : f32
    %976 = vector.broadcast %cst_549 : f32 to vector<3x8x8xf32>
    %977 = arith.maximumf %975, %976 : vector<3x8x8xf32>
    %c0_550 = arith.constant 0 : index
    %c4_551 = arith.constant 4 : index
    %c0_552 = arith.constant 0 : index
    %c0_553 = arith.constant 0 : index
    %978 = vector.load %arg4[%c0_550, %c4_551, %c0_552, %c0_553] : memref<3x9x8x8xf32, #tpu.memory_space<vmem>>, vector<3x1x8x8xf32>
    %979 = vector.shape_cast %978 : vector<3x1x8x8xf32> to vector<3x8x8xf32>
    %980 = vector.shape_cast %977 : vector<3x8x8xf32> to vector<3x1x8x8xf32>
    tpu.vector_store %arg4[%c0_550, %c4_551, %c0_552, %c0_553], %980 {strides = array<i32>} : memref<3x9x8x8xf32, #tpu.memory_space<vmem>>, vector<3x1x8x8xf32>,
    %c5_554 = arith.constant 5 : index
    %981 = memref.load %arg3[%c5_554] : memref<9xf32, #tpu.memory_space<smem>>
    %982 = vector.broadcast %981 : f32 to vector<3x8x8xf32>
    %983 = arith.addf %928, %982 : vector<3x8x8xf32>
    %cst_555 = arith.constant 0.000000e+00 : f32
    %984 = vector.broadcast %cst_555 : f32 to vector<3x8x8xf32>
    %985 = arith.maximumf %983, %984 : vector<3x8x8xf32>
    %c0_556 = arith.constant 0 : index
    %c5_557 = arith.constant 5 : index
    %c0_558 = arith.constant 0 : index
    %c0_559 = arith.constant 0 : index
    %986 = vector.load %arg4[%c0_556, %c5_557, %c0_558, %c0_559] : memref<3x9x8x8xf32, #tpu.memory_space<vmem>>, vector<3x1x8x8xf32>
    %987 = vector.shape_cast %986 : vector<3x1x8x8xf32> to vector<3x8x8xf32>
    %988 = vector.shape_cast %985 : vector<3x8x8xf32> to vector<3x1x8x8xf32>
    tpu.vector_store %arg4[%c0_556, %c5_557, %c0_558, %c0_559], %988 {strides = array<i32>} : memref<3x9x8x8xf32, #tpu.memory_space<vmem>>, vector<3x1x8x8xf32>,
    %c6_560 = arith.constant 6 : index
    %989 = memref.load %arg3[%c6_560] : memref<9xf32, #tpu.memory_space<smem>>
    %990 = vector.broadcast %989 : f32 to vector<3x8x8xf32>
    %991 = arith.addf %932, %990 : vector<3x8x8xf32>
    %cst_561 = arith.constant 0.000000e+00 : f32
    %992 = vector.broadcast %cst_561 : f32 to vector<3x8x8xf32>
    %993 = arith.maximumf %991, %992 : vector<3x8x8xf32>
    %c0_562 = arith.constant 0 : index
    %c6_563 = arith.constant 6 : index
    %c0_564 = arith.constant 0 : index
    %c0_565 = arith.constant 0 : index
    %994 = vector.load %arg4[%c0_562, %c6_563, %c0_564, %c0_565] : memref<3x9x8x8xf32, #tpu.memory_space<vmem>>, vector<3x1x8x8xf32>
    %995 = vector.shape_cast %994 : vector<3x1x8x8xf32> to vector<3x8x8xf32>
    %996 = vector.shape_cast %993 : vector<3x8x8xf32> to vector<3x1x8x8xf32>
    tpu.vector_store %arg4[%c0_562, %c6_563, %c0_564, %c0_565], %996 {strides = array<i32>} : memref<3x9x8x8xf32, #tpu.memory_space<vmem>>, vector<3x1x8x8xf32>,
    %c7_566 = arith.constant 7 : index
    %997 = memref.load %arg3[%c7_566] : memref<9xf32, #tpu.memory_space<smem>>
    %998 = vector.broadcast %997 : f32 to vector<3x8x8xf32>
    %999 = arith.addf %936, %998 : vector<3x8x8xf32>
    %cst_567 = arith.constant 0.000000e+00 : f32
    %1000 = vector.broadcast %cst_567 : f32 to vector<3x8x8xf32>
    %1001 = arith.maximumf %999, %1000 : vector<3x8x8xf32>
    %c0_568 = arith.constant 0 : index
    %c7_569 = arith.constant 7 : index
    %c0_570 = arith.constant 0 : index
    %c0_571 = arith.constant 0 : index
    %1002 = vector.load %arg4[%c0_568, %c7_569, %c0_570, %c0_571] : memref<3x9x8x8xf32, #tpu.memory_space<vmem>>, vector<3x1x8x8xf32>
    %1003 = vector.shape_cast %1002 : vector<3x1x8x8xf32> to vector<3x8x8xf32>
    %1004 = vector.shape_cast %1001 : vector<3x8x8xf32> to vector<3x1x8x8xf32>
    tpu.vector_store %arg4[%c0_568, %c7_569, %c0_570, %c0_571], %1004 {strides = array<i32>} : memref<3x9x8x8xf32, #tpu.memory_space<vmem>>, vector<3x1x8x8xf32>,
    %c8_572 = arith.constant 8 : index
    %1005 = memref.load %arg3[%c8_572] : memref<9xf32, #tpu.memory_space<smem>>
    %1006 = vector.broadcast %1005 : f32 to vector<3x8x8xf32>
    %1007 = arith.addf %940, %1006 : vector<3x8x8xf32>
    %cst_573 = arith.constant 0.000000e+00 : f32
    %1008 = vector.broadcast %cst_573 : f32 to vector<3x8x8xf32>
    %1009 = arith.maximumf %1007, %1008 : vector<3x8x8xf32>
    %c0_574 = arith.constant 0 : index
    %c8_575 = arith.constant 8 : index
    %c0_576 = arith.constant 0 : index
    %c0_577 = arith.constant 0 : index
    %1010 = vector.load %arg4[%c0_574, %c8_575, %c0_576, %c0_577] : memref<3x9x8x8xf32, #tpu.memory_space<vmem>>, vector<3x1x8x8xf32>
    %1011 = vector.shape_cast %1010 : vector<3x1x8x8xf32> to vector<3x8x8xf32>
    %1012 = vector.shape_cast %1009 : vector<3x8x8xf32> to vector<3x1x8x8xf32>
    tpu.vector_store %arg4[%c0_574, %c8_575, %c0_576, %c0_577], %1012 {strides = array<i32>} : memref<3x9x8x8xf32, #tpu.memory_space<vmem>>, vector<3x1x8x8xf32>,
    return
  }
  func.func @transform_0(%arg0: i32) -> (i32, i32, i32, i32) {
    %c0_i32 = arith.constant 0 : i32
    %c0_i32_0 = arith.constant 0 : i32
    %c0_i32_1 = arith.constant 0 : i32
    %c0_i32_2 = arith.constant 0 : i32
    return %arg0, %c0_i32, %c0_i32_0, %c0_i32_1 : i32, i32, i32, i32
  }
  func.func @transform_1(%arg0: i32) -> (i32, i32) {
    %c0_i32 = arith.constant 0 : i32
    %c0_i32_0 = arith.constant 0 : i32
    %c0_i32_1 = arith.constant 0 : i32
    return %c0_i32, %c0_i32_0 : i32, i32
  }
  func.func @transform_2(%arg0: i32) -> i32 {
    %c0_i32 = arith.constant 0 : i32
    %c0_i32_0 = arith.constant 0 : i32
    return %c0_i32 : i32
  }
  func.func @transform_3(%arg0: i32) -> (i32, i32, i32, i32) {
    %c0_i32 = arith.constant 0 : i32
    %c0_i32_0 = arith.constant 0 : i32
    %c0_i32_1 = arith.constant 0 : i32
    %c0_i32_2 = arith.constant 0 : i32
    return %arg0, %c0_i32, %c0_i32_0, %c0_i32_1 : i32, i32, i32, i32
  }
}

</mosaic_0001>

<llo_original>
// kernel: tpu_custom_call.1
$region0: #{tpu_custom_call.1}
  #allocation0 [shape = 'u32[]', space=smem, size = 0x4, offset = 0x4, fixed_abs, tag = 'smem constant byte address 0x4 - core index']
  #allocation1 [shape = 'u32[144,128]{1,0:T(1,128)}', space=vmem, size = 0x12000, scoped, tag = 'internal scratch']
  %s0 = inlined_call_operand.vmem [shape: f32[6,4,10,10], index: 0, kind: input, shape index: {}]
  %s1 = inlined_call_operand.vmem [shape: f32[9,25], index: 1, kind: input, shape index: {}]
  %s2 = inlined_call_operand.vmem [shape: f32[9], index: 2, kind: input, shape index: {}]
  %s3 = inlined_call_operand.vmem [shape: f32[6,9,8,8], index: 3, kind: output, shape index: {}]
  %s4 = sld [smem:[#allocation0]]
  $region53: #{tpu_custom_call.1} parent=0
    _
  %s6 = ssub.s32 1, %s4
  %s7 = scalar_select 0, %s6, %s4
  $region1: #{tpu_custom_call.1} parent=0
    #allocation2 [shape = 'u8[8192]{0}', space=smem, size = 0x2000, scoped, tag = 'input window, operand 1, single buffered']
    #allocation3 [shape = 's32[2]{0}', space=sflag, size = 0x8, scoped, tag = 'scoped memory for tpu_custom_call.1']
    #allocation4 [shape = 'u8[512]{0}', space=smem, size = 0x200, scoped, tag = 'input window, operand 2, single buffered']
    #allocation5 [shape = 's32[1]{0}', space=sflag, size = 0x4, scoped, tag = 'scoped memory for tpu_custom_call.1']
    %8 = vsyncpa [#allocation3], 0
    %9 = vsyncpa [#allocation5], 0
    loop: start=0, step=1, limit=4
    $region2: #{tpu_custom_call.1} parent=1 // loop_pre_header
      _
    $region3: #{tpu_custom_call.1} parent=1 // loop_header
      %s11 = sphi 0, %s15
      %p12 = scmp.ge.s32.totalorder %s11, 4
      %s21 = sphi 0, %s23
      %s24 = sphi 0, %s21
      %s25 = sphi 0, %s24
      %s41 = sphi 0, %s25
      %s45 = sphi 0, %s45
      %s47 = sphi 0, %s45
      %s48 = sphi 0, %s47
      %s62 = sphi 0, %s48
      %s66 = sphi 0, %s66
      %s68 = sphi 0, %s66
      %s69 = sphi 0, %s68
      %s83 = sphi 0, %s69
      %s89 = sphi 0, %s91
      %s92 = sphi 0, %s89
      %s93 = sphi 0, %s92
      %s109 = sphi 0, %s93
    $region4: #{tpu_custom_call.1} parent=1 // loop_header_branch
      %14 = sbr.rel (%p12) target = $region8
    $region5: #{tpu_custom_call.1} parent=1 // loop_body
      %s16 = ssub.s32 %s11, 1
      %s17 = ssub.s32 %s11, 2
      %s18 = sadd.s32 %s11, 1
      %s19 = ssub.s32 %s11, %s18
      %p20 = scmp.eq.s32.totalorder %s19, 0
      %s22 = sadd.s32 %s21, 1
      %s23 = scalar_select %p20, %s21, %s22
      %p26 = pneg %p20
      %p27 = scmp.eq.s32.totalorder %s11, 1
      %p28 = por %p26, %p27
      %p29 = scmp.ne.s32.totalorder %s21, %s24
      %p30 = scmp.eq.s32.totalorder %s11, 0
      %p31 = por %p29, %p30
      %p32 = scmp.ne.s32.totalorder %s21, %s24
      %p33 = scmp.eq.s32.totalorder %s16, 1
      %p34 = por %p32, %p33
      %p35 = scmp.ne.s32.totalorder %s24, %s25
      %p36 = scmp.eq.s32.totalorder %s16, 0
      %p37 = por %p35, %p36
      %p38 = scmp.ne.s32.totalorder %s24, %s25
      %p39 = scmp.eq.s32.totalorder %s17, 1
      %p40 = por %p38, %p39
      %p42 = scmp.ne.s32.totalorder %s25, %s41
      %p43 = scmp.eq.s32.totalorder %s17, 0
      %p44 = por %p42, %p43
      %s46 = sadd.s32 %s45, 1
      %p49 = scmp.eq.s32.totalorder %s11, 1
      %p50 = scmp.ne.s32.totalorder %s45, %s47
      %p51 = scmp.eq.s32.totalorder %s11, 0
      %p52 = por %p50, %p51
      %p53 = scmp.ne.s32.totalorder %s45, %s47
      %p54 = scmp.eq.s32.totalorder %s16, 1
      %p55 = por %p53, %p54
      %p56 = scmp.ne.s32.totalorder %s47, %s48
      %p57 = scmp.eq.s32.totalorder %s16, 0
      %p58 = por %p56, %p57
      %p59 = scmp.ne.s32.totalorder %s47, %s48
      %p60 = scmp.eq.s32.totalorder %s17, 1
      %p61 = por %p59, %p60
      %p63 = scmp.ne.s32.totalorder %s48, %s62
      %p64 = scmp.eq.s32.totalorder %s17, 0
      %p65 = por %p63, %p64
      %s67 = sadd.s32 %s66, 1
      %p70 = scmp.eq.s32.totalorder %s11, 1
      %p71 = scmp.ne.s32.totalorder %s66, %s68
      %p72 = scmp.eq.s32.totalorder %s11, 0
      %p73 = por %p71, %p72
      %p74 = scmp.ne.s32.totalorder %s66, %s68
      %p75 = scmp.eq.s32.totalorder %s16, 1
      %p76 = por %p74, %p75
      %p77 = scmp.ne.s32.totalorder %s68, %s69
      %p78 = scmp.eq.s32.totalorder %s16, 0
      %p79 = por %p77, %p78
      %p80 = scmp.ne.s32.totalorder %s68, %s69
      %p81 = scmp.eq.s32.totalorder %s17, 1
      %p82 = por %p80, %p81
      %p84 = scmp.ne.s32.totalorder %s69, %s83
      %p85 = scmp.eq.s32.totalorder %s17, 0
      %p86 = por %p84, %p85
      %s87 = ssub.s32 %s11, %s18
      %p88 = scmp.eq.s32.totalorder %s87, 0
      %s90 = sadd.s32 %s89, 1
      %s91 = scalar_select %p88, %s89, %s90
      %p94 = pneg %p88
      %p95 = scmp.eq.s32.totalorder %s11, 1
      %p96 = por %p94, %p95
      %p97 = scmp.ne.s32.totalorder %s89, %s92
      %p98 = scmp.eq.s32.totalorder %s11, 0
      %p99 = por %p97, %p98
      %p100 = scmp.ne.s32.totalorder %s89, %s92
      %p101 = scmp.eq.s32.totalorder %s16, 1
      %p102 = por %p100, %p101
      %p103 = scmp.ne.s32.totalorder %s92, %s93
      %p104 = scmp.eq.s32.totalorder %s16, 0
      %p105 = por %p103, %p104
      %p106 = scmp.ne.s32.totalorder %s92, %s93
      %p107 = scmp.eq.s32.totalorder %s17, 1
      %p108 = por %p106, %p107
      %p110 = scmp.ne.s32.totalorder %s93, %s109
      %p111 = scmp.eq.s32.totalorder %s17, 0
      %p112 = por %p110, %p111
      %p113 = scmp.le.s32.totalorder 1, %s11
      %p114 = scmp.lt.s32.totalorder %s11, 3
      %p115 = pnand %p113, %p114
      %p116 = pneg %p115
      // Predicated region
      $region9: #{tpu_custom_call.1} parent=5 // pred_check
        _
      $region10: #{tpu_custom_call.1} parent=5 // pred_check_branch
        %118 = sbr.rel (%p115) target = $region12
      $region11: #{tpu_custom_call.1} parent=5 // pred_region
        %s119 = ssub.s32 %s11, 1
        // Predicated region
        $region13: #{tpu_custom_call.1} parent=11 // pred_check
          %p120 = pneg %p58
        $region14: #{tpu_custom_call.1} parent=11 // pred_check_branch
          %122 = sbr.rel (%p120) target = $region16
        $region15: #{tpu_custom_call.1} parent=11 // pred_region
          %s124 = ssub.s32 256, 256
          %125 = vsyncadd [#allocation3], %s124
          %s126 = sshll.u32 %s1, 4
          %s127 = int_to_ptr.vmem [resolvable:$true] %s126
          %132 = dma.vmem_to_smem %s127, 256, [#allocation2], [#allocation3], 128, 128, 8
        $region16: #{tpu_custom_call.1} parent=11 // pred_fallthru
          _
        // Predicated region
        $region17: #{tpu_custom_call.1} parent=11 // pred_check
          %p133 = pneg %p79
        $region18: #{tpu_custom_call.1} parent=11 // pred_check_branch
          %135 = sbr.rel (%p133) target = $region20
        $region19: #{tpu_custom_call.1} parent=11 // pred_region
          %s137 = ssub.s32 16, 16
          %138 = vsyncadd [#allocation5], %s137
          %s140 = sshll.u32 %s2, 4
          %s141 = int_to_ptr.vmem [resolvable:$true] %s140
          %143 = dma.vmem_to_smem %s141, 16, [#allocation4], [#allocation5]
        $region20: #{tpu_custom_call.1} parent=11 // pred_fallthru
          _
      $region12: #{tpu_custom_call.1} parent=5 // pred_fallthru
        _
      %p144 = scmp.lt.s32.totalorder %s11, 2
      // Predicated region
      $region21: #{tpu_custom_call.1} parent=5 // pred_check
        %p145 = pneg %p144
      $region22: #{tpu_custom_call.1} parent=5 // pred_check_branch
        %147 = sbr.rel (%p145) target = $region24
      $region23: #{tpu_custom_call.1} parent=5 // pred_region
        // Predicated region
        $region25: #{tpu_custom_call.1} parent=23 // pred_check
          %p148 = pneg %p31
        $region26: #{tpu_custom_call.1} parent=23 // pred_check_branch
          %150 = sbr.rel (%p148) target = $region28
        $region27: #{tpu_custom_call.1} parent=23 // pred_region
          %s151 = smul.u32 3, %s11
          %p152 = scmp.lt.s32.totalorder %s151, 5
          %s153 = scalar_select %p152, %s151, 5
          %s154 = smul.addr %s153, 8
          %s155 = smul.addr %s154, 8
          %s156 = scalar_lea.vmem %s0, %s155
          %s157 = smul.u32 3, %s11
        $region28: #{tpu_custom_call.1} parent=23 // pred_fallthru
          _
      $region24: #{tpu_custom_call.1} parent=5 // pred_fallthru
        _
      %p158 = scmp.le.s32.totalorder 1, %s11
      %p159 = scmp.lt.s32.totalorder %s11, 3
      %p160 = pnand %p158, %p159
      %p161 = pneg %p160
      // Predicated region
      $region29: #{tpu_custom_call.1} parent=5 // pred_check
        _
      $region30: #{tpu_custom_call.1} parent=5 // pred_check_branch
        %163 = sbr.rel (%p160) target = $region32
      $region31: #{tpu_custom_call.1} parent=5 // pred_region
        %s164 = ssub.s32 %s11, 1
        // Predicated region
        $region33: #{tpu_custom_call.1} parent=31 // pred_check
          %p165 = pneg %p58
        $region34: #{tpu_custom_call.1} parent=31 // pred_check_branch
          %167 = sbr.rel (%p165) target = $region36
        $region35: #{tpu_custom_call.1} parent=31 // pred_region
          %168 = dma.done [#allocation3], 256
        $region36: #{tpu_custom_call.1} parent=31 // pred_fallthru
          _
        // Predicated region
        $region37: #{tpu_custom_call.1} parent=31 // pred_check
          %p169 = pneg %p79
        $region38: #{tpu_custom_call.1} parent=31 // pred_check_branch
          %171 = sbr.rel (%p169) target = $region40
        $region39: #{tpu_custom_call.1} parent=31 // pred_region
          %172 = dma.done [#allocation5], 16
        $region40: #{tpu_custom_call.1} parent=31 // pred_fallthru
          _
        %173 = sfence
        %s174 = smul.u32 3, %s16
        %p175 = scmp.lt.s32.totalorder %s174, 5
        %s176 = scalar_select %p175, %s174, 5
        %s177 = smul.addr %s176, 8
        %s178 = smul.addr %s177, 8
        %s179 = scalar_lea.vmem %s0, %s178
        %p180 = pneg %p37
        %p181 = pneg %p34
        %p182 = pneg %p58
        %p183 = pneg %p55
        %p184 = pneg %p79
        %p185 = pneg %p76
        %p186 = pneg %p105
        %p187 = pneg %p102
        %s188 = smul.u32 3, %s16
        %p189 = scmp.lt.s32.totalorder %s188, 5
        %s190 = scalar_select %p189, %s188, 5
        %s191 = smul.addr %s190, 9
        %s192 = smul.addr %s191, 8
        %s193 = scalar_lea.vmem %s3, %s192
        %s194 = smul.u32 3, %s16
        %p195 = scmp.lt.s32.totalorder %s194, 5
        %s196 = scalar_select %p195, %s194, 5
        %s197 = smul.addr %s196, 8
        %s198 = smul.addr %s197, 8
        %s199 = scalar_lea.vmem %s0, %s198
        %s200 = smul.u32 3, %s16
        %s201 = smul.u32 3, %s16
        %p202 = scmp.lt.s32.totalorder %s201, 5
        %s203 = scalar_select %p202, %s201, 5
        %s204 = smul.addr %s203, 9
        %s205 = smul.addr %s204, 8
        %s206 = scalar_lea.vmem %s3, %s205
        %s207 = smul.u32 3, %s16
        %v208 = vld [vmem:[%s199] sm:$0xff]
        %v209 = vld [vmem:[%s199 + $0x40] sm:$0xff]
        %v210 = vld [vmem:[%s199 + $0x80] sm:$0xff]
        %s211 = sld [smem:[#allocation2]]
        %v212 = vstv %s211
        %v213 = vmul.f32 %v208, %v212
        %v214 = vmul.f32 %v209, %v212
        %v215 = vmul.f32 %v210, %v212
        %s216 = sld [smem:[#allocation2 + $0x80]]
        %v217 = vstv %s216
        %v218 = vmul.f32 %v208, %v217
        %v219 = vmul.f32 %v209, %v217
        %v220 = vmul.f32 %v210, %v217
        %s221 = sld [smem:[#allocation2 + $0x100]]
        %v222 = vstv %s221
        %v223 = vmul.f32 %v208, %v222
        %v224 = vmul.f32 %v209, %v222
        %v225 = vmul.f32 %v210, %v222
        %s226 = sld [smem:[#allocation2 + $0x180]]
        %v227 = vstv %s226
        %v228 = vmul.f32 %v208, %v227
        %v229 = vmul.f32 %v209, %v227
        %v230 = vmul.f32 %v210, %v227
        %s231 = sld [smem:[#allocation2 + $0x200]]
        %v232 = vstv %s231
        %v233 = vmul.f32 %v208, %v232
        %v234 = vmul.f32 %v209, %v232
        %v235 = vmul.f32 %v210, %v232
        %s236 = sld [smem:[#allocation2 + $0x280]]
        %v237 = vstv %s236
        %v238 = vmul.f32 %v208, %v237
        %v239 = vmul.f32 %v209, %v237
        %v240 = vmul.f32 %v210, %v237
        %s241 = sld [smem:[#allocation2 + $0x300]]
        %v242 = vstv %s241
        %v243 = vmul.f32 %v208, %v242
        %v244 = vmul.f32 %v209, %v242
        %v245 = vmul.f32 %v210, %v242
        %s246 = sld [smem:[#allocation2 + $0x380]]
        %v247 = vstv %s246
        %v248 = vmul.f32 %v208, %v247
        %v249 = vmul.f32 %v209, %v247
        %v250 = vmul.f32 %v210, %v247
        %s251 = sld [smem:[#allocation2 + $0x400]]
        %v252 = vstv %s251
        %v253 = vmul.f32 %v208, %v252
        %v254 = vmul.f32 %v209, %v252
        %v255 = vmul.f32 %v210, %v252
        %s256 = scalar_lea.vmem %s199, 16
        %v257 = vld [vmem:[%s256] sm:$0xff]
        %v258 = vld [vmem:[%s256 + $0x40] sm:$0xff]
        %v259 = vld [vmem:[%s256 + $0x80] sm:$0xff]
        %s260 = sld [smem:[#allocation2 + $0x1]]
        %v261 = vstv %s260
        %v262 = vmul.f32 %v257, %v261
        %v263 = vmul.f32 %v258, %v261
        %v264 = vmul.f32 %v259, %v261
        %v265 = vadd.f32 %v213, %v262
        %v266 = vadd.f32 %v214, %v263
        %v267 = vadd.f32 %v215, %v264
        %s268 = sld [smem:[#allocation2 + $0x81]]
        %v269 = vstv %s268
        %v270 = vmul.f32 %v257, %v269
        %v271 = vmul.f32 %v258, %v269
        %v272 = vmul.f32 %v259, %v269
        %v273 = vadd.f32 %v218, %v270
        %v274 = vadd.f32 %v219, %v271
        %v275 = vadd.f32 %v220, %v272
        %s276 = sld [smem:[#allocation2 + $0x101]]
        %v277 = vstv %s276
        %v278 = vmul.f32 %v257, %v277
        %v279 = vmul.f32 %v258, %v277
        %v280 = vmul.f32 %v259, %v277
        %v281 = vadd.f32 %v223, %v278
        %v282 = vadd.f32 %v224, %v279
        %v283 = vadd.f32 %v225, %v280
        %s284 = sld [smem:[#allocation2 + $0x181]]
        %v285 = vstv %s284
        %v286 = vmul.f32 %v257, %v285
        %v287 = vmul.f32 %v258, %v285
        %v288 = vmul.f32 %v259, %v285
        %v289 = vadd.f32 %v228, %v286
        %v290 = vadd.f32 %v229, %v287
        %v291 = vadd.f32 %v230, %v288
        %s292 = sld [smem:[#allocation2 + $0x201]]
        %v293 = vstv %s292
        %v294 = vmul.f32 %v257, %v293
        %v295 = vmul.f32 %v258, %v293
        %v296 = vmul.f32 %v259, %v293
        %v297 = vadd.f32 %v233, %v294
        %v298 = vadd.f32 %v234, %v295
        %v299 = vadd.f32 %v235, %v296
        %s300 = sld [smem:[#allocation2 + $0x281]]
        %v301 = vstv %s300
        %v302 = vmul.f32 %v257, %v301
        %v303 = vmul.f32 %v258, %v301
        %v304 = vmul.f32 %v259, %v301
        %v305 = vadd.f32 %v238, %v302
        %v306 = vadd.f32 %v239, %v303
        %v307 = vadd.f32 %v240, %v304
        %s308 = sld [smem:[#allocation2 + $0x301]]
        %v309 = vstv %s308
        %v310 = vmul.f32 %v257, %v309
        %v311 = vmul.f32 %v258, %v309
        %v312 = vmul.f32 %v259, %v309
        %v313 = vadd.f32 %v243, %v310
        %v314 = vadd.f32 %v244, %v311
        %v315 = vadd.f32 %v245, %v312
        %s316 = sld [smem:[#allocation2 + $0x381]]
        %v317 = vstv %s316
        %v318 = vmul.f32 %v257, %v317
        %v319 = vmul.f32 %v258, %v317
        %v320 = vmul.f32 %v259, %v317
        %v321 = vadd.f32 %v248, %v318
        %v322 = vadd.f32 %v249, %v319
        %v323 = vadd.f32 %v250, %v320
        %s324 = sld [smem:[#allocation2 + $0x401]]
        %v325 = vstv %s324
        %v326 = vmul.f32 %v257, %v325
        %v327 = vmul.f32 %v258, %v325
        %v328 = vmul.f32 %v259, %v325
        %v329 = vadd.f32 %v253, %v326
        %v330 = vadd.f32 %v254, %v327
        %v331 = vadd.f32 %v255, %v328
        %s332 = sld [smem:[#allocation2 + $0x2]]
        %v333 = vstv %s332
        %v334 = vmul.f32 %v208, %v333
        %v335 = vmul.f32 %v209, %v333
        %v336 = vmul.f32 %v210, %v333
        %340 = vrot.lane.b32.xlu0 %v334, 127
        %v341 = vpop.permute.xlu0 %340
        %342 = vrot.lane.b32.xlu0 %v335, 127
        %v343 = vpop.permute.xlu0 %342
        %344 = vrot.lane.b32.xlu0 %v336, 127
        %v345 = vpop.permute.xlu0 %344
        %v349 = vadd.f32 %v265, %v341
        %v350 = vadd.f32 %v266, %v343
        %v351 = vadd.f32 %v267, %v345
        %s352 = sld [smem:[#allocation2 + $0x82]]
        %v353 = vstv %s352
        %v354 = vmul.f32 %v208, %v353
        %v355 = vmul.f32 %v209, %v353
        %v356 = vmul.f32 %v210, %v353
        %360 = vrot.lane.b32.xlu0 %v354, 127
        %v361 = vpop.permute.xlu0 %360
        %362 = vrot.lane.b32.xlu0 %v355, 127
        %v363 = vpop.permute.xlu0 %362
        %364 = vrot.lane.b32.xlu0 %v356, 127
        %v365 = vpop.permute.xlu0 %364
        %v369 = vadd.f32 %v273, %v361
        %v370 = vadd.f32 %v274, %v363
        %v371 = vadd.f32 %v275, %v365
        %s372 = sld [smem:[#allocation2 + $0x102]]
        %v373 = vstv %s372
        %v374 = vmul.f32 %v208, %v373
        %v375 = vmul.f32 %v209, %v373
        %v376 = vmul.f32 %v210, %v373
        %380 = vrot.lane.b32.xlu0 %v374, 127
        %v381 = vpop.permute.xlu0 %380
        %382 = vrot.lane.b32.xlu0 %v375, 127
        %v383 = vpop.permute.xlu0 %382
        %384 = vrot.lane.b32.xlu0 %v376, 127
        %v385 = vpop.permute.xlu0 %384
        %v389 = vadd.f32 %v281, %v381
        %v390 = vadd.f32 %v282, %v383
        %v391 = vadd.f32 %v283, %v385
        %s392 = sld [smem:[#allocation2 + $0x182]]
        %v393 = vstv %s392
        %v394 = vmul.f32 %v208, %v393
        %v395 = vmul.f32 %v209, %v393
        %v396 = vmul.f32 %v210, %v393
        %400 = vrot.lane.b32.xlu0 %v394, 127
        %v401 = vpop.permute.xlu0 %400
        %402 = vrot.lane.b32.xlu0 %v395, 127
        %v403 = vpop.permute.xlu0 %402
        %404 = vrot.lane.b32.xlu0 %v396, 127
        %v405 = vpop.permute.xlu0 %404
        %v409 = vadd.f32 %v289, %v401
        %v410 = vadd.f32 %v290, %v403
        %v411 = vadd.f32 %v291, %v405
        %s412 = sld [smem:[#allocation2 + $0x202]]
        %v413 = vstv %s412
        %v414 = vmul.f32 %v208, %v413
        %v415 = vmul.f32 %v209, %v413
        %v416 = vmul.f32 %v210, %v413
        %420 = vrot.lane.b32.xlu0 %v414, 127
        %v421 = vpop.permute.xlu0 %420
        %422 = vrot.lane.b32.xlu0 %v415, 127
        %v423 = vpop.permute.xlu0 %422
        %424 = vrot.lane.b32.xlu0 %v416, 127
        %v425 = vpop.permute.xlu0 %424
        %v429 = vadd.f32 %v297, %v421
        %v430 = vadd.f32 %v298, %v423
        %v431 = vadd.f32 %v299, %v425
        %s432 = sld [smem:[#allocation2 + $0x282]]
        %v433 = vstv %s432
        %v434 = vmul.f32 %v208, %v433
        %v435 = vmul.f32 %v209, %v433
        %v436 = vmul.f32 %v210, %v433
        %440 = vrot.lane.b32.xlu0 %v434, 127
        %v441 = vpop.permute.xlu0 %440
        %442 = vrot.lane.b32.xlu0 %v435, 127
        %v443 = vpop.permute.xlu0 %442
        %444 = vrot.lane.b32.xlu0 %v436, 127
        %v445 = vpop.permute.xlu0 %444
        %v449 = vadd.f32 %v305, %v441
        %v450 = vadd.f32 %v306, %v443
        %v451 = vadd.f32 %v307, %v445
        %s452 = sld [smem:[#allocation2 + $0x302]]
        %v453 = vstv %s452
        %v454 = vmul.f32 %v208, %v453
        %v455 = vmul.f32 %v209, %v453
        %v456 = vmul.f32 %v210, %v453
        %460 = vrot.lane.b32.xlu0 %v454, 127
        %v461 = vpop.permute.xlu0 %460
        %462 = vrot.lane.b32.xlu0 %v455, 127
        %v463 = vpop.permute.xlu0 %462
        %464 = vrot.lane.b32.xlu0 %v456, 127
        %v465 = vpop.permute.xlu0 %464
        %v469 = vadd.f32 %v313, %v461
        %v470 = vadd.f32 %v314, %v463
        %v471 = vadd.f32 %v315, %v465
        %s472 = sld [smem:[#allocation2 + $0x382]]
        %v473 = vstv %s472
        %v474 = vmul.f32 %v208, %v473
        %v475 = vmul.f32 %v209, %v473
        %v476 = vmul.f32 %v210, %v473
        %480 = vrot.lane.b32.xlu0 %v474, 127
        %v481 = vpop.permute.xlu0 %480
        %482 = vrot.lane.b32.xlu0 %v475, 127
        %v483 = vpop.permute.xlu0 %482
        %484 = vrot.lane.b32.xlu0 %v476, 127
        %v485 = vpop.permute.xlu0 %484
        %v489 = vadd.f32 %v321, %v481
        %v490 = vadd.f32 %v322, %v483
        %v491 = vadd.f32 %v323, %v485
        %s492 = sld [smem:[#allocation2 + $0x402]]
        %v493 = vstv %s492
        %v494 = vmul.f32 %v208, %v493
        %v495 = vmul.f32 %v209, %v493
        %v496 = vmul.f32 %v210, %v493
        %500 = vrot.lane.b32.xlu0 %v494, 127
        %v501 = vpop.permute.xlu0 %500
        %502 = vrot.lane.b32.xlu0 %v495, 127
        %v503 = vpop.permute.xlu0 %502
        %504 = vrot.lane.b32.xlu0 %v496, 127
        %v505 = vpop.permute.xlu0 %504
        %v509 = vadd.f32 %v329, %v501
        %v510 = vadd.f32 %v330, %v503
        %v511 = vadd.f32 %v331, %v505
        %s512 = sld [smem:[#allocation2 + $0x3]]
        %v513 = vstv %s512
        %v514 = vmul.f32 %v257, %v513
        %v515 = vmul.f32 %v258, %v513
        %v516 = vmul.f32 %v259, %v513
        %520 = vrot.lane.b32.xlu0 %v514, 127
        %v521 = vpop.permute.xlu0 %520
        %522 = vrot.lane.b32.xlu0 %v515, 127
        %v523 = vpop.permute.xlu0 %522
        %524 = vrot.lane.b32.xlu0 %v516, 127
        %v525 = vpop.permute.xlu0 %524
        %v529 = vadd.f32 %v349, %v521
        %v530 = vadd.f32 %v350, %v523
        %v531 = vadd.f32 %v351, %v525
        %s532 = sld [smem:[#allocation2 + $0x83]]
        %v533 = vstv %s532
        %v534 = vmul.f32 %v257, %v533
        %v535 = vmul.f32 %v258, %v533
        %v536 = vmul.f32 %v259, %v533
        %540 = vrot.lane.b32.xlu0 %v534, 127
        %v541 = vpop.permute.xlu0 %540
        %542 = vrot.lane.b32.xlu0 %v535, 127
        %v543 = vpop.permute.xlu0 %542
        %544 = vrot.lane.b32.xlu0 %v536, 127
        %v545 = vpop.permute.xlu0 %544
        %v549 = vadd.f32 %v369, %v541
        %v550 = vadd.f32 %v370, %v543
        %v551 = vadd.f32 %v371, %v545
        %s552 = sld [smem:[#allocation2 + $0x103]]
        %v553 = vstv %s552
        %v554 = vmul.f32 %v257, %v553
        %v555 = vmul.f32 %v258, %v553
        %v556 = vmul.f32 %v259, %v553
        %560 = vrot.lane.b32.xlu0 %v554, 127
        %v561 = vpop.permute.xlu0 %560
        %562 = vrot.lane.b32.xlu0 %v555, 127
        %v563 = vpop.permute.xlu0 %562
        %564 = vrot.lane.b32.xlu0 %v556, 127
        %v565 = vpop.permute.xlu0 %564
        %v569 = vadd.f32 %v389, %v561
        %v570 = vadd.f32 %v390, %v563
        %v571 = vadd.f32 %v391, %v565
        %s572 = sld [smem:[#allocation2 + $0x183]]
        %v573 = vstv %s572
        %v574 = vmul.f32 %v257, %v573
        %v575 = vmul.f32 %v258, %v573
        %v576 = vmul.f32 %v259, %v573
        %580 = vrot.lane.b32.xlu0 %v574, 127
        %v581 = vpop.permute.xlu0 %580
        %582 = vrot.lane.b32.xlu0 %v575, 127
        %v583 = vpop.permute.xlu0 %582
        %584 = vrot.lane.b32.xlu0 %v576, 127
        %v585 = vpop.permute.xlu0 %584
        %v589 = vadd.f32 %v409, %v581
        %v590 = vadd.f32 %v410, %v583
        %v591 = vadd.f32 %v411, %v585
        %s592 = sld [smem:[#allocation2 + $0x203]]
        %v593 = vstv %s592
        %v594 = vmul.f32 %v257, %v593
        %v595 = vmul.f32 %v258, %v593
        %v596 = vmul.f32 %v259, %v593
        %600 = vrot.lane.b32.xlu0 %v594, 127
        %v601 = vpop.permute.xlu0 %600
        %602 = vrot.lane.b32.xlu0 %v595, 127
        %v603 = vpop.permute.xlu0 %602
        %604 = vrot.lane.b32.xlu0 %v596, 127
        %v605 = vpop.permute.xlu0 %604
        %v609 = vadd.f32 %v429, %v601
        %v610 = vadd.f32 %v430, %v603
        %v611 = vadd.f32 %v431, %v605
        %s612 = sld [smem:[#allocation2 + $0x283]]
        %v613 = vstv %s612
        %v614 = vmul.f32 %v257, %v613
        %v615 = vmul.f32 %v258, %v613
        %v616 = vmul.f32 %v259, %v613
        %620 = vrot.lane.b32.xlu0 %v614, 127
        %v621 = vpop.permute.xlu0 %620
        %622 = vrot.lane.b32.xlu0 %v615, 127
        %v623 = vpop.permute.xlu0 %622
        %624 = vrot.lane.b32.xlu0 %v616, 127
        %v625 = vpop.permute.xlu0 %624
        %v629 = vadd.f32 %v449, %v621
        %v630 = vadd.f32 %v450, %v623
        %v631 = vadd.f32 %v451, %v625
        %s632 = sld [smem:[#allocation2 + $0x303]]
        %v633 = vstv %s632
        %v634 = vmul.f32 %v257, %v633
        %v635 = vmul.f32 %v258, %v633
        %v636 = vmul.f32 %v259, %v633
        %640 = vrot.lane.b32.xlu0 %v634, 127
        %v641 = vpop.permute.xlu0 %640
        %642 = vrot.lane.b32.xlu0 %v635, 127
        %v643 = vpop.permute.xlu0 %642
        %644 = vrot.lane.b32.xlu0 %v636, 127
        %v645 = vpop.permute.xlu0 %644
        %v649 = vadd.f32 %v469, %v641
        %v650 = vadd.f32 %v470, %v643
        %v651 = vadd.f32 %v471, %v645
        %s652 = sld [smem:[#allocation2 + $0x383]]
        %v653 = vstv %s652
        %v654 = vmul.f32 %v257, %v653
        %v655 = vmul.f32 %v258, %v653
        %v656 = vmul.f32 %v259, %v653
        %660 = vrot.lane.b32.xlu0 %v654, 127
        %v661 = vpop.permute.xlu0 %660
        %662 = vrot.lane.b32.xlu0 %v655, 127
        %v663 = vpop.permute.xlu0 %662
        %664 = vrot.lane.b32.xlu0 %v656, 127
        %v665 = vpop.permute.xlu0 %664
        %v669 = vadd.f32 %v489, %v661
        %v670 = vadd.f32 %v490, %v663
        %v671 = vadd.f32 %v491, %v665
        %s672 = sld [smem:[#allocation2 + $0x403]]
        %v673 = vstv %s672
        %v674 = vmul.f32 %v257, %v673
        %v675 = vmul.f32 %v258, %v673
        %v676 = vmul.f32 %v259, %v673
        %680 = vrot.lane.b32.xlu0 %v674, 127
        %v681 = vpop.permute.xlu0 %680
        %682 = vrot.lane.b32.xlu0 %v675, 127
        %v683 = vpop.permute.xlu0 %682
        %684 = vrot.lane.b32.xlu0 %v676, 127
        %v685 = vpop.permute.xlu0 %684
        %v689 = vadd.f32 %v509, %v681
        %v690 = vadd.f32 %v510, %v683
        %v691 = vadd.f32 %v511, %v685
        %s692 = sld [smem:[#allocation2 + $0x4]]
        %v693 = vstv %s692
        %v694 = vmul.f32 %v208, %v693
        %v695 = vmul.f32 %v209, %v693
        %v696 = vmul.f32 %v210, %v693
        %700 = vrot.lane.b32.xlu0 %v694, 126
        %v701 = vpop.permute.xlu0 %700
        %702 = vrot.lane.b32.xlu0 %v695, 126
        %v703 = vpop.permute.xlu0 %702
        %704 = vrot.lane.b32.xlu0 %v696, 126
        %v705 = vpop.permute.xlu0 %704
        %v709 = vadd.f32 %v529, %v701
        %v710 = vadd.f32 %v530, %v703
        %v711 = vadd.f32 %v531, %v705
        %s712 = sld [smem:[#allocation2 + $0x84]]
        %v713 = vstv %s712
        %v714 = vmul.f32 %v208, %v713
        %v715 = vmul.f32 %v209, %v713
        %v716 = vmul.f32 %v210, %v713
        %720 = vrot.lane.b32.xlu0 %v714, 126
        %v721 = vpop.permute.xlu0 %720
        %722 = vrot.lane.b32.xlu0 %v715, 126
        %v723 = vpop.permute.xlu0 %722
        %724 = vrot.lane.b32.xlu0 %v716, 126
        %v725 = vpop.permute.xlu0 %724
        %v729 = vadd.f32 %v549, %v721
        %v730 = vadd.f32 %v550, %v723
        %v731 = vadd.f32 %v551, %v725
        %s732 = sld [smem:[#allocation2 + $0x104]]
        %v733 = vstv %s732
        %v734 = vmul.f32 %v208, %v733
        %v735 = vmul.f32 %v209, %v733
        %v736 = vmul.f32 %v210, %v733
        %740 = vrot.lane.b32.xlu0 %v734, 126
        %v741 = vpop.permute.xlu0 %740
        %742 = vrot.lane.b32.xlu0 %v735, 126
        %v743 = vpop.permute.xlu0 %742
        %744 = vrot.lane.b32.xlu0 %v736, 126
        %v745 = vpop.permute.xlu0 %744
        %v749 = vadd.f32 %v569, %v741
        %v750 = vadd.f32 %v570, %v743
        %v751 = vadd.f32 %v571, %v745
        %s752 = sld [smem:[#allocation2 + $0x184]]
        %v753 = vstv %s752
        %v754 = vmul.f32 %v208, %v753
        %v755 = vmul.f32 %v209, %v753
        %v756 = vmul.f32 %v210, %v753
        %760 = vrot.lane.b32.xlu0 %v754, 126
        %v761 = vpop.permute.xlu0 %760
        %762 = vrot.lane.b32.xlu0 %v755, 126
        %v763 = vpop.permute.xlu0 %762
        %764 = vrot.lane.b32.xlu0 %v756, 126
        %v765 = vpop.permute.xlu0 %764
        %v769 = vadd.f32 %v589, %v761
        %v770 = vadd.f32 %v590, %v763
        %v771 = vadd.f32 %v591, %v765
        %s772 = sld [smem:[#allocation2 + $0x204]]
        %v773 = vstv %s772
        %v774 = vmul.f32 %v208, %v773
        %v775 = vmul.f32 %v209, %v773
        %v776 = vmul.f32 %v210, %v773
        %780 = vrot.lane.b32.xlu0 %v774, 126
        %v781 = vpop.permute.xlu0 %780
        %782 = vrot.lane.b32.xlu0 %v775, 126
        %v783 = vpop.permute.xlu0 %782
        %784 = vrot.lane.b32.xlu0 %v776, 126
        %v785 = vpop.permute.xlu0 %784
        %v789 = vadd.f32 %v609, %v781
        %v790 = vadd.f32 %v610, %v783
        %v791 = vadd.f32 %v611, %v785
        %s792 = sld [smem:[#allocation2 + $0x284]]
        %v793 = vstv %s792
        %v794 = vmul.f32 %v208, %v793
        %v795 = vmul.f32 %v209, %v793
        %v796 = vmul.f32 %v210, %v793
        %800 = vrot.lane.b32.xlu0 %v794, 126
        %v801 = vpop.permute.xlu0 %800
        %802 = vrot.lane.b32.xlu0 %v795, 126
        %v803 = vpop.permute.xlu0 %802
        %804 = vrot.lane.b32.xlu0 %v796, 126
        %v805 = vpop.permute.xlu0 %804
        %v809 = vadd.f32 %v629, %v801
        %v810 = vadd.f32 %v630, %v803
        %v811 = vadd.f32 %v631, %v805
        %s812 = sld [smem:[#allocation2 + $0x304]]
        %v813 = vstv %s812
        %v814 = vmul.f32 %v208, %v813
        %v815 = vmul.f32 %v209, %v813
        %v816 = vmul.f32 %v210, %v813
        %820 = vrot.lane.b32.xlu0 %v814, 126
        %v821 = vpop.permute.xlu0 %820
        %822 = vrot.lane.b32.xlu0 %v815, 126
        %v823 = vpop.permute.xlu0 %822
        %824 = vrot.lane.b32.xlu0 %v816, 126
        %v825 = vpop.permute.xlu0 %824
        %v829 = vadd.f32 %v649, %v821
        %v830 = vadd.f32 %v650, %v823
        %v831 = vadd.f32 %v651, %v825
        %s832 = sld [smem:[#allocation2 + $0x384]]
        %v833 = vstv %s832
        %v834 = vmul.f32 %v208, %v833
        %v835 = vmul.f32 %v209, %v833
        %v836 = vmul.f32 %v210, %v833
        %840 = vrot.lane.b32.xlu0 %v834, 126
        %v841 = vpop.permute.xlu0 %840
        %842 = vrot.lane.b32.xlu0 %v835, 126
        %v843 = vpop.permute.xlu0 %842
        %844 = vrot.lane.b32.xlu0 %v836, 126
        %v845 = vpop.permute.xlu0 %844
        %v849 = vadd.f32 %v669, %v841
        %v850 = vadd.f32 %v670, %v843
        %v851 = vadd.f32 %v671, %v845
        %s852 = sld [smem:[#allocation2 + $0x404]]
        %v853 = vstv %s852
        %v854 = vmul.f32 %v208, %v853
        %v855 = vmul.f32 %v209, %v853
        %v856 = vmul.f32 %v210, %v853
        %860 = vrot.lane.b32.xlu0 %v854, 126
        %v861 = vpop.permute.xlu0 %860
        %862 = vrot.lane.b32.xlu0 %v855, 126
        %v863 = vpop.permute.xlu0 %862
        %864 = vrot.lane.b32.xlu0 %v856, 126
        %v865 = vpop.permute.xlu0 %864
        %v869 = vadd.f32 %v689, %v861
        %v870 = vadd.f32 %v690, %v863
        %v871 = vadd.f32 %v691, %v865
        %s872 = scalar_lea.vmem %s199, 32
        %v873 = vld [vmem:[%s872] sm:$0xff]
        %v874 = vld [vmem:[%s872 + $0x40] sm:$0xff]
        %v875 = vld [vmem:[%s872 + $0x80] sm:$0xff]
        %s876 = sld [smem:[#allocation2 + $0x5]]
        %v877 = vstv %s876
        %v878 = vmul.f32 %v873, %v877
        %v879 = vmul.f32 %v874, %v877
        %v880 = vmul.f32 %v875, %v877
        %v881 = vadd.f32 %v709, %v878
        %v882 = vadd.f32 %v710, %v879
        %v883 = vadd.f32 %v711, %v880
        %s884 = sld [smem:[#allocation2 + $0x85]]
        %v885 = vstv %s884
        %v886 = vmul.f32 %v873, %v885
        %v887 = vmul.f32 %v874, %v885
        %v888 = vmul.f32 %v875, %v885
        %v889 = vadd.f32 %v729, %v886
        %v890 = vadd.f32 %v730, %v887
        %v891 = vadd.f32 %v731, %v888
        %s892 = sld [smem:[#allocation2 + $0x105]]
        %v893 = vstv %s892
        %v894 = vmul.f32 %v873, %v893
        %v895 = vmul.f32 %v874, %v893
        %v896 = vmul.f32 %v875, %v893
        %v897 = vadd.f32 %v749, %v894
        %v898 = vadd.f32 %v750, %v895
        %v899 = vadd.f32 %v751, %v896
        %s900 = sld [smem:[#allocation2 + $0x185]]
        %v901 = vstv %s900
        %v902 = vmul.f32 %v873, %v901
        %v903 = vmul.f32 %v874, %v901
        %v904 = vmul.f32 %v875, %v901
        %v905 = vadd.f32 %v769, %v902
        %v906 = vadd.f32 %v770, %v903
        %v907 = vadd.f32 %v771, %v904
        %s908 = sld [smem:[#allocation2 + $0x205]]
        %v909 = vstv %s908
        %v910 = vmul.f32 %v873, %v909
        %v911 = vmul.f32 %v874, %v909
        %v912 = vmul.f32 %v875, %v909
        %v913 = vadd.f32 %v789, %v910
        %v914 = vadd.f32 %v790, %v911
        %v915 = vadd.f32 %v791, %v912
        %s916 = sld [smem:[#allocation2 + $0x285]]
        %v917 = vstv %s916
        %v918 = vmul.f32 %v873, %v917
        %v919 = vmul.f32 %v874, %v917
        %v920 = vmul.f32 %v875, %v917
        %v921 = vadd.f32 %v809, %v918
        %v922 = vadd.f32 %v810, %v919
        %v923 = vadd.f32 %v811, %v920
        %s924 = sld [smem:[#allocation2 + $0x305]]
        %v925 = vstv %s924
        %v926 = vmul.f32 %v873, %v925
        %v927 = vmul.f32 %v874, %v925
        %v928 = vmul.f32 %v875, %v925
        %v929 = vadd.f32 %v829, %v926
        %v930 = vadd.f32 %v830, %v927
        %v931 = vadd.f32 %v831, %v928
        %s932 = sld [smem:[#allocation2 + $0x385]]
        %v933 = vstv %s932
        %v934 = vmul.f32 %v873, %v933
        %v935 = vmul.f32 %v874, %v933
        %v936 = vmul.f32 %v875, %v933
        %v937 = vadd.f32 %v849, %v934
        %v938 = vadd.f32 %v850, %v935
        %v939 = vadd.f32 %v851, %v936
        %s940 = sld [smem:[#allocation2 + $0x405]]
        %v941 = vstv %s940
        %v942 = vmul.f32 %v873, %v941
        %v943 = vmul.f32 %v874, %v941
        %v944 = vmul.f32 %v875, %v941
        %v945 = vadd.f32 %v869, %v942
        %v946 = vadd.f32 %v870, %v943
        %v947 = vadd.f32 %v871, %v944
        %s948 = scalar_lea.vmem %s199, 48
        %v949 = vld [vmem:[%s948] sm:$0xff]
        %v950 = vld [vmem:[%s948 + $0x40] sm:$0xff]
        %v951 = vld [vmem:[%s948 + $0x80] sm:$0xff]
        %s952 = sld [smem:[#allocation2 + $0x6]]
        %v953 = vstv %s952
        %v954 = vmul.f32 %v949, %v953
        %v955 = vmul.f32 %v950, %v953
        %v956 = vmul.f32 %v951, %v953
        %v957 = vadd.f32 %v881, %v954
        %v958 = vadd.f32 %v882, %v955
        %v959 = vadd.f32 %v883, %v956
        %s960 = sld [smem:[#allocation2 + $0x86]]
        %v961 = vstv %s960
        %v962 = vmul.f32 %v949, %v961
        %v963 = vmul.f32 %v950, %v961
        %v964 = vmul.f32 %v951, %v961
        %v965 = vadd.f32 %v889, %v962
        %v966 = vadd.f32 %v890, %v963
        %v967 = vadd.f32 %v891, %v964
        %s968 = sld [smem:[#allocation2 + $0x106]]
        %v969 = vstv %s968
        %v970 = vmul.f32 %v949, %v969
        %v971 = vmul.f32 %v950, %v969
        %v972 = vmul.f32 %v951, %v969
        %v973 = vadd.f32 %v897, %v970
        %v974 = vadd.f32 %v898, %v971
        %v975 = vadd.f32 %v899, %v972
        %s976 = sld [smem:[#allocation2 + $0x186]]
        %v977 = vstv %s976
        %v978 = vmul.f32 %v949, %v977
        %v979 = vmul.f32 %v950, %v977
        %v980 = vmul.f32 %v951, %v977
        %v981 = vadd.f32 %v905, %v978
        %v982 = vadd.f32 %v906, %v979
        %v983 = vadd.f32 %v907, %v980
        %s984 = sld [smem:[#allocation2 + $0x206]]
        %v985 = vstv %s984
        %v986 = vmul.f32 %v949, %v985
        %v987 = vmul.f32 %v950, %v985
        %v988 = vmul.f32 %v951, %v985
        %v989 = vadd.f32 %v913, %v986
        %v990 = vadd.f32 %v914, %v987
        %v991 = vadd.f32 %v915, %v988
        %s992 = sld [smem:[#allocation2 + $0x286]]
        %v993 = vstv %s992
        %v994 = vmul.f32 %v949, %v993
        %v995 = vmul.f32 %v950, %v993
        %v996 = vmul.f32 %v951, %v993
        %v997 = vadd.f32 %v921, %v994
        %v998 = vadd.f32 %v922, %v995
        %v999 = vadd.f32 %v923, %v996
        %s1000 = sld [smem:[#allocation2 + $0x306]]
        %v1001 = vstv %s1000
        %v1002 = vmul.f32 %v949, %v1001
        %v1003 = vmul.f32 %v950, %v1001
        %v1004 = vmul.f32 %v951, %v1001
        %v1005 = vadd.f32 %v929, %v1002
        %v1006 = vadd.f32 %v930, %v1003
        %v1007 = vadd.f32 %v931, %v1004
        %s1008 = sld [smem:[#allocation2 + $0x386]]
        %v1009 = vstv %s1008
        %v1010 = vmul.f32 %v949, %v1009
        %v1011 = vmul.f32 %v950, %v1009
        %v1012 = vmul.f32 %v951, %v1009
        %v1013 = vadd.f32 %v937, %v1010
        %v1014 = vadd.f32 %v938, %v1011
        %v1015 = vadd.f32 %v939, %v1012
        %s1016 = sld [smem:[#allocation2 + $0x406]]
        %v1017 = vstv %s1016
        %v1018 = vmul.f32 %v949, %v1017
        %v1019 = vmul.f32 %v950, %v1017
        %v1020 = vmul.f32 %v951, %v1017
        %v1021 = vadd.f32 %v945, %v1018
        %v1022 = vadd.f32 %v946, %v1019
        %v1023 = vadd.f32 %v947, %v1020
        %s1024 = sld [smem:[#allocation2 + $0x7]]
        %v1025 = vstv %s1024
        %v1026 = vmul.f32 %v873, %v1025
        %v1027 = vmul.f32 %v874, %v1025
        %v1028 = vmul.f32 %v875, %v1025
        %1032 = vrot.lane.b32.xlu0 %v1026, 127
        %v1033 = vpop.permute.xlu0 %1032
        %1034 = vrot.lane.b32.xlu0 %v1027, 127
        %v1035 = vpop.permute.xlu0 %1034
        %1036 = vrot.lane.b32.xlu0 %v1028, 127
        %v1037 = vpop.permute.xlu0 %1036
        %v1041 = vadd.f32 %v957, %v1033
        %v1042 = vadd.f32 %v958, %v1035
        %v1043 = vadd.f32 %v959, %v1037
        %s1044 = sld [smem:[#allocation2 + $0x87]]
        %v1045 = vstv %s1044
        %v1046 = vmul.f32 %v873, %v1045
        %v1047 = vmul.f32 %v874, %v1045
        %v1048 = vmul.f32 %v875, %v1045
        %1052 = vrot.lane.b32.xlu0 %v1046, 127
        %v1053 = vpop.permute.xlu0 %1052
        %1054 = vrot.lane.b32.xlu0 %v1047, 127
        %v1055 = vpop.permute.xlu0 %1054
        %1056 = vrot.lane.b32.xlu0 %v1048, 127
        %v1057 = vpop.permute.xlu0 %1056
        %v1061 = vadd.f32 %v965, %v1053
        %v1062 = vadd.f32 %v966, %v1055
        %v1063 = vadd.f32 %v967, %v1057
        %s1064 = sld [smem:[#allocation2 + $0x107]]
        %v1065 = vstv %s1064
        %v1066 = vmul.f32 %v873, %v1065
        %v1067 = vmul.f32 %v874, %v1065
        %v1068 = vmul.f32 %v875, %v1065
        %1072 = vrot.lane.b32.xlu0 %v1066, 127
        %v1073 = vpop.permute.xlu0 %1072
        %1074 = vrot.lane.b32.xlu0 %v1067, 127
        %v1075 = vpop.permute.xlu0 %1074
        %1076 = vrot.lane.b32.xlu0 %v1068, 127
        %v1077 = vpop.permute.xlu0 %1076
        %v1081 = vadd.f32 %v973, %v1073
        %v1082 = vadd.f32 %v974, %v1075
        %v1083 = vadd.f32 %v975, %v1077
        %s1084 = sld [smem:[#allocation2 + $0x187]]
        %v1085 = vstv %s1084
        %v1086 = vmul.f32 %v873, %v1085
        %v1087 = vmul.f32 %v874, %v1085
        %v1088 = vmul.f32 %v875, %v1085
        %1092 = vrot.lane.b32.xlu0 %v1086, 127
        %v1093 = vpop.permute.xlu0 %1092
        %1094 = vrot.lane.b32.xlu0 %v1087, 127
        %v1095 = vpop.permute.xlu0 %1094
        %1096 = vrot.lane.b32.xlu0 %v1088, 127
        %v1097 = vpop.permute.xlu0 %1096
        %v1101 = vadd.f32 %v981, %v1093
        %v1102 = vadd.f32 %v982, %v1095
        %v1103 = vadd.f32 %v983, %v1097
        %s1104 = sld [smem:[#allocation2 + $0x207]]
        %v1105 = vstv %s1104
        %v1106 = vmul.f32 %v873, %v1105
        %v1107 = vmul.f32 %v874, %v1105
        %v1108 = vmul.f32 %v875, %v1105
        %1112 = vrot.lane.b32.xlu0 %v1106, 127
        %v1113 = vpop.permute.xlu0 %1112
        %1114 = vrot.lane.b32.xlu0 %v1107, 127
        %v1115 = vpop.permute.xlu0 %1114
        %1116 = vrot.lane.b32.xlu0 %v1108, 127
        %v1117 = vpop.permute.xlu0 %1116
        %v1121 = vadd.f32 %v989, %v1113
        %v1122 = vadd.f32 %v990, %v1115
        %v1123 = vadd.f32 %v991, %v1117
        %s1124 = sld [smem:[#allocation2 + $0x287]]
        %v1125 = vstv %s1124
        %v1126 = vmul.f32 %v873, %v1125
        %v1127 = vmul.f32 %v874, %v1125
        %v1128 = vmul.f32 %v875, %v1125
        %1132 = vrot.lane.b32.xlu0 %v1126, 127
        %v1133 = vpop.permute.xlu0 %1132
        %1134 = vrot.lane.b32.xlu0 %v1127, 127
        %v1135 = vpop.permute.xlu0 %1134
        %1136 = vrot.lane.b32.xlu0 %v1128, 127
        %v1137 = vpop.permute.xlu0 %1136
        %v1141 = vadd.f32 %v997, %v1133
        %v1142 = vadd.f32 %v998, %v1135
        %v1143 = vadd.f32 %v999, %v1137
        %s1144 = sld [smem:[#allocation2 + $0x307]]
        %v1145 = vstv %s1144
        %v1146 = vmul.f32 %v873, %v1145
        %v1147 = vmul.f32 %v874, %v1145
        %v1148 = vmul.f32 %v875, %v1145
        %1152 = vrot.lane.b32.xlu0 %v1146, 127
        %v1153 = vpop.permute.xlu0 %1152
        %1154 = vrot.lane.b32.xlu0 %v1147, 127
        %v1155 = vpop.permute.xlu0 %1154
        %1156 = vrot.lane.b32.xlu0 %v1148, 127
        %v1157 = vpop.permute.xlu0 %1156
        %v1161 = vadd.f32 %v1005, %v1153
        %v1162 = vadd.f32 %v1006, %v1155
        %v1163 = vadd.f32 %v1007, %v1157
        %s1164 = sld [smem:[#allocation2 + $0x387]]
        %v1165 = vstv %s1164
        %v1166 = vmul.f32 %v873, %v1165
        %v1167 = vmul.f32 %v874, %v1165
        %v1168 = vmul.f32 %v875, %v1165
        %1172 = vrot.lane.b32.xlu0 %v1166, 127
        %v1173 = vpop.permute.xlu0 %1172
        %1174 = vrot.lane.b32.xlu0 %v1167, 127
        %v1175 = vpop.permute.xlu0 %1174
        %1176 = vrot.lane.b32.xlu0 %v1168, 127
        %v1177 = vpop.permute.xlu0 %1176
        %v1181 = vadd.f32 %v1013, %v1173
        %v1182 = vadd.f32 %v1014, %v1175
        %v1183 = vadd.f32 %v1015, %v1177
        %s1184 = sld [smem:[#allocation2 + $0x407]]
        %v1185 = vstv %s1184
        %v1186 = vmul.f32 %v873, %v1185
        %v1187 = vmul.f32 %v874, %v1185
        %v1188 = vmul.f32 %v875, %v1185
        %1192 = vrot.lane.b32.xlu0 %v1186, 127
        %v1193 = vpop.permute.xlu0 %1192
        %1194 = vrot.lane.b32.xlu0 %v1187, 127
        %v1195 = vpop.permute.xlu0 %1194
        %1196 = vrot.lane.b32.xlu0 %v1188, 127
        %v1197 = vpop.permute.xlu0 %1196
        %v1201 = vadd.f32 %v1021, %v1193
        %v1202 = vadd.f32 %v1022, %v1195
        %v1203 = vadd.f32 %v1023, %v1197
        %s1204 = sld [smem:[#allocation2 + $0x8]]
        %v1205 = vstv %s1204
        %v1206 = vmul.f32 %v949, %v1205
        %v1207 = vmul.f32 %v950, %v1205
        %v1208 = vmul.f32 %v951, %v1205
        %1212 = vrot.lane.b32.xlu0 %v1206, 127
        %v1213 = vpop.permute.xlu0 %1212
        %1214 = vrot.lane.b32.xlu0 %v1207, 127
        %v1215 = vpop.permute.xlu0 %1214
        %1216 = vrot.lane.b32.xlu0 %v1208, 127
        %v1217 = vpop.permute.xlu0 %1216
        %v1221 = vadd.f32 %v1041, %v1213
        %v1222 = vadd.f32 %v1042, %v1215
        %v1223 = vadd.f32 %v1043, %v1217
        %s1224 = sld [smem:[#allocation2 + $0x88]]
        %v1225 = vstv %s1224
        %v1226 = vmul.f32 %v949, %v1225
        %v1227 = vmul.f32 %v950, %v1225
        %v1228 = vmul.f32 %v951, %v1225
        %1232 = vrot.lane.b32.xlu0 %v1226, 127
        %v1233 = vpop.permute.xlu0 %1232
        %1234 = vrot.lane.b32.xlu0 %v1227, 127
        %v1235 = vpop.permute.xlu0 %1234
        %1236 = vrot.lane.b32.xlu0 %v1228, 127
        %v1237 = vpop.permute.xlu0 %1236
        %v1241 = vadd.f32 %v1061, %v1233
        %v1242 = vadd.f32 %v1062, %v1235
        %v1243 = vadd.f32 %v1063, %v1237
        %s1244 = sld [smem:[#allocation2 + $0x108]]
        %v1245 = vstv %s1244
        %v1246 = vmul.f32 %v949, %v1245
        %v1247 = vmul.f32 %v950, %v1245
        %v1248 = vmul.f32 %v951, %v1245
        %1252 = vrot.lane.b32.xlu0 %v1246, 127
        %v1253 = vpop.permute.xlu0 %1252
        %1254 = vrot.lane.b32.xlu0 %v1247, 127
        %v1255 = vpop.permute.xlu0 %1254
        %1256 = vrot.lane.b32.xlu0 %v1248, 127
        %v1257 = vpop.permute.xlu0 %1256
        %v1261 = vadd.f32 %v1081, %v1253
        %v1262 = vadd.f32 %v1082, %v1255
        %v1263 = vadd.f32 %v1083, %v1257
        %s1264 = sld [smem:[#allocation2 + $0x188]]
        %v1265 = vstv %s1264
        %v1266 = vmul.f32 %v949, %v1265
        %v1267 = vmul.f32 %v950, %v1265
        %v1268 = vmul.f32 %v951, %v1265
        %1272 = vrot.lane.b32.xlu0 %v1266, 127
        %v1273 = vpop.permute.xlu0 %1272
        %1274 = vrot.lane.b32.xlu0 %v1267, 127
        %v1275 = vpop.permute.xlu0 %1274
        %1276 = vrot.lane.b32.xlu0 %v1268, 127
        %v1277 = vpop.permute.xlu0 %1276
        %v1281 = vadd.f32 %v1101, %v1273
        %v1282 = vadd.f32 %v1102, %v1275
        %v1283 = vadd.f32 %v1103, %v1277
        %s1284 = sld [smem:[#allocation2 + $0x208]]
        %v1285 = vstv %s1284
        %v1286 = vmul.f32 %v949, %v1285
        %v1287 = vmul.f32 %v950, %v1285
        %v1288 = vmul.f32 %v951, %v1285
        %1292 = vrot.lane.b32.xlu0 %v1286, 127
        %v1293 = vpop.permute.xlu0 %1292
        %1294 = vrot.lane.b32.xlu0 %v1287, 127
        %v1295 = vpop.permute.xlu0 %1294
        %1296 = vrot.lane.b32.xlu0 %v1288, 127
        %v1297 = vpop.permute.xlu0 %1296
        %v1301 = vadd.f32 %v1121, %v1293
        %v1302 = vadd.f32 %v1122, %v1295
        %v1303 = vadd.f32 %v1123, %v1297
        %s1304 = sld [smem:[#allocation2 + $0x288]]
        %v1305 = vstv %s1304
        %v1306 = vmul.f32 %v949, %v1305
        %v1307 = vmul.f32 %v950, %v1305
        %v1308 = vmul.f32 %v951, %v1305
        %1312 = vrot.lane.b32.xlu0 %v1306, 127
        %v1313 = vpop.permute.xlu0 %1312
        %1314 = vrot.lane.b32.xlu0 %v1307, 127
        %v1315 = vpop.permute.xlu0 %1314
        %1316 = vrot.lane.b32.xlu0 %v1308, 127
        %v1317 = vpop.permute.xlu0 %1316
        %v1321 = vadd.f32 %v1141, %v1313
        %v1322 = vadd.f32 %v1142, %v1315
        %v1323 = vadd.f32 %v1143, %v1317
        %s1324 = sld [smem:[#allocation2 + $0x308]]
        %v1325 = vstv %s1324
        %v1326 = vmul.f32 %v949, %v1325
        %v1327 = vmul.f32 %v950, %v1325
        %v1328 = vmul.f32 %v951, %v1325
        %1332 = vrot.lane.b32.xlu0 %v1326, 127
        %v1333 = vpop.permute.xlu0 %1332
        %1334 = vrot.lane.b32.xlu0 %v1327, 127
        %v1335 = vpop.permute.xlu0 %1334
        %1336 = vrot.lane.b32.xlu0 %v1328, 127
        %v1337 = vpop.permute.xlu0 %1336
        %v1341 = vadd.f32 %v1161, %v1333
        %v1342 = vadd.f32 %v1162, %v1335
        %v1343 = vadd.f32 %v1163, %v1337
        %s1344 = sld [smem:[#allocation2 + $0x388]]
        %v1345 = vstv %s1344
        %v1346 = vmul.f32 %v949, %v1345
        %v1347 = vmul.f32 %v950, %v1345
        %v1348 = vmul.f32 %v951, %v1345
        %1352 = vrot.lane.b32.xlu0 %v1346, 127
        %v1353 = vpop.permute.xlu0 %1352
        %1354 = vrot.lane.b32.xlu0 %v1347, 127
        %v1355 = vpop.permute.xlu0 %1354
        %1356 = vrot.lane.b32.xlu0 %v1348, 127
        %v1357 = vpop.permute.xlu0 %1356
        %v1361 = vadd.f32 %v1181, %v1353
        %v1362 = vadd.f32 %v1182, %v1355
        %v1363 = vadd.f32 %v1183, %v1357
        %s1364 = sld [smem:[#allocation2 + $0x408]]
        %v1365 = vstv %s1364
        %v1366 = vmul.f32 %v949, %v1365
        %v1367 = vmul.f32 %v950, %v1365
        %v1368 = vmul.f32 %v951, %v1365
        %1372 = vrot.lane.b32.xlu0 %v1366, 127
        %v1373 = vpop.permute.xlu0 %1372
        %1374 = vrot.lane.b32.xlu0 %v1367, 127
        %v1375 = vpop.permute.xlu0 %1374
        %1376 = vrot.lane.b32.xlu0 %v1368, 127
        %v1377 = vpop.permute.xlu0 %1376
        %v1381 = vadd.f32 %v1201, %v1373
        %v1382 = vadd.f32 %v1202, %v1375
        %v1383 = vadd.f32 %v1203, %v1377
        %s1384 = sld [smem:[#allocation2 + $0x9]]
        %v1385 = vstv %s1384
        %v1386 = vmul.f32 %v873, %v1385
        %v1387 = vmul.f32 %v874, %v1385
        %v1388 = vmul.f32 %v875, %v1385
        %1392 = vrot.lane.b32.xlu0 %v1386, 126
        %v1393 = vpop.permute.xlu0 %1392
        %1394 = vrot.lane.b32.xlu0 %v1387, 126
        %v1395 = vpop.permute.xlu0 %1394
        %1396 = vrot.lane.b32.xlu0 %v1388, 126
        %v1397 = vpop.permute.xlu0 %1396
        %v1401 = vadd.f32 %v1221, %v1393
        %v1402 = vadd.f32 %v1222, %v1395
        %v1403 = vadd.f32 %v1223, %v1397
        %s1404 = sld [smem:[#allocation2 + $0x89]]
        %v1405 = vstv %s1404
        %v1406 = vmul.f32 %v873, %v1405
        %v1407 = vmul.f32 %v874, %v1405
        %v1408 = vmul.f32 %v875, %v1405
        %1412 = vrot.lane.b32.xlu0 %v1406, 126
        %v1413 = vpop.permute.xlu0 %1412
        %1414 = vrot.lane.b32.xlu0 %v1407, 126
        %v1415 = vpop.permute.xlu0 %1414
        %1416 = vrot.lane.b32.xlu0 %v1408, 126
        %v1417 = vpop.permute.xlu0 %1416
        %v1421 = vadd.f32 %v1241, %v1413
        %v1422 = vadd.f32 %v1242, %v1415
        %v1423 = vadd.f32 %v1243, %v1417
        %s1424 = sld [smem:[#allocation2 + $0x109]]
        %v1425 = vstv %s1424
        %v1426 = vmul.f32 %v873, %v1425
        %v1427 = vmul.f32 %v874, %v1425
        %v1428 = vmul.f32 %v875, %v1425
        %1432 = vrot.lane.b32.xlu0 %v1426, 126
        %v1433 = vpop.permute.xlu0 %1432
        %1434 = vrot.lane.b32.xlu0 %v1427, 126
        %v1435 = vpop.permute.xlu0 %1434
        %1436 = vrot.lane.b32.xlu0 %v1428, 126
        %v1437 = vpop.permute.xlu0 %1436
        %v1441 = vadd.f32 %v1261, %v1433
        %v1442 = vadd.f32 %v1262, %v1435
        %v1443 = vadd.f32 %v1263, %v1437
        %s1444 = sld [smem:[#allocation2 + $0x189]]
        %v1445 = vstv %s1444
        %v1446 = vmul.f32 %v873, %v1445
        %v1447 = vmul.f32 %v874, %v1445
        %v1448 = vmul.f32 %v875, %v1445
        %1452 = vrot.lane.b32.xlu0 %v1446, 126
        %v1453 = vpop.permute.xlu0 %1452
        %1454 = vrot.lane.b32.xlu0 %v1447, 126
        %v1455 = vpop.permute.xlu0 %1454
        %1456 = vrot.lane.b32.xlu0 %v1448, 126
        %v1457 = vpop.permute.xlu0 %1456
        %v1461 = vadd.f32 %v1281, %v1453
        %v1462 = vadd.f32 %v1282, %v1455
        %v1463 = vadd.f32 %v1283, %v1457
        %s1464 = sld [smem:[#allocation2 + $0x209]]
        %v1465 = vstv %s1464
        %v1466 = vmul.f32 %v873, %v1465
        %v1467 = vmul.f32 %v874, %v1465
        %v1468 = vmul.f32 %v875, %v1465
        %1472 = vrot.lane.b32.xlu0 %v1466, 126
        %v1473 = vpop.permute.xlu0 %1472
        %1474 = vrot.lane.b32.xlu0 %v1467, 126
        %v1475 = vpop.permute.xlu0 %1474
        %1476 = vrot.lane.b32.xlu0 %v1468, 126
        %v1477 = vpop.permute.xlu0 %1476
        %v1481 = vadd.f32 %v1301, %v1473
        %v1482 = vadd.f32 %v1302, %v1475
        %v1483 = vadd.f32 %v1303, %v1477
        %s1484 = sld [smem:[#allocation2 + $0x289]]
        %v1485 = vstv %s1484
        %v1486 = vmul.f32 %v873, %v1485
        %v1487 = vmul.f32 %v874, %v1485
        %v1488 = vmul.f32 %v875, %v1485
        %1492 = vrot.lane.b32.xlu0 %v1486, 126
        %v1493 = vpop.permute.xlu0 %1492
        %1494 = vrot.lane.b32.xlu0 %v1487, 126
        %v1495 = vpop.permute.xlu0 %1494
        %1496 = vrot.lane.b32.xlu0 %v1488, 126
        %v1497 = vpop.permute.xlu0 %1496
        %v1501 = vadd.f32 %v1321, %v1493
        %v1502 = vadd.f32 %v1322, %v1495
        %v1503 = vadd.f32 %v1323, %v1497
        %s1504 = sld [smem:[#allocation2 + $0x309]]
        %v1505 = vstv %s1504
        %v1506 = vmul.f32 %v873, %v1505
        %v1507 = vmul.f32 %v874, %v1505
        %v1508 = vmul.f32 %v875, %v1505
        %1512 = vrot.lane.b32.xlu0 %v1506, 126
        %v1513 = vpop.permute.xlu0 %1512
        %1514 = vrot.lane.b32.xlu0 %v1507, 126
        %v1515 = vpop.permute.xlu0 %1514
        %1516 = vrot.lane.b32.xlu0 %v1508, 126
        %v1517 = vpop.permute.xlu0 %1516
        %v1521 = vadd.f32 %v1341, %v1513
        %v1522 = vadd.f32 %v1342, %v1515
        %v1523 = vadd.f32 %v1343, %v1517
        %s1524 = sld [smem:[#allocation2 + $0x389]]
        %v1525 = vstv %s1524
        %v1526 = vmul.f32 %v873, %v1525
        %v1527 = vmul.f32 %v874, %v1525
        %v1528 = vmul.f32 %v875, %v1525
        %1532 = vrot.lane.b32.xlu0 %v1526, 126
        %v1533 = vpop.permute.xlu0 %1532
        %1534 = vrot.lane.b32.xlu0 %v1527, 126
        %v1535 = vpop.permute.xlu0 %1534
        %1536 = vrot.lane.b32.xlu0 %v1528, 126
        %v1537 = vpop.permute.xlu0 %1536
        %v1541 = vadd.f32 %v1361, %v1533
        %v1542 = vadd.f32 %v1362, %v1535
        %v1543 = vadd.f32 %v1363, %v1537
        %s1544 = sld [smem:[#allocation2 + $0x409]]
        %v1545 = vstv %s1544
        %v1546 = vmul.f32 %v873, %v1545
        %v1547 = vmul.f32 %v874, %v1545
        %v1548 = vmul.f32 %v875, %v1545
        %1552 = vrot.lane.b32.xlu0 %v1546, 126
        %v1553 = vpop.permute.xlu0 %1552
        %1554 = vrot.lane.b32.xlu0 %v1547, 126
        %v1555 = vpop.permute.xlu0 %1554
        %1556 = vrot.lane.b32.xlu0 %v1548, 126
        %v1557 = vpop.permute.xlu0 %1556
        %v1561 = vadd.f32 %v1381, %v1553
        %v1562 = vadd.f32 %v1382, %v1555
        %v1563 = vadd.f32 %v1383, %v1557
        %v1564 = vld [vmem:[%s199 + $0x1] sm:$0xff]
        %v1565 = vld [vmem:[%s199 + $0x41] sm:$0xff]
        %v1566 = vld [vmem:[%s199 + $0x81] sm:$0xff]
        %s1567 = sld [smem:[#allocation2 + $0xa]]
        %v1568 = vstv %s1567
        %v1569 = vmul.f32 %v1564, %v1568
        %v1570 = vmul.f32 %v1565, %v1568
        %v1571 = vmul.f32 %v1566, %v1568
        %v1572 = vadd.f32 %v1401, %v1569
        %v1573 = vadd.f32 %v1402, %v1570
        %v1574 = vadd.f32 %v1403, %v1571
        %s1575 = sld [smem:[#allocation2 + $0x8a]]
        %v1576 = vstv %s1575
        %v1577 = vmul.f32 %v1564, %v1576
        %v1578 = vmul.f32 %v1565, %v1576
        %v1579 = vmul.f32 %v1566, %v1576
        %v1580 = vadd.f32 %v1421, %v1577
        %v1581 = vadd.f32 %v1422, %v1578
        %v1582 = vadd.f32 %v1423, %v1579
        %s1583 = sld [smem:[#allocation2 + $0x10a]]
        %v1584 = vstv %s1583
        %v1585 = vmul.f32 %v1564, %v1584
        %v1586 = vmul.f32 %v1565, %v1584
        %v1587 = vmul.f32 %v1566, %v1584
        %v1588 = vadd.f32 %v1441, %v1585
        %v1589 = vadd.f32 %v1442, %v1586
        %v1590 = vadd.f32 %v1443, %v1587
        %s1591 = sld [smem:[#allocation2 + $0x18a]]
        %v1592 = vstv %s1591
        %v1593 = vmul.f32 %v1564, %v1592
        %v1594 = vmul.f32 %v1565, %v1592
        %v1595 = vmul.f32 %v1566, %v1592
        %v1596 = vadd.f32 %v1461, %v1593
        %v1597 = vadd.f32 %v1462, %v1594
        %v1598 = vadd.f32 %v1463, %v1595
        %s1599 = sld [smem:[#allocation2 + $0x20a]]
        %v1600 = vstv %s1599
        %v1601 = vmul.f32 %v1564, %v1600
        %v1602 = vmul.f32 %v1565, %v1600
        %v1603 = vmul.f32 %v1566, %v1600
        %v1604 = vadd.f32 %v1481, %v1601
        %v1605 = vadd.f32 %v1482, %v1602
        %v1606 = vadd.f32 %v1483, %v1603
        %s1607 = sld [smem:[#allocation2 + $0x28a]]
        %v1608 = vstv %s1607
        %v1609 = vmul.f32 %v1564, %v1608
        %v1610 = vmul.f32 %v1565, %v1608
        %v1611 = vmul.f32 %v1566, %v1608
        %v1612 = vadd.f32 %v1501, %v1609
        %v1613 = vadd.f32 %v1502, %v1610
        %v1614 = vadd.f32 %v1503, %v1611
        %s1615 = sld [smem:[#allocation2 + $0x30a]]
        %v1616 = vstv %s1615
        %v1617 = vmul.f32 %v1564, %v1616
        %v1618 = vmul.f32 %v1565, %v1616
        %v1619 = vmul.f32 %v1566, %v1616
        %v1620 = vadd.f32 %v1521, %v1617
        %v1621 = vadd.f32 %v1522, %v1618
        %v1622 = vadd.f32 %v1523, %v1619
        %s1623 = sld [smem:[#allocation2 + $0x38a]]
        %v1624 = vstv %s1623
        %v1625 = vmul.f32 %v1564, %v1624
        %v1626 = vmul.f32 %v1565, %v1624
        %v1627 = vmul.f32 %v1566, %v1624
        %v1628 = vadd.f32 %v1541, %v1625
        %v1629 = vadd.f32 %v1542, %v1626
        %v1630 = vadd.f32 %v1543, %v1627
        %s1631 = sld [smem:[#allocation2 + $0x40a]]
        %v1632 = vstv %s1631
        %v1633 = vmul.f32 %v1564, %v1632
        %v1634 = vmul.f32 %v1565, %v1632
        %v1635 = vmul.f32 %v1566, %v1632
        %v1636 = vadd.f32 %v1561, %v1633
        %v1637 = vadd.f32 %v1562, %v1634
        %v1638 = vadd.f32 %v1563, %v1635
        %v1639 = vld [vmem:[%s256 + $0x1] sm:$0xff]
        %v1640 = vld [vmem:[%s256 + $0x41] sm:$0xff]
        %v1641 = vld [vmem:[%s256 + $0x81] sm:$0xff]
        %s1642 = sld [smem:[#allocation2 + $0xb]]
        %v1643 = vstv %s1642
        %v1644 = vmul.f32 %v1639, %v1643
        %v1645 = vmul.f32 %v1640, %v1643
        %v1646 = vmul.f32 %v1641, %v1643
        %v1647 = vadd.f32 %v1572, %v1644
        %v1648 = vadd.f32 %v1573, %v1645
        %v1649 = vadd.f32 %v1574, %v1646
        %s1650 = sld [smem:[#allocation2 + $0x8b]]
        %v1651 = vstv %s1650
        %v1652 = vmul.f32 %v1639, %v1651
        %v1653 = vmul.f32 %v1640, %v1651
        %v1654 = vmul.f32 %v1641, %v1651
        %v1655 = vadd.f32 %v1580, %v1652
        %v1656 = vadd.f32 %v1581, %v1653
        %v1657 = vadd.f32 %v1582, %v1654
        %s1658 = sld [smem:[#allocation2 + $0x10b]]
        %v1659 = vstv %s1658
        %v1660 = vmul.f32 %v1639, %v1659
        %v1661 = vmul.f32 %v1640, %v1659
        %v1662 = vmul.f32 %v1641, %v1659
        %v1663 = vadd.f32 %v1588, %v1660
        %v1664 = vadd.f32 %v1589, %v1661
        %v1665 = vadd.f32 %v1590, %v1662
        %s1666 = sld [smem:[#allocation2 + $0x18b]]
        %v1667 = vstv %s1666
        %v1668 = vmul.f32 %v1639, %v1667
        %v1669 = vmul.f32 %v1640, %v1667
        %v1670 = vmul.f32 %v1641, %v1667
        %v1671 = vadd.f32 %v1596, %v1668
        %v1672 = vadd.f32 %v1597, %v1669
        %v1673 = vadd.f32 %v1598, %v1670
        %s1674 = sld [smem:[#allocation2 + $0x20b]]
        %v1675 = vstv %s1674
        %v1676 = vmul.f32 %v1639, %v1675
        %v1677 = vmul.f32 %v1640, %v1675
        %v1678 = vmul.f32 %v1641, %v1675
        %v1679 = vadd.f32 %v1604, %v1676
        %v1680 = vadd.f32 %v1605, %v1677
        %v1681 = vadd.f32 %v1606, %v1678
        %s1682 = sld [smem:[#allocation2 + $0x28b]]
        %v1683 = vstv %s1682
        %v1684 = vmul.f32 %v1639, %v1683
        %v1685 = vmul.f32 %v1640, %v1683
        %v1686 = vmul.f32 %v1641, %v1683
        %v1687 = vadd.f32 %v1612, %v1684
        %v1688 = vadd.f32 %v1613, %v1685
        %v1689 = vadd.f32 %v1614, %v1686
        %s1690 = sld [smem:[#allocation2 + $0x30b]]
        %v1691 = vstv %s1690
        %v1692 = vmul.f32 %v1639, %v1691
        %v1693 = vmul.f32 %v1640, %v1691
        %v1694 = vmul.f32 %v1641, %v1691
        %v1695 = vadd.f32 %v1620, %v1692
        %v1696 = vadd.f32 %v1621, %v1693
        %v1697 = vadd.f32 %v1622, %v1694
        %s1698 = sld [smem:[#allocation2 + $0x38b]]
        %v1699 = vstv %s1698
        %v1700 = vmul.f32 %v1639, %v1699
        %v1701 = vmul.f32 %v1640, %v1699
        %v1702 = vmul.f32 %v1641, %v1699
        %v1703 = vadd.f32 %v1628, %v1700
        %v1704 = vadd.f32 %v1629, %v1701
        %v1705 = vadd.f32 %v1630, %v1702
        %s1706 = sld [smem:[#allocation2 + $0x40b]]
        %v1707 = vstv %s1706
        %v1708 = vmul.f32 %v1639, %v1707
        %v1709 = vmul.f32 %v1640, %v1707
        %v1710 = vmul.f32 %v1641, %v1707
        %v1711 = vadd.f32 %v1636, %v1708
        %v1712 = vadd.f32 %v1637, %v1709
        %v1713 = vadd.f32 %v1638, %v1710
        %s1714 = sld [smem:[#allocation2 + $0xc]]
        %v1715 = vstv %s1714
        %v1716 = vmul.f32 %v1564, %v1715
        %v1717 = vmul.f32 %v1565, %v1715
        %v1718 = vmul.f32 %v1566, %v1715
        %1722 = vrot.lane.b32.xlu0 %v1716, 127
        %v1723 = vpop.permute.xlu0 %1722
        %1724 = vrot.lane.b32.xlu0 %v1717, 127
        %v1725 = vpop.permute.xlu0 %1724
        %1726 = vrot.lane.b32.xlu0 %v1718, 127
        %v1727 = vpop.permute.xlu0 %1726
        %v1731 = vadd.f32 %v1647, %v1723
        %v1732 = vadd.f32 %v1648, %v1725
        %v1733 = vadd.f32 %v1649, %v1727
        %s1734 = sld [smem:[#allocation2 + $0x8c]]
        %v1735 = vstv %s1734
        %v1736 = vmul.f32 %v1564, %v1735
        %v1737 = vmul.f32 %v1565, %v1735
        %v1738 = vmul.f32 %v1566, %v1735
        %1742 = vrot.lane.b32.xlu0 %v1736, 127
        %v1743 = vpop.permute.xlu0 %1742
        %1744 = vrot.lane.b32.xlu0 %v1737, 127
        %v1745 = vpop.permute.xlu0 %1744
        %1746 = vrot.lane.b32.xlu0 %v1738, 127
        %v1747 = vpop.permute.xlu0 %1746
        %v1751 = vadd.f32 %v1655, %v1743
        %v1752 = vadd.f32 %v1656, %v1745
        %v1753 = vadd.f32 %v1657, %v1747
        %s1754 = sld [smem:[#allocation2 + $0x10c]]
        %v1755 = vstv %s1754
        %v1756 = vmul.f32 %v1564, %v1755
        %v1757 = vmul.f32 %v1565, %v1755
        %v1758 = vmul.f32 %v1566, %v1755
        %1762 = vrot.lane.b32.xlu0 %v1756, 127
        %v1763 = vpop.permute.xlu0 %1762
        %1764 = vrot.lane.b32.xlu0 %v1757, 127
        %v1765 = vpop.permute.xlu0 %1764
        %1766 = vrot.lane.b32.xlu0 %v1758, 127
        %v1767 = vpop.permute.xlu0 %1766
        %v1771 = vadd.f32 %v1663, %v1763
        %v1772 = vadd.f32 %v1664, %v1765
        %v1773 = vadd.f32 %v1665, %v1767
        %s1774 = sld [smem:[#allocation2 + $0x18c]]
        %v1775 = vstv %s1774
        %v1776 = vmul.f32 %v1564, %v1775
        %v1777 = vmul.f32 %v1565, %v1775
        %v1778 = vmul.f32 %v1566, %v1775
        %1782 = vrot.lane.b32.xlu0 %v1776, 127
        %v1783 = vpop.permute.xlu0 %1782
        %1784 = vrot.lane.b32.xlu0 %v1777, 127
        %v1785 = vpop.permute.xlu0 %1784
        %1786 = vrot.lane.b32.xlu0 %v1778, 127
        %v1787 = vpop.permute.xlu0 %1786
        %v1791 = vadd.f32 %v1671, %v1783
        %v1792 = vadd.f32 %v1672, %v1785
        %v1793 = vadd.f32 %v1673, %v1787
        %s1794 = sld [smem:[#allocation2 + $0x20c]]
        %v1795 = vstv %s1794
        %v1796 = vmul.f32 %v1564, %v1795
        %v1797 = vmul.f32 %v1565, %v1795
        %v1798 = vmul.f32 %v1566, %v1795
        %1802 = vrot.lane.b32.xlu0 %v1796, 127
        %v1803 = vpop.permute.xlu0 %1802
        %1804 = vrot.lane.b32.xlu0 %v1797, 127
        %v1805 = vpop.permute.xlu0 %1804
        %1806 = vrot.lane.b32.xlu0 %v1798, 127
        %v1807 = vpop.permute.xlu0 %1806
        %v1811 = vadd.f32 %v1679, %v1803
        %v1812 = vadd.f32 %v1680, %v1805
        %v1813 = vadd.f32 %v1681, %v1807
        %s1814 = sld [smem:[#allocation2 + $0x28c]]
        %v1815 = vstv %s1814
        %v1816 = vmul.f32 %v1564, %v1815
        %v1817 = vmul.f32 %v1565, %v1815
        %v1818 = vmul.f32 %v1566, %v1815
        %1822 = vrot.lane.b32.xlu0 %v1816, 127
        %v1823 = vpop.permute.xlu0 %1822
        %1824 = vrot.lane.b32.xlu0 %v1817, 127
        %v1825 = vpop.permute.xlu0 %1824
        %1826 = vrot.lane.b32.xlu0 %v1818, 127
        %v1827 = vpop.permute.xlu0 %1826
        %v1831 = vadd.f32 %v1687, %v1823
        %v1832 = vadd.f32 %v1688, %v1825
        %v1833 = vadd.f32 %v1689, %v1827
        %s1834 = sld [smem:[#allocation2 + $0x30c]]
        %v1835 = vstv %s1834
        %v1836 = vmul.f32 %v1564, %v1835
        %v1837 = vmul.f32 %v1565, %v1835
        %v1838 = vmul.f32 %v1566, %v1835
        %1842 = vrot.lane.b32.xlu0 %v1836, 127
        %v1843 = vpop.permute.xlu0 %1842
        %1844 = vrot.lane.b32.xlu0 %v1837, 127
        %v1845 = vpop.permute.xlu0 %1844
        %1846 = vrot.lane.b32.xlu0 %v1838, 127
        %v1847 = vpop.permute.xlu0 %1846
        %v1851 = vadd.f32 %v1695, %v1843
        %v1852 = vadd.f32 %v1696, %v1845
        %v1853 = vadd.f32 %v1697, %v1847
        %s1854 = sld [smem:[#allocation2 + $0x38c]]
        %v1855 = vstv %s1854
        %v1856 = vmul.f32 %v1564, %v1855
        %v1857 = vmul.f32 %v1565, %v1855
        %v1858 = vmul.f32 %v1566, %v1855
        %1862 = vrot.lane.b32.xlu0 %v1856, 127
        %v1863 = vpop.permute.xlu0 %1862
        %1864 = vrot.lane.b32.xlu0 %v1857, 127
        %v1865 = vpop.permute.xlu0 %1864
        %1866 = vrot.lane.b32.xlu0 %v1858, 127
        %v1867 = vpop.permute.xlu0 %1866
        %v1871 = vadd.f32 %v1703, %v1863
        %v1872 = vadd.f32 %v1704, %v1865
        %v1873 = vadd.f32 %v1705, %v1867
        %s1874 = sld [smem:[#allocation2 + $0x40c]]
        %v1875 = vstv %s1874
        %v1876 = vmul.f32 %v1564, %v1875
        %v1877 = vmul.f32 %v1565, %v1875
        %v1878 = vmul.f32 %v1566, %v1875
        %1882 = vrot.lane.b32.xlu0 %v1876, 127
        %v1883 = vpop.permute.xlu0 %1882
        %1884 = vrot.lane.b32.xlu0 %v1877, 127
        %v1885 = vpop.permute.xlu0 %1884
        %1886 = vrot.lane.b32.xlu0 %v1878, 127
        %v1887 = vpop.permute.xlu0 %1886
        %v1891 = vadd.f32 %v1711, %v1883
        %v1892 = vadd.f32 %v1712, %v1885
        %v1893 = vadd.f32 %v1713, %v1887
        %s1894 = sld [smem:[#allocation2 + $0xd]]
        %v1895 = vstv %s1894
        %v1896 = vmul.f32 %v1639, %v1895
        %v1897 = vmul.f32 %v1640, %v1895
        %v1898 = vmul.f32 %v1641, %v1895
        %1902 = vrot.lane.b32.xlu0 %v1896, 127
        %v1903 = vpop.permute.xlu0 %1902
        %1904 = vrot.lane.b32.xlu0 %v1897, 127
        %v1905 = vpop.permute.xlu0 %1904
        %1906 = vrot.lane.b32.xlu0 %v1898, 127
        %v1907 = vpop.permute.xlu0 %1906
        %v1911 = vadd.f32 %v1731, %v1903
        %v1912 = vadd.f32 %v1732, %v1905
        %v1913 = vadd.f32 %v1733, %v1907
        %s1914 = sld [smem:[#allocation2 + $0x8d]]
        %v1915 = vstv %s1914
        %v1916 = vmul.f32 %v1639, %v1915
        %v1917 = vmul.f32 %v1640, %v1915
        %v1918 = vmul.f32 %v1641, %v1915
        %1922 = vrot.lane.b32.xlu0 %v1916, 127
        %v1923 = vpop.permute.xlu0 %1922
        %1924 = vrot.lane.b32.xlu0 %v1917, 127
        %v1925 = vpop.permute.xlu0 %1924
        %1926 = vrot.lane.b32.xlu0 %v1918, 127
        %v1927 = vpop.permute.xlu0 %1926
        %v1931 = vadd.f32 %v1751, %v1923
        %v1932 = vadd.f32 %v1752, %v1925
        %v1933 = vadd.f32 %v1753, %v1927
        %s1934 = sld [smem:[#allocation2 + $0x10d]]
        %v1935 = vstv %s1934
        %v1936 = vmul.f32 %v1639, %v1935
        %v1937 = vmul.f32 %v1640, %v1935
        %v1938 = vmul.f32 %v1641, %v1935
        %1942 = vrot.lane.b32.xlu0 %v1936, 127
        %v1943 = vpop.permute.xlu0 %1942
        %1944 = vrot.lane.b32.xlu0 %v1937, 127
        %v1945 = vpop.permute.xlu0 %1944
        %1946 = vrot.lane.b32.xlu0 %v1938, 127
        %v1947 = vpop.permute.xlu0 %1946
        %v1951 = vadd.f32 %v1771, %v1943
        %v1952 = vadd.f32 %v1772, %v1945
        %v1953 = vadd.f32 %v1773, %v1947
        %s1954 = sld [smem:[#allocation2 + $0x18d]]
        %v1955 = vstv %s1954
        %v1956 = vmul.f32 %v1639, %v1955
        %v1957 = vmul.f32 %v1640, %v1955
        %v1958 = vmul.f32 %v1641, %v1955
        %1962 = vrot.lane.b32.xlu0 %v1956, 127
        %v1963 = vpop.permute.xlu0 %1962
        %1964 = vrot.lane.b32.xlu0 %v1957, 127
        %v1965 = vpop.permute.xlu0 %1964
        %1966 = vrot.lane.b32.xlu0 %v1958, 127
        %v1967 = vpop.permute.xlu0 %1966
        %v1971 = vadd.f32 %v1791, %v1963
        %v1972 = vadd.f32 %v1792, %v1965
        %v1973 = vadd.f32 %v1793, %v1967
        %s1974 = sld [smem:[#allocation2 + $0x20d]]
        %v1975 = vstv %s1974
        %v1976 = vmul.f32 %v1639, %v1975
        %v1977 = vmul.f32 %v1640, %v1975
        %v1978 = vmul.f32 %v1641, %v1975
        %1982 = vrot.lane.b32.xlu0 %v1976, 127
        %v1983 = vpop.permute.xlu0 %1982
        %1984 = vrot.lane.b32.xlu0 %v1977, 127
        %v1985 = vpop.permute.xlu0 %1984
        %1986 = vrot.lane.b32.xlu0 %v1978, 127
        %v1987 = vpop.permute.xlu0 %1986
        %v1991 = vadd.f32 %v1811, %v1983
        %v1992 = vadd.f32 %v1812, %v1985
        %v1993 = vadd.f32 %v1813, %v1987
        %s1994 = sld [smem:[#allocation2 + $0x28d]]
        %v1995 = vstv %s1994
        %v1996 = vmul.f32 %v1639, %v1995
        %v1997 = vmul.f32 %v1640, %v1995
        %v1998 = vmul.f32 %v1641, %v1995
        %2002 = vrot.lane.b32.xlu0 %v1996, 127
        %v2003 = vpop.permute.xlu0 %2002
        %2004 = vrot.lane.b32.xlu0 %v1997, 127
        %v2005 = vpop.permute.xlu0 %2004
        %2006 = vrot.lane.b32.xlu0 %v1998, 127
        %v2007 = vpop.permute.xlu0 %2006
        %v2011 = vadd.f32 %v1831, %v2003
        %v2012 = vadd.f32 %v1832, %v2005
        %v2013 = vadd.f32 %v1833, %v2007
        %s2014 = sld [smem:[#allocation2 + $0x30d]]
        %v2015 = vstv %s2014
        %v2016 = vmul.f32 %v1639, %v2015
        %v2017 = vmul.f32 %v1640, %v2015
        %v2018 = vmul.f32 %v1641, %v2015
        %2022 = vrot.lane.b32.xlu0 %v2016, 127
        %v2023 = vpop.permute.xlu0 %2022
        %2024 = vrot.lane.b32.xlu0 %v2017, 127
        %v2025 = vpop.permute.xlu0 %2024
        %2026 = vrot.lane.b32.xlu0 %v2018, 127
        %v2027 = vpop.permute.xlu0 %2026
        %v2031 = vadd.f32 %v1851, %v2023
        %v2032 = vadd.f32 %v1852, %v2025
        %v2033 = vadd.f32 %v1853, %v2027
        %s2034 = sld [smem:[#allocation2 + $0x38d]]
        %v2035 = vstv %s2034
        %v2036 = vmul.f32 %v1639, %v2035
        %v2037 = vmul.f32 %v1640, %v2035
        %v2038 = vmul.f32 %v1641, %v2035
        %2042 = vrot.lane.b32.xlu0 %v2036, 127
        %v2043 = vpop.permute.xlu0 %2042
        %2044 = vrot.lane.b32.xlu0 %v2037, 127
        %v2045 = vpop.permute.xlu0 %2044
        %2046 = vrot.lane.b32.xlu0 %v2038, 127
        %v2047 = vpop.permute.xlu0 %2046
        %v2051 = vadd.f32 %v1871, %v2043
        %v2052 = vadd.f32 %v1872, %v2045
        %v2053 = vadd.f32 %v1873, %v2047
        %s2054 = sld [smem:[#allocation2 + $0x40d]]
        %v2055 = vstv %s2054
        %v2056 = vmul.f32 %v1639, %v2055
        %v2057 = vmul.f32 %v1640, %v2055
        %v2058 = vmul.f32 %v1641, %v2055
        %2062 = vrot.lane.b32.xlu0 %v2056, 127
        %v2063 = vpop.permute.xlu0 %2062
        %2064 = vrot.lane.b32.xlu0 %v2057, 127
        %v2065 = vpop.permute.xlu0 %2064
        %2066 = vrot.lane.b32.xlu0 %v2058, 127
        %v2067 = vpop.permute.xlu0 %2066
        %v2071 = vadd.f32 %v1891, %v2063
        %v2072 = vadd.f32 %v1892, %v2065
        %v2073 = vadd.f32 %v1893, %v2067
        %s2074 = sld [smem:[#allocation2 + $0xe]]
        %v2075 = vstv %s2074
        %v2076 = vmul.f32 %v1564, %v2075
        %v2077 = vmul.f32 %v1565, %v2075
        %v2078 = vmul.f32 %v1566, %v2075
        %2082 = vrot.lane.b32.xlu0 %v2076, 126
        %v2083 = vpop.permute.xlu0 %2082
        %2084 = vrot.lane.b32.xlu0 %v2077, 126
        %v2085 = vpop.permute.xlu0 %2084
        %2086 = vrot.lane.b32.xlu0 %v2078, 126
        %v2087 = vpop.permute.xlu0 %2086
        %v2091 = vadd.f32 %v1911, %v2083
        %v2092 = vadd.f32 %v1912, %v2085
        %v2093 = vadd.f32 %v1913, %v2087
        %s2094 = sld [smem:[#allocation2 + $0x8e]]
        %v2095 = vstv %s2094
        %v2096 = vmul.f32 %v1564, %v2095
        %v2097 = vmul.f32 %v1565, %v2095
        %v2098 = vmul.f32 %v1566, %v2095
        %2102 = vrot.lane.b32.xlu0 %v2096, 126
        %v2103 = vpop.permute.xlu0 %2102
        %2104 = vrot.lane.b32.xlu0 %v2097, 126
        %v2105 = vpop.permute.xlu0 %2104
        %2106 = vrot.lane.b32.xlu0 %v2098, 126
        %v2107 = vpop.permute.xlu0 %2106
        %v2111 = vadd.f32 %v1931, %v2103
        %v2112 = vadd.f32 %v1932, %v2105
        %v2113 = vadd.f32 %v1933, %v2107
        %s2114 = sld [smem:[#allocation2 + $0x10e]]
        %v2115 = vstv %s2114
        %v2116 = vmul.f32 %v1564, %v2115
        %v2117 = vmul.f32 %v1565, %v2115
        %v2118 = vmul.f32 %v1566, %v2115
        %2122 = vrot.lane.b32.xlu0 %v2116, 126
        %v2123 = vpop.permute.xlu0 %2122
        %2124 = vrot.lane.b32.xlu0 %v2117, 126
        %v2125 = vpop.permute.xlu0 %2124
        %2126 = vrot.lane.b32.xlu0 %v2118, 126
        %v2127 = vpop.permute.xlu0 %2126
        %v2131 = vadd.f32 %v1951, %v2123
        %v2132 = vadd.f32 %v1952, %v2125
        %v2133 = vadd.f32 %v1953, %v2127
        %s2134 = sld [smem:[#allocation2 + $0x18e]]
        %v2135 = vstv %s2134
        %v2136 = vmul.f32 %v1564, %v2135
        %v2137 = vmul.f32 %v1565, %v2135
        %v2138 = vmul.f32 %v1566, %v2135
        %2142 = vrot.lane.b32.xlu0 %v2136, 126
        %v2143 = vpop.permute.xlu0 %2142
        %2144 = vrot.lane.b32.xlu0 %v2137, 126
        %v2145 = vpop.permute.xlu0 %2144
        %2146 = vrot.lane.b32.xlu0 %v2138, 126
        %v2147 = vpop.permute.xlu0 %2146
        %v2151 = vadd.f32 %v1971, %v2143
        %v2152 = vadd.f32 %v1972, %v2145
        %v2153 = vadd.f32 %v1973, %v2147
        %s2154 = sld [smem:[#allocation2 + $0x20e]]
        %v2155 = vstv %s2154
        %v2156 = vmul.f32 %v1564, %v2155
        %v2157 = vmul.f32 %v1565, %v2155
        %v2158 = vmul.f32 %v1566, %v2155
        %2162 = vrot.lane.b32.xlu0 %v2156, 126
        %v2163 = vpop.permute.xlu0 %2162
        %2164 = vrot.lane.b32.xlu0 %v2157, 126
        %v2165 = vpop.permute.xlu0 %2164
        %2166 = vrot.lane.b32.xlu0 %v2158, 126
        %v2167 = vpop.permute.xlu0 %2166
        %v2171 = vadd.f32 %v1991, %v2163
        %v2172 = vadd.f32 %v1992, %v2165
        %v2173 = vadd.f32 %v1993, %v2167
        %s2174 = sld [smem:[#allocation2 + $0x28e]]
        %v2175 = vstv %s2174
        %v2176 = vmul.f32 %v1564, %v2175
        %v2177 = vmul.f32 %v1565, %v2175
        %v2178 = vmul.f32 %v1566, %v2175
        %2182 = vrot.lane.b32.xlu0 %v2176, 126
        %v2183 = vpop.permute.xlu0 %2182
        %2184 = vrot.lane.b32.xlu0 %v2177, 126
        %v2185 = vpop.permute.xlu0 %2184
        %2186 = vrot.lane.b32.xlu0 %v2178, 126
        %v2187 = vpop.permute.xlu0 %2186
        %v2191 = vadd.f32 %v2011, %v2183
        %v2192 = vadd.f32 %v2012, %v2185
        %v2193 = vadd.f32 %v2013, %v2187
        %s2194 = sld [smem:[#allocation2 + $0x30e]]
        %v2195 = vstv %s2194
        %v2196 = vmul.f32 %v1564, %v2195
        %v2197 = vmul.f32 %v1565, %v2195
        %v2198 = vmul.f32 %v1566, %v2195
        %2202 = vrot.lane.b32.xlu0 %v2196, 126
        %v2203 = vpop.permute.xlu0 %2202
        %2204 = vrot.lane.b32.xlu0 %v2197, 126
        %v2205 = vpop.permute.xlu0 %2204
        %2206 = vrot.lane.b32.xlu0 %v2198, 126
        %v2207 = vpop.permute.xlu0 %2206
        %v2211 = vadd.f32 %v2031, %v2203
        %v2212 = vadd.f32 %v2032, %v2205
        %v2213 = vadd.f32 %v2033, %v2207
        %s2214 = sld [smem:[#allocation2 + $0x38e]]
        %v2215 = vstv %s2214
        %v2216 = vmul.f32 %v1564, %v2215
        %v2217 = vmul.f32 %v1565, %v2215
        %v2218 = vmul.f32 %v1566, %v2215
        %2222 = vrot.lane.b32.xlu0 %v2216, 126
        %v2223 = vpop.permute.xlu0 %2222
        %2224 = vrot.lane.b32.xlu0 %v2217, 126
        %v2225 = vpop.permute.xlu0 %2224
        %2226 = vrot.lane.b32.xlu0 %v2218, 126
        %v2227 = vpop.permute.xlu0 %2226
        %v2231 = vadd.f32 %v2051, %v2223
        %v2232 = vadd.f32 %v2052, %v2225
        %v2233 = vadd.f32 %v2053, %v2227
        %s2234 = sld [smem:[#allocation2 + $0x40e]]
        %v2235 = vstv %s2234
        %v2236 = vmul.f32 %v1564, %v2235
        %v2237 = vmul.f32 %v1565, %v2235
        %v2238 = vmul.f32 %v1566, %v2235
        %2242 = vrot.lane.b32.xlu0 %v2236, 126
        %v2243 = vpop.permute.xlu0 %2242
        %2244 = vrot.lane.b32.xlu0 %v2237, 126
        %v2245 = vpop.permute.xlu0 %2244
        %2246 = vrot.lane.b32.xlu0 %v2238, 126
        %v2247 = vpop.permute.xlu0 %2246
        %v2251 = vadd.f32 %v2071, %v2243
        %v2252 = vadd.f32 %v2072, %v2245
        %v2253 = vadd.f32 %v2073, %v2247
        %v2254 = vld [vmem:[%s872 + $0x1] sm:$0xff]
        %v2255 = vld [vmem:[%s872 + $0x41] sm:$0xff]
        %v2256 = vld [vmem:[%s872 + $0x81] sm:$0xff]
        %s2257 = sld [smem:[#allocation2 + $0xf]]
        %v2258 = vstv %s2257
        %v2259 = vmul.f32 %v2254, %v2258
        %v2260 = vmul.f32 %v2255, %v2258
        %v2261 = vmul.f32 %v2256, %v2258
        %v2262 = vadd.f32 %v2091, %v2259
        %v2263 = vadd.f32 %v2092, %v2260
        %v2264 = vadd.f32 %v2093, %v2261
        %s2265 = sld [smem:[#allocation2 + $0x8f]]
        %v2266 = vstv %s2265
        %v2267 = vmul.f32 %v2254, %v2266
        %v2268 = vmul.f32 %v2255, %v2266
        %v2269 = vmul.f32 %v2256, %v2266
        %v2270 = vadd.f32 %v2111, %v2267
        %v2271 = vadd.f32 %v2112, %v2268
        %v2272 = vadd.f32 %v2113, %v2269
        %s2273 = sld [smem:[#allocation2 + $0x10f]]
        %v2274 = vstv %s2273
        %v2275 = vmul.f32 %v2254, %v2274
        %v2276 = vmul.f32 %v2255, %v2274
        %v2277 = vmul.f32 %v2256, %v2274
        %v2278 = vadd.f32 %v2131, %v2275
        %v2279 = vadd.f32 %v2132, %v2276
        %v2280 = vadd.f32 %v2133, %v2277
        %s2281 = sld [smem:[#allocation2 + $0x18f]]
        %v2282 = vstv %s2281
        %v2283 = vmul.f32 %v2254, %v2282
        %v2284 = vmul.f32 %v2255, %v2282
        %v2285 = vmul.f32 %v2256, %v2282
        %v2286 = vadd.f32 %v2151, %v2283
        %v2287 = vadd.f32 %v2152, %v2284
        %v2288 = vadd.f32 %v2153, %v2285
        %s2289 = sld [smem:[#allocation2 + $0x20f]]
        %v2290 = vstv %s2289
        %v2291 = vmul.f32 %v2254, %v2290
        %v2292 = vmul.f32 %v2255, %v2290
        %v2293 = vmul.f32 %v2256, %v2290
        %v2294 = vadd.f32 %v2171, %v2291
        %v2295 = vadd.f32 %v2172, %v2292
        %v2296 = vadd.f32 %v2173, %v2293
        %s2297 = sld [smem:[#allocation2 + $0x28f]]
        %v2298 = vstv %s2297
        %v2299 = vmul.f32 %v2254, %v2298
        %v2300 = vmul.f32 %v2255, %v2298
        %v2301 = vmul.f32 %v2256, %v2298
        %v2302 = vadd.f32 %v2191, %v2299
        %v2303 = vadd.f32 %v2192, %v2300
        %v2304 = vadd.f32 %v2193, %v2301
        %s2305 = sld [smem:[#allocation2 + $0x30f]]
        %v2306 = vstv %s2305
        %v2307 = vmul.f32 %v2254, %v2306
        %v2308 = vmul.f32 %v2255, %v2306
        %v2309 = vmul.f32 %v2256, %v2306
        %v2310 = vadd.f32 %v2211, %v2307
        %v2311 = vadd.f32 %v2212, %v2308
        %v2312 = vadd.f32 %v2213, %v2309
        %s2313 = sld [smem:[#allocation2 + $0x38f]]
        %v2314 = vstv %s2313
        %v2315 = vmul.f32 %v2254, %v2314
        %v2316 = vmul.f32 %v2255, %v2314
        %v2317 = vmul.f32 %v2256, %v2314
        %v2318 = vadd.f32 %v2231, %v2315
        %v2319 = vadd.f32 %v2232, %v2316
        %v2320 = vadd.f32 %v2233, %v2317
        %s2321 = sld [smem:[#allocation2 + $0x40f]]
        %v2322 = vstv %s2321
        %v2323 = vmul.f32 %v2254, %v2322
        %v2324 = vmul.f32 %v2255, %v2322
        %v2325 = vmul.f32 %v2256, %v2322
        %v2326 = vadd.f32 %v2251, %v2323
        %v2327 = vadd.f32 %v2252, %v2324
        %v2328 = vadd.f32 %v2253, %v2325
        %v2329 = vld [vmem:[%s948 + $0x1] sm:$0xff]
        %v2330 = vld [vmem:[%s948 + $0x41] sm:$0xff]
        %v2331 = vld [vmem:[%s948 + $0x81] sm:$0xff]
        %s2332 = sld [smem:[#allocation2 + $0x10]]
        %v2333 = vstv %s2332
        %v2334 = vmul.f32 %v2329, %v2333
        %v2335 = vmul.f32 %v2330, %v2333
        %v2336 = vmul.f32 %v2331, %v2333
        %v2337 = vadd.f32 %v2262, %v2334
        %v2338 = vadd.f32 %v2263, %v2335
        %v2339 = vadd.f32 %v2264, %v2336
        %s2340 = sld [smem:[#allocation2 + $0x90]]
        %v2341 = vstv %s2340
        %v2342 = vmul.f32 %v2329, %v2341
        %v2343 = vmul.f32 %v2330, %v2341
        %v2344 = vmul.f32 %v2331, %v2341
        %v2345 = vadd.f32 %v2270, %v2342
        %v2346 = vadd.f32 %v2271, %v2343
        %v2347 = vadd.f32 %v2272, %v2344
        %s2348 = sld [smem:[#allocation2 + $0x110]]
        %v2349 = vstv %s2348
        %v2350 = vmul.f32 %v2329, %v2349
        %v2351 = vmul.f32 %v2330, %v2349
        %v2352 = vmul.f32 %v2331, %v2349
        %v2353 = vadd.f32 %v2278, %v2350
        %v2354 = vadd.f32 %v2279, %v2351
        %v2355 = vadd.f32 %v2280, %v2352
        %s2356 = sld [smem:[#allocation2 + $0x190]]
        %v2357 = vstv %s2356
        %v2358 = vmul.f32 %v2329, %v2357
        %v2359 = vmul.f32 %v2330, %v2357
        %v2360 = vmul.f32 %v2331, %v2357
        %v2361 = vadd.f32 %v2286, %v2358
        %v2362 = vadd.f32 %v2287, %v2359
        %v2363 = vadd.f32 %v2288, %v2360
        %s2364 = sld [smem:[#allocation2 + $0x210]]
        %v2365 = vstv %s2364
        %v2366 = vmul.f32 %v2329, %v2365
        %v2367 = vmul.f32 %v2330, %v2365
        %v2368 = vmul.f32 %v2331, %v2365
        %v2369 = vadd.f32 %v2294, %v2366
        %v2370 = vadd.f32 %v2295, %v2367
        %v2371 = vadd.f32 %v2296, %v2368
        %s2372 = sld [smem:[#allocation2 + $0x290]]
        %v2373 = vstv %s2372
        %v2374 = vmul.f32 %v2329, %v2373
        %v2375 = vmul.f32 %v2330, %v2373
        %v2376 = vmul.f32 %v2331, %v2373
        %v2377 = vadd.f32 %v2302, %v2374
        %v2378 = vadd.f32 %v2303, %v2375
        %v2379 = vadd.f32 %v2304, %v2376
        %s2380 = sld [smem:[#allocation2 + $0x310]]
        %v2381 = vstv %s2380
        %v2382 = vmul.f32 %v2329, %v2381
        %v2383 = vmul.f32 %v2330, %v2381
        %v2384 = vmul.f32 %v2331, %v2381
        %v2385 = vadd.f32 %v2310, %v2382
        %v2386 = vadd.f32 %v2311, %v2383
        %v2387 = vadd.f32 %v2312, %v2384
        %s2388 = sld [smem:[#allocation2 + $0x390]]
        %v2389 = vstv %s2388
        %v2390 = vmul.f32 %v2329, %v2389
        %v2391 = vmul.f32 %v2330, %v2389
        %v2392 = vmul.f32 %v2331, %v2389
        %v2393 = vadd.f32 %v2318, %v2390
        %v2394 = vadd.f32 %v2319, %v2391
        %v2395 = vadd.f32 %v2320, %v2392
        %s2396 = sld [smem:[#allocation2 + $0x410]]
        %v2397 = vstv %s2396
        %v2398 = vmul.f32 %v2329, %v2397
        %v2399 = vmul.f32 %v2330, %v2397
        %v2400 = vmul.f32 %v2331, %v2397
        %v2401 = vadd.f32 %v2326, %v2398
        %v2402 = vadd.f32 %v2327, %v2399
        %v2403 = vadd.f32 %v2328, %v2400
        %s2404 = sld [smem:[#allocation2 + $0x11]]
        %v2405 = vstv %s2404
        %v2406 = vmul.f32 %v2254, %v2405
        %v2407 = vmul.f32 %v2255, %v2405
        %v2408 = vmul.f32 %v2256, %v2405
        %2412 = vrot.lane.b32.xlu0 %v2406, 127
        %v2413 = vpop.permute.xlu0 %2412
        %2414 = vrot.lane.b32.xlu0 %v2407, 127
        %v2415 = vpop.permute.xlu0 %2414
        %2416 = vrot.lane.b32.xlu0 %v2408, 127
        %v2417 = vpop.permute.xlu0 %2416
        %v2421 = vadd.f32 %v2337, %v2413
        %v2422 = vadd.f32 %v2338, %v2415
        %v2423 = vadd.f32 %v2339, %v2417
        %s2424 = sld [smem:[#allocation2 + $0x91]]
        %v2425 = vstv %s2424
        %v2426 = vmul.f32 %v2254, %v2425
        %v2427 = vmul.f32 %v2255, %v2425
        %v2428 = vmul.f32 %v2256, %v2425
        %2432 = vrot.lane.b32.xlu0 %v2426, 127
        %v2433 = vpop.permute.xlu0 %2432
        %2434 = vrot.lane.b32.xlu0 %v2427, 127
        %v2435 = vpop.permute.xlu0 %2434
        %2436 = vrot.lane.b32.xlu0 %v2428, 127
        %v2437 = vpop.permute.xlu0 %2436
        %v2441 = vadd.f32 %v2345, %v2433
        %v2442 = vadd.f32 %v2346, %v2435
        %v2443 = vadd.f32 %v2347, %v2437
        %s2444 = sld [smem:[#allocation2 + $0x111]]
        %v2445 = vstv %s2444
        %v2446 = vmul.f32 %v2254, %v2445
        %v2447 = vmul.f32 %v2255, %v2445
        %v2448 = vmul.f32 %v2256, %v2445
        %2452 = vrot.lane.b32.xlu0 %v2446, 127
        %v2453 = vpop.permute.xlu0 %2452
        %2454 = vrot.lane.b32.xlu0 %v2447, 127
        %v2455 = vpop.permute.xlu0 %2454
        %2456 = vrot.lane.b32.xlu0 %v2448, 127
        %v2457 = vpop.permute.xlu0 %2456
        %v2461 = vadd.f32 %v2353, %v2453
        %v2462 = vadd.f32 %v2354, %v2455
        %v2463 = vadd.f32 %v2355, %v2457
        %s2464 = sld [smem:[#allocation2 + $0x191]]
        %v2465 = vstv %s2464
        %v2466 = vmul.f32 %v2254, %v2465
        %v2467 = vmul.f32 %v2255, %v2465
        %v2468 = vmul.f32 %v2256, %v2465
        %2472 = vrot.lane.b32.xlu0 %v2466, 127
        %v2473 = vpop.permute.xlu0 %2472
        %2474 = vrot.lane.b32.xlu0 %v2467, 127
        %v2475 = vpop.permute.xlu0 %2474
        %2476 = vrot.lane.b32.xlu0 %v2468, 127
        %v2477 = vpop.permute.xlu0 %2476
        %v2481 = vadd.f32 %v2361, %v2473
        %v2482 = vadd.f32 %v2362, %v2475
        %v2483 = vadd.f32 %v2363, %v2477
        %s2484 = sld [smem:[#allocation2 + $0x211]]
        %v2485 = vstv %s2484
        %v2486 = vmul.f32 %v2254, %v2485
        %v2487 = vmul.f32 %v2255, %v2485
        %v2488 = vmul.f32 %v2256, %v2485
        %2492 = vrot.lane.b32.xlu0 %v2486, 127
        %v2493 = vpop.permute.xlu0 %2492
        %2494 = vrot.lane.b32.xlu0 %v2487, 127
        %v2495 = vpop.permute.xlu0 %2494
        %2496 = vrot.lane.b32.xlu0 %v2488, 127
        %v2497 = vpop.permute.xlu0 %2496
        %v2501 = vadd.f32 %v2369, %v2493
        %v2502 = vadd.f32 %v2370, %v2495
        %v2503 = vadd.f32 %v2371, %v2497
        %s2504 = sld [smem:[#allocation2 + $0x291]]
        %v2505 = vstv %s2504
        %v2506 = vmul.f32 %v2254, %v2505
        %v2507 = vmul.f32 %v2255, %v2505
        %v2508 = vmul.f32 %v2256, %v2505
        %2512 = vrot.lane.b32.xlu0 %v2506, 127
        %v2513 = vpop.permute.xlu0 %2512
        %2514 = vrot.lane.b32.xlu0 %v2507, 127
        %v2515 = vpop.permute.xlu0 %2514
        %2516 = vrot.lane.b32.xlu0 %v2508, 127
        %v2517 = vpop.permute.xlu0 %2516
        %v2521 = vadd.f32 %v2377, %v2513
        %v2522 = vadd.f32 %v2378, %v2515
        %v2523 = vadd.f32 %v2379, %v2517
        %s2524 = sld [smem:[#allocation2 + $0x311]]
        %v2525 = vstv %s2524
        %v2526 = vmul.f32 %v2254, %v2525
        %v2527 = vmul.f32 %v2255, %v2525
        %v2528 = vmul.f32 %v2256, %v2525
        %2532 = vrot.lane.b32.xlu0 %v2526, 127
        %v2533 = vpop.permute.xlu0 %2532
        %2534 = vrot.lane.b32.xlu0 %v2527, 127
        %v2535 = vpop.permute.xlu0 %2534
        %2536 = vrot.lane.b32.xlu0 %v2528, 127
        %v2537 = vpop.permute.xlu0 %2536
        %v2541 = vadd.f32 %v2385, %v2533
        %v2542 = vadd.f32 %v2386, %v2535
        %v2543 = vadd.f32 %v2387, %v2537
        %s2544 = sld [smem:[#allocation2 + $0x391]]
        %v2545 = vstv %s2544
        %v2546 = vmul.f32 %v2254, %v2545
        %v2547 = vmul.f32 %v2255, %v2545
        %v2548 = vmul.f32 %v2256, %v2545
        %2552 = vrot.lane.b32.xlu0 %v2546, 127
        %v2553 = vpop.permute.xlu0 %2552
        %2554 = vrot.lane.b32.xlu0 %v2547, 127
        %v2555 = vpop.permute.xlu0 %2554
        %2556 = vrot.lane.b32.xlu0 %v2548, 127
        %v2557 = vpop.permute.xlu0 %2556
        %v2561 = vadd.f32 %v2393, %v2553
        %v2562 = vadd.f32 %v2394, %v2555
        %v2563 = vadd.f32 %v2395, %v2557
        %s2564 = sld [smem:[#allocation2 + $0x411]]
        %v2565 = vstv %s2564
        %v2566 = vmul.f32 %v2254, %v2565
        %v2567 = vmul.f32 %v2255, %v2565
        %v2568 = vmul.f32 %v2256, %v2565
        %2572 = vrot.lane.b32.xlu0 %v2566, 127
        %v2573 = vpop.permute.xlu0 %2572
        %2574 = vrot.lane.b32.xlu0 %v2567, 127
        %v2575 = vpop.permute.xlu0 %2574
        %2576 = vrot.lane.b32.xlu0 %v2568, 127
        %v2577 = vpop.permute.xlu0 %2576
        %v2581 = vadd.f32 %v2401, %v2573
        %v2582 = vadd.f32 %v2402, %v2575
        %v2583 = vadd.f32 %v2403, %v2577
        %s2584 = sld [smem:[#allocation2 + $0x12]]
        %v2585 = vstv %s2584
        %v2586 = vmul.f32 %v2329, %v2585
        %v2587 = vmul.f32 %v2330, %v2585
        %v2588 = vmul.f32 %v2331, %v2585
        %2592 = vrot.lane.b32.xlu0 %v2586, 127
        %v2593 = vpop.permute.xlu0 %2592
        %2594 = vrot.lane.b32.xlu0 %v2587, 127
        %v2595 = vpop.permute.xlu0 %2594
        %2596 = vrot.lane.b32.xlu0 %v2588, 127
        %v2597 = vpop.permute.xlu0 %2596
        %v2601 = vadd.f32 %v2421, %v2593
        %v2602 = vadd.f32 %v2422, %v2595
        %v2603 = vadd.f32 %v2423, %v2597
        %s2604 = sld [smem:[#allocation2 + $0x92]]
        %v2605 = vstv %s2604
        %v2606 = vmul.f32 %v2329, %v2605
        %v2607 = vmul.f32 %v2330, %v2605
        %v2608 = vmul.f32 %v2331, %v2605
        %2612 = vrot.lane.b32.xlu0 %v2606, 127
        %v2613 = vpop.permute.xlu0 %2612
        %2614 = vrot.lane.b32.xlu0 %v2607, 127
        %v2615 = vpop.permute.xlu0 %2614
        %2616 = vrot.lane.b32.xlu0 %v2608, 127
        %v2617 = vpop.permute.xlu0 %2616
        %v2621 = vadd.f32 %v2441, %v2613
        %v2622 = vadd.f32 %v2442, %v2615
        %v2623 = vadd.f32 %v2443, %v2617
        %s2624 = sld [smem:[#allocation2 + $0x112]]
        %v2625 = vstv %s2624
        %v2626 = vmul.f32 %v2329, %v2625
        %v2627 = vmul.f32 %v2330, %v2625
        %v2628 = vmul.f32 %v2331, %v2625
        %2632 = vrot.lane.b32.xlu0 %v2626, 127
        %v2633 = vpop.permute.xlu0 %2632
        %2634 = vrot.lane.b32.xlu0 %v2627, 127
        %v2635 = vpop.permute.xlu0 %2634
        %2636 = vrot.lane.b32.xlu0 %v2628, 127
        %v2637 = vpop.permute.xlu0 %2636
        %v2641 = vadd.f32 %v2461, %v2633
        %v2642 = vadd.f32 %v2462, %v2635
        %v2643 = vadd.f32 %v2463, %v2637
        %s2644 = sld [smem:[#allocation2 + $0x192]]
        %v2645 = vstv %s2644
        %v2646 = vmul.f32 %v2329, %v2645
        %v2647 = vmul.f32 %v2330, %v2645
        %v2648 = vmul.f32 %v2331, %v2645
        %2652 = vrot.lane.b32.xlu0 %v2646, 127
        %v2653 = vpop.permute.xlu0 %2652
        %2654 = vrot.lane.b32.xlu0 %v2647, 127
        %v2655 = vpop.permute.xlu0 %2654
        %2656 = vrot.lane.b32.xlu0 %v2648, 127
        %v2657 = vpop.permute.xlu0 %2656
        %v2661 = vadd.f32 %v2481, %v2653
        %v2662 = vadd.f32 %v2482, %v2655
        %v2663 = vadd.f32 %v2483, %v2657
        %s2664 = sld [smem:[#allocation2 + $0x212]]
        %v2665 = vstv %s2664
        %v2666 = vmul.f32 %v2329, %v2665
        %v2667 = vmul.f32 %v2330, %v2665
        %v2668 = vmul.f32 %v2331, %v2665
        %2672 = vrot.lane.b32.xlu0 %v2666, 127
        %v2673 = vpop.permute.xlu0 %2672
        %2674 = vrot.lane.b32.xlu0 %v2667, 127
        %v2675 = vpop.permute.xlu0 %2674
        %2676 = vrot.lane.b32.xlu0 %v2668, 127
        %v2677 = vpop.permute.xlu0 %2676
        %v2681 = vadd.f32 %v2501, %v2673
        %v2682 = vadd.f32 %v2502, %v2675
        %v2683 = vadd.f32 %v2503, %v2677
        %s2684 = sld [smem:[#allocation2 + $0x292]]
        %v2685 = vstv %s2684
        %v2686 = vmul.f32 %v2329, %v2685
        %v2687 = vmul.f32 %v2330, %v2685
        %v2688 = vmul.f32 %v2331, %v2685
        %2692 = vrot.lane.b32.xlu0 %v2686, 127
        %v2693 = vpop.permute.xlu0 %2692
        %2694 = vrot.lane.b32.xlu0 %v2687, 127
        %v2695 = vpop.permute.xlu0 %2694
        %2696 = vrot.lane.b32.xlu0 %v2688, 127
        %v2697 = vpop.permute.xlu0 %2696
        %v2701 = vadd.f32 %v2521, %v2693
        %v2702 = vadd.f32 %v2522, %v2695
        %v2703 = vadd.f32 %v2523, %v2697
        %s2704 = sld [smem:[#allocation2 + $0x312]]
        %v2705 = vstv %s2704
        %v2706 = vmul.f32 %v2329, %v2705
        %v2707 = vmul.f32 %v2330, %v2705
        %v2708 = vmul.f32 %v2331, %v2705
        %2712 = vrot.lane.b32.xlu0 %v2706, 127
        %v2713 = vpop.permute.xlu0 %2712
        %2714 = vrot.lane.b32.xlu0 %v2707, 127
        %v2715 = vpop.permute.xlu0 %2714
        %2716 = vrot.lane.b32.xlu0 %v2708, 127
        %v2717 = vpop.permute.xlu0 %2716
        %v2721 = vadd.f32 %v2541, %v2713
        %v2722 = vadd.f32 %v2542, %v2715
        %v2723 = vadd.f32 %v2543, %v2717
        %s2724 = sld [smem:[#allocation2 + $0x392]]
        %v2725 = vstv %s2724
        %v2726 = vmul.f32 %v2329, %v2725
        %v2727 = vmul.f32 %v2330, %v2725
        %v2728 = vmul.f32 %v2331, %v2725
        %2732 = vrot.lane.b32.xlu0 %v2726, 127
        %v2733 = vpop.permute.xlu0 %2732
        %2734 = vrot.lane.b32.xlu0 %v2727, 127
        %v2735 = vpop.permute.xlu0 %2734
        %2736 = vrot.lane.b32.xlu0 %v2728, 127
        %v2737 = vpop.permute.xlu0 %2736
        %v2741 = vadd.f32 %v2561, %v2733
        %v2742 = vadd.f32 %v2562, %v2735
        %v2743 = vadd.f32 %v2563, %v2737
        %s2744 = sld [smem:[#allocation2 + $0x412]]
        %v2745 = vstv %s2744
        %v2746 = vmul.f32 %v2329, %v2745
        %v2747 = vmul.f32 %v2330, %v2745
        %v2748 = vmul.f32 %v2331, %v2745
        %2752 = vrot.lane.b32.xlu0 %v2746, 127
        %v2753 = vpop.permute.xlu0 %2752
        %2754 = vrot.lane.b32.xlu0 %v2747, 127
        %v2755 = vpop.permute.xlu0 %2754
        %2756 = vrot.lane.b32.xlu0 %v2748, 127
        %v2757 = vpop.permute.xlu0 %2756
        %v2761 = vadd.f32 %v2581, %v2753
        %v2762 = vadd.f32 %v2582, %v2755
        %v2763 = vadd.f32 %v2583, %v2757
        %s2764 = sld [smem:[#allocation2 + $0x13]]
        %v2765 = vstv %s2764
        %v2766 = vmul.f32 %v2254, %v2765
        %v2767 = vmul.f32 %v2255, %v2765
        %v2768 = vmul.f32 %v2256, %v2765
        %2772 = vrot.lane.b32.xlu0 %v2766, 126
        %v2773 = vpop.permute.xlu0 %2772
        %2774 = vrot.lane.b32.xlu0 %v2767, 126
        %v2775 = vpop.permute.xlu0 %2774
        %2776 = vrot.lane.b32.xlu0 %v2768, 126
        %v2777 = vpop.permute.xlu0 %2776
        %v2781 = vadd.f32 %v2601, %v2773
        %v2782 = vadd.f32 %v2602, %v2775
        %v2783 = vadd.f32 %v2603, %v2777
        %s2784 = sld [smem:[#allocation2 + $0x93]]
        %v2785 = vstv %s2784
        %v2786 = vmul.f32 %v2254, %v2785
        %v2787 = vmul.f32 %v2255, %v2785
        %v2788 = vmul.f32 %v2256, %v2785
        %2792 = vrot.lane.b32.xlu0 %v2786, 126
        %v2793 = vpop.permute.xlu0 %2792
        %2794 = vrot.lane.b32.xlu0 %v2787, 126
        %v2795 = vpop.permute.xlu0 %2794
        %2796 = vrot.lane.b32.xlu0 %v2788, 126
        %v2797 = vpop.permute.xlu0 %2796
        %v2801 = vadd.f32 %v2621, %v2793
        %v2802 = vadd.f32 %v2622, %v2795
        %v2803 = vadd.f32 %v2623, %v2797
        %s2804 = sld [smem:[#allocation2 + $0x113]]
        %v2805 = vstv %s2804
        %v2806 = vmul.f32 %v2254, %v2805
        %v2807 = vmul.f32 %v2255, %v2805
        %v2808 = vmul.f32 %v2256, %v2805
        %2812 = vrot.lane.b32.xlu0 %v2806, 126
        %v2813 = vpop.permute.xlu0 %2812
        %2814 = vrot.lane.b32.xlu0 %v2807, 126
        %v2815 = vpop.permute.xlu0 %2814
        %2816 = vrot.lane.b32.xlu0 %v2808, 126
        %v2817 = vpop.permute.xlu0 %2816
        %v2821 = vadd.f32 %v2641, %v2813
        %v2822 = vadd.f32 %v2642, %v2815
        %v2823 = vadd.f32 %v2643, %v2817
        %s2824 = sld [smem:[#allocation2 + $0x193]]
        %v2825 = vstv %s2824
        %v2826 = vmul.f32 %v2254, %v2825
        %v2827 = vmul.f32 %v2255, %v2825
        %v2828 = vmul.f32 %v2256, %v2825
        %2832 = vrot.lane.b32.xlu0 %v2826, 126
        %v2833 = vpop.permute.xlu0 %2832
        %2834 = vrot.lane.b32.xlu0 %v2827, 126
        %v2835 = vpop.permute.xlu0 %2834
        %2836 = vrot.lane.b32.xlu0 %v2828, 126
        %v2837 = vpop.permute.xlu0 %2836
        %v2841 = vadd.f32 %v2661, %v2833
        %v2842 = vadd.f32 %v2662, %v2835
        %v2843 = vadd.f32 %v2663, %v2837
        %s2844 = sld [smem:[#allocation2 + $0x213]]
        %v2845 = vstv %s2844
        %v2846 = vmul.f32 %v2254, %v2845
        %v2847 = vmul.f32 %v2255, %v2845
        %v2848 = vmul.f32 %v2256, %v2845
        %2852 = vrot.lane.b32.xlu0 %v2846, 126
        %v2853 = vpop.permute.xlu0 %2852
        %2854 = vrot.lane.b32.xlu0 %v2847, 126
        %v2855 = vpop.permute.xlu0 %2854
        %2856 = vrot.lane.b32.xlu0 %v2848, 126
        %v2857 = vpop.permute.xlu0 %2856
        %v2861 = vadd.f32 %v2681, %v2853
        %v2862 = vadd.f32 %v2682, %v2855
        %v2863 = vadd.f32 %v2683, %v2857
        %s2864 = sld [smem:[#allocation2 + $0x293]]
        %v2865 = vstv %s2864
        %v2866 = vmul.f32 %v2254, %v2865
        %v2867 = vmul.f32 %v2255, %v2865
        %v2868 = vmul.f32 %v2256, %v2865
        %2872 = vrot.lane.b32.xlu0 %v2866, 126
        %v2873 = vpop.permute.xlu0 %2872
        %2874 = vrot.lane.b32.xlu0 %v2867, 126
        %v2875 = vpop.permute.xlu0 %2874
        %2876 = vrot.lane.b32.xlu0 %v2868, 126
        %v2877 = vpop.permute.xlu0 %2876
        %v2881 = vadd.f32 %v2701, %v2873
        %v2882 = vadd.f32 %v2702, %v2875
        %v2883 = vadd.f32 %v2703, %v2877
        %s2884 = sld [smem:[#allocation2 + $0x313]]
        %v2885 = vstv %s2884
        %v2886 = vmul.f32 %v2254, %v2885
        %v2887 = vmul.f32 %v2255, %v2885
        %v2888 = vmul.f32 %v2256, %v2885
        %2892 = vrot.lane.b32.xlu0 %v2886, 126
        %v2893 = vpop.permute.xlu0 %2892
        %2894 = vrot.lane.b32.xlu0 %v2887, 126
        %v2895 = vpop.permute.xlu0 %2894
        %2896 = vrot.lane.b32.xlu0 %v2888, 126
        %v2897 = vpop.permute.xlu0 %2896
        %v2901 = vadd.f32 %v2721, %v2893
        %v2902 = vadd.f32 %v2722, %v2895
        %v2903 = vadd.f32 %v2723, %v2897
        %s2904 = sld [smem:[#allocation2 + $0x393]]
        %v2905 = vstv %s2904
        %v2906 = vmul.f32 %v2254, %v2905
        %v2907 = vmul.f32 %v2255, %v2905
        %v2908 = vmul.f32 %v2256, %v2905
        %2912 = vrot.lane.b32.xlu0 %v2906, 126
        %v2913 = vpop.permute.xlu0 %2912
        %2914 = vrot.lane.b32.xlu0 %v2907, 126
        %v2915 = vpop.permute.xlu0 %2914
        %2916 = vrot.lane.b32.xlu0 %v2908, 126
        %v2917 = vpop.permute.xlu0 %2916
        %v2921 = vadd.f32 %v2741, %v2913
        %v2922 = vadd.f32 %v2742, %v2915
        %v2923 = vadd.f32 %v2743, %v2917
        %s2924 = sld [smem:[#allocation2 + $0x413]]
        %v2925 = vstv %s2924
        %v2926 = vmul.f32 %v2254, %v2925
        %v2927 = vmul.f32 %v2255, %v2925
        %v2928 = vmul.f32 %v2256, %v2925
        %2932 = vrot.lane.b32.xlu0 %v2926, 126
        %v2933 = vpop.permute.xlu0 %2932
        %2934 = vrot.lane.b32.xlu0 %v2927, 126
        %v2935 = vpop.permute.xlu0 %2934
        %2936 = vrot.lane.b32.xlu0 %v2928, 126
        %v2937 = vpop.permute.xlu0 %2936
        %v2941 = vadd.f32 %v2761, %v2933
        %v2942 = vadd.f32 %v2762, %v2935
        %v2943 = vadd.f32 %v2763, %v2937
        %v2944 = vld [vmem:[%s199 + $0x2] sm:$0xff]
        %v2945 = vld [vmem:[%s199 + $0x42] sm:$0xff]
        %v2946 = vld [vmem:[%s199 + $0x82] sm:$0xff]
        %s2947 = sld [smem:[#allocation2 + $0x14]]
        %v2948 = vstv %s2947
        %v2949 = vmul.f32 %v2944, %v2948
        %v2950 = vmul.f32 %v2945, %v2948
        %v2951 = vmul.f32 %v2946, %v2948
        %v2952 = vadd.f32 %v2781, %v2949
        %v2953 = vadd.f32 %v2782, %v2950
        %v2954 = vadd.f32 %v2783, %v2951
        %s2955 = sld [smem:[#allocation2 + $0x94]]
        %v2956 = vstv %s2955
        %v2957 = vmul.f32 %v2944, %v2956
        %v2958 = vmul.f32 %v2945, %v2956
        %v2959 = vmul.f32 %v2946, %v2956
        %v2960 = vadd.f32 %v2801, %v2957
        %v2961 = vadd.f32 %v2802, %v2958
        %v2962 = vadd.f32 %v2803, %v2959
        %s2963 = sld [smem:[#allocation2 + $0x114]]
        %v2964 = vstv %s2963
        %v2965 = vmul.f32 %v2944, %v2964
        %v2966 = vmul.f32 %v2945, %v2964
        %v2967 = vmul.f32 %v2946, %v2964
        %v2968 = vadd.f32 %v2821, %v2965
        %v2969 = vadd.f32 %v2822, %v2966
        %v2970 = vadd.f32 %v2823, %v2967
        %s2971 = sld [smem:[#allocation2 + $0x194]]
        %v2972 = vstv %s2971
        %v2973 = vmul.f32 %v2944, %v2972
        %v2974 = vmul.f32 %v2945, %v2972
        %v2975 = vmul.f32 %v2946, %v2972
        %v2976 = vadd.f32 %v2841, %v2973
        %v2977 = vadd.f32 %v2842, %v2974
        %v2978 = vadd.f32 %v2843, %v2975
        %s2979 = sld [smem:[#allocation2 + $0x214]]
        %v2980 = vstv %s2979
        %v2981 = vmul.f32 %v2944, %v2980
        %v2982 = vmul.f32 %v2945, %v2980
        %v2983 = vmul.f32 %v2946, %v2980
        %v2984 = vadd.f32 %v2861, %v2981
        %v2985 = vadd.f32 %v2862, %v2982
        %v2986 = vadd.f32 %v2863, %v2983
        %s2987 = sld [smem:[#allocation2 + $0x294]]
        %v2988 = vstv %s2987
        %v2989 = vmul.f32 %v2944, %v2988
        %v2990 = vmul.f32 %v2945, %v2988
        %v2991 = vmul.f32 %v2946, %v2988
        %v2992 = vadd.f32 %v2881, %v2989
        %v2993 = vadd.f32 %v2882, %v2990
        %v2994 = vadd.f32 %v2883, %v2991
        %s2995 = sld [smem:[#allocation2 + $0x314]]
        %v2996 = vstv %s2995
        %v2997 = vmul.f32 %v2944, %v2996
        %v2998 = vmul.f32 %v2945, %v2996
        %v2999 = vmul.f32 %v2946, %v2996
        %v3000 = vadd.f32 %v2901, %v2997
        %v3001 = vadd.f32 %v2902, %v2998
        %v3002 = vadd.f32 %v2903, %v2999
        %s3003 = sld [smem:[#allocation2 + $0x394]]
        %v3004 = vstv %s3003
        %v3005 = vmul.f32 %v2944, %v3004
        %v3006 = vmul.f32 %v2945, %v3004
        %v3007 = vmul.f32 %v2946, %v3004
        %v3008 = vadd.f32 %v2921, %v3005
        %v3009 = vadd.f32 %v2922, %v3006
        %v3010 = vadd.f32 %v2923, %v3007
        %s3011 = sld [smem:[#allocation2 + $0x414]]
        %v3012 = vstv %s3011
        %v3013 = vmul.f32 %v2944, %v3012
        %v3014 = vmul.f32 %v2945, %v3012
        %v3015 = vmul.f32 %v2946, %v3012
        %v3016 = vadd.f32 %v2941, %v3013
        %v3017 = vadd.f32 %v2942, %v3014
        %v3018 = vadd.f32 %v2943, %v3015
        %v3019 = vld [vmem:[%s256 + $0x2] sm:$0xff]
        %v3020 = vld [vmem:[%s256 + $0x42] sm:$0xff]
        %v3021 = vld [vmem:[%s256 + $0x82] sm:$0xff]
        %s3022 = sld [smem:[#allocation2 + $0x15]]
        %v3023 = vstv %s3022
        %v3024 = vmul.f32 %v3019, %v3023
        %v3025 = vmul.f32 %v3020, %v3023
        %v3026 = vmul.f32 %v3021, %v3023
        %v3027 = vadd.f32 %v2952, %v3024
        %v3028 = vadd.f32 %v2953, %v3025
        %v3029 = vadd.f32 %v2954, %v3026
        %s3030 = sld [smem:[#allocation2 + $0x95]]
        %v3031 = vstv %s3030
        %v3032 = vmul.f32 %v3019, %v3031
        %v3033 = vmul.f32 %v3020, %v3031
        %v3034 = vmul.f32 %v3021, %v3031
        %v3035 = vadd.f32 %v2960, %v3032
        %v3036 = vadd.f32 %v2961, %v3033
        %v3037 = vadd.f32 %v2962, %v3034
        %s3038 = sld [smem:[#allocation2 + $0x115]]
        %v3039 = vstv %s3038
        %v3040 = vmul.f32 %v3019, %v3039
        %v3041 = vmul.f32 %v3020, %v3039
        %v3042 = vmul.f32 %v3021, %v3039
        %v3043 = vadd.f32 %v2968, %v3040
        %v3044 = vadd.f32 %v2969, %v3041
        %v3045 = vadd.f32 %v2970, %v3042
        %s3046 = sld [smem:[#allocation2 + $0x195]]
        %v3047 = vstv %s3046
        %v3048 = vmul.f32 %v3019, %v3047
        %v3049 = vmul.f32 %v3020, %v3047
        %v3050 = vmul.f32 %v3021, %v3047
        %v3051 = vadd.f32 %v2976, %v3048
        %v3052 = vadd.f32 %v2977, %v3049
        %v3053 = vadd.f32 %v2978, %v3050
        %s3054 = sld [smem:[#allocation2 + $0x215]]
        %v3055 = vstv %s3054
        %v3056 = vmul.f32 %v3019, %v3055
        %v3057 = vmul.f32 %v3020, %v3055
        %v3058 = vmul.f32 %v3021, %v3055
        %v3059 = vadd.f32 %v2984, %v3056
        %v3060 = vadd.f32 %v2985, %v3057
        %v3061 = vadd.f32 %v2986, %v3058
        %s3062 = sld [smem:[#allocation2 + $0x295]]
        %v3063 = vstv %s3062
        %v3064 = vmul.f32 %v3019, %v3063
        %v3065 = vmul.f32 %v3020, %v3063
        %v3066 = vmul.f32 %v3021, %v3063
        %v3067 = vadd.f32 %v2992, %v3064
        %v3068 = vadd.f32 %v2993, %v3065
        %v3069 = vadd.f32 %v2994, %v3066
        %s3070 = sld [smem:[#allocation2 + $0x315]]
        %v3071 = vstv %s3070
        %v3072 = vmul.f32 %v3019, %v3071
        %v3073 = vmul.f32 %v3020, %v3071
        %v3074 = vmul.f32 %v3021, %v3071
        %v3075 = vadd.f32 %v3000, %v3072
        %v3076 = vadd.f32 %v3001, %v3073
        %v3077 = vadd.f32 %v3002, %v3074
        %s3078 = sld [smem:[#allocation2 + $0x395]]
        %v3079 = vstv %s3078
        %v3080 = vmul.f32 %v3019, %v3079
        %v3081 = vmul.f32 %v3020, %v3079
        %v3082 = vmul.f32 %v3021, %v3079
        %v3083 = vadd.f32 %v3008, %v3080
        %v3084 = vadd.f32 %v3009, %v3081
        %v3085 = vadd.f32 %v3010, %v3082
        %s3086 = sld [smem:[#allocation2 + $0x415]]
        %v3087 = vstv %s3086
        %v3088 = vmul.f32 %v3019, %v3087
        %v3089 = vmul.f32 %v3020, %v3087
        %v3090 = vmul.f32 %v3021, %v3087
        %v3091 = vadd.f32 %v3016, %v3088
        %v3092 = vadd.f32 %v3017, %v3089
        %v3093 = vadd.f32 %v3018, %v3090
        %s3094 = sld [smem:[#allocation2 + $0x16]]
        %v3095 = vstv %s3094
        %v3096 = vmul.f32 %v2944, %v3095
        %v3097 = vmul.f32 %v2945, %v3095
        %v3098 = vmul.f32 %v2946, %v3095
        %3102 = vrot.lane.b32.xlu0 %v3096, 127
        %v3103 = vpop.permute.xlu0 %3102
        %3104 = vrot.lane.b32.xlu0 %v3097, 127
        %v3105 = vpop.permute.xlu0 %3104
        %3106 = vrot.lane.b32.xlu0 %v3098, 127
        %v3107 = vpop.permute.xlu0 %3106
        %v3111 = vadd.f32 %v3027, %v3103
        %v3112 = vadd.f32 %v3028, %v3105
        %v3113 = vadd.f32 %v3029, %v3107
        %s3114 = sld [smem:[#allocation2 + $0x96]]
        %v3115 = vstv %s3114
        %v3116 = vmul.f32 %v2944, %v3115
        %v3117 = vmul.f32 %v2945, %v3115
        %v3118 = vmul.f32 %v2946, %v3115
        %3122 = vrot.lane.b32.xlu0 %v3116, 127
        %v3123 = vpop.permute.xlu0 %3122
        %3124 = vrot.lane.b32.xlu0 %v3117, 127
        %v3125 = vpop.permute.xlu0 %3124
        %3126 = vrot.lane.b32.xlu0 %v3118, 127
        %v3127 = vpop.permute.xlu0 %3126
        %v3131 = vadd.f32 %v3035, %v3123
        %v3132 = vadd.f32 %v3036, %v3125
        %v3133 = vadd.f32 %v3037, %v3127
        %s3134 = sld [smem:[#allocation2 + $0x116]]
        %v3135 = vstv %s3134
        %v3136 = vmul.f32 %v2944, %v3135
        %v3137 = vmul.f32 %v2945, %v3135
        %v3138 = vmul.f32 %v2946, %v3135
        %3142 = vrot.lane.b32.xlu0 %v3136, 127
        %v3143 = vpop.permute.xlu0 %3142
        %3144 = vrot.lane.b32.xlu0 %v3137, 127
        %v3145 = vpop.permute.xlu0 %3144
        %3146 = vrot.lane.b32.xlu0 %v3138, 127
        %v3147 = vpop.permute.xlu0 %3146
        %v3151 = vadd.f32 %v3043, %v3143
        %v3152 = vadd.f32 %v3044, %v3145
        %v3153 = vadd.f32 %v3045, %v3147
        %s3154 = sld [smem:[#allocation2 + $0x196]]
        %v3155 = vstv %s3154
        %v3156 = vmul.f32 %v2944, %v3155
        %v3157 = vmul.f32 %v2945, %v3155
        %v3158 = vmul.f32 %v2946, %v3155
        %3162 = vrot.lane.b32.xlu0 %v3156, 127
        %v3163 = vpop.permute.xlu0 %3162
        %3164 = vrot.lane.b32.xlu0 %v3157, 127
        %v3165 = vpop.permute.xlu0 %3164
        %3166 = vrot.lane.b32.xlu0 %v3158, 127
        %v3167 = vpop.permute.xlu0 %3166
        %v3171 = vadd.f32 %v3051, %v3163
        %v3172 = vadd.f32 %v3052, %v3165
        %v3173 = vadd.f32 %v3053, %v3167
        %s3174 = sld [smem:[#allocation2 + $0x216]]
        %v3175 = vstv %s3174
        %v3176 = vmul.f32 %v2944, %v3175
        %v3177 = vmul.f32 %v2945, %v3175
        %v3178 = vmul.f32 %v2946, %v3175
        %3182 = vrot.lane.b32.xlu0 %v3176, 127
        %v3183 = vpop.permute.xlu0 %3182
        %3184 = vrot.lane.b32.xlu0 %v3177, 127
        %v3185 = vpop.permute.xlu0 %3184
        %3186 = vrot.lane.b32.xlu0 %v3178, 127
        %v3187 = vpop.permute.xlu0 %3186
        %v3191 = vadd.f32 %v3059, %v3183
        %v3192 = vadd.f32 %v3060, %v3185
        %v3193 = vadd.f32 %v3061, %v3187
        %s3194 = sld [smem:[#allocation2 + $0x296]]
        %v3195 = vstv %s3194
        %v3196 = vmul.f32 %v2944, %v3195
        %v3197 = vmul.f32 %v2945, %v3195
        %v3198 = vmul.f32 %v2946, %v3195
        %3202 = vrot.lane.b32.xlu0 %v3196, 127
        %v3203 = vpop.permute.xlu0 %3202
        %3204 = vrot.lane.b32.xlu0 %v3197, 127
        %v3205 = vpop.permute.xlu0 %3204
        %3206 = vrot.lane.b32.xlu0 %v3198, 127
        %v3207 = vpop.permute.xlu0 %3206
        %v3211 = vadd.f32 %v3067, %v3203
        %v3212 = vadd.f32 %v3068, %v3205
        %v3213 = vadd.f32 %v3069, %v3207
        %s3214 = sld [smem:[#allocation2 + $0x316]]
        %v3215 = vstv %s3214
        %v3216 = vmul.f32 %v2944, %v3215
        %v3217 = vmul.f32 %v2945, %v3215
        %v3218 = vmul.f32 %v2946, %v3215
        %3222 = vrot.lane.b32.xlu0 %v3216, 127
        %v3223 = vpop.permute.xlu0 %3222
        %3224 = vrot.lane.b32.xlu0 %v3217, 127
        %v3225 = vpop.permute.xlu0 %3224
        %3226 = vrot.lane.b32.xlu0 %v3218, 127
        %v3227 = vpop.permute.xlu0 %3226
        %v3231 = vadd.f32 %v3075, %v3223
        %v3232 = vadd.f32 %v3076, %v3225
        %v3233 = vadd.f32 %v3077, %v3227
        %s3234 = sld [smem:[#allocation2 + $0x396]]
        %v3235 = vstv %s3234
        %v3236 = vmul.f32 %v2944, %v3235
        %v3237 = vmul.f32 %v2945, %v3235
        %v3238 = vmul.f32 %v2946, %v3235
        %3242 = vrot.lane.b32.xlu0 %v3236, 127
        %v3243 = vpop.permute.xlu0 %3242
        %3244 = vrot.lane.b32.xlu0 %v3237, 127
        %v3245 = vpop.permute.xlu0 %3244
        %3246 = vrot.lane.b32.xlu0 %v3238, 127
        %v3247 = vpop.permute.xlu0 %3246
        %v3251 = vadd.f32 %v3083, %v3243
        %v3252 = vadd.f32 %v3084, %v3245
        %v3253 = vadd.f32 %v3085, %v3247
        %s3254 = sld [smem:[#allocation2 + $0x416]]
        %v3255 = vstv %s3254
        %v3256 = vmul.f32 %v2944, %v3255
        %v3257 = vmul.f32 %v2945, %v3255
        %v3258 = vmul.f32 %v2946, %v3255
        %3262 = vrot.lane.b32.xlu0 %v3256, 127
        %v3263 = vpop.permute.xlu0 %3262
        %3264 = vrot.lane.b32.xlu0 %v3257, 127
        %v3265 = vpop.permute.xlu0 %3264
        %3266 = vrot.lane.b32.xlu0 %v3258, 127
        %v3267 = vpop.permute.xlu0 %3266
        %v3271 = vadd.f32 %v3091, %v3263
        %v3272 = vadd.f32 %v3092, %v3265
        %v3273 = vadd.f32 %v3093, %v3267
        %s3274 = sld [smem:[#allocation2 + $0x17]]
        %v3275 = vstv %s3274
        %v3276 = vmul.f32 %v3019, %v3275
        %v3277 = vmul.f32 %v3020, %v3275
        %v3278 = vmul.f32 %v3021, %v3275
        %3282 = vrot.lane.b32.xlu0 %v3276, 127
        %v3283 = vpop.permute.xlu0 %3282
        %3284 = vrot.lane.b32.xlu0 %v3277, 127
        %v3285 = vpop.permute.xlu0 %3284
        %3286 = vrot.lane.b32.xlu0 %v3278, 127
        %v3287 = vpop.permute.xlu0 %3286
        %v3291 = vadd.f32 %v3111, %v3283
        %v3292 = vadd.f32 %v3112, %v3285
        %v3293 = vadd.f32 %v3113, %v3287
        %s3294 = sld [smem:[#allocation2 + $0x97]]
        %v3295 = vstv %s3294
        %v3296 = vmul.f32 %v3019, %v3295
        %v3297 = vmul.f32 %v3020, %v3295
        %v3298 = vmul.f32 %v3021, %v3295
        %3302 = vrot.lane.b32.xlu0 %v3296, 127
        %v3303 = vpop.permute.xlu0 %3302
        %3304 = vrot.lane.b32.xlu0 %v3297, 127
        %v3305 = vpop.permute.xlu0 %3304
        %3306 = vrot.lane.b32.xlu0 %v3298, 127
        %v3307 = vpop.permute.xlu0 %3306
        %v3311 = vadd.f32 %v3131, %v3303
        %v3312 = vadd.f32 %v3132, %v3305
        %v3313 = vadd.f32 %v3133, %v3307
        %s3314 = sld [smem:[#allocation2 + $0x117]]
        %v3315 = vstv %s3314
        %v3316 = vmul.f32 %v3019, %v3315
        %v3317 = vmul.f32 %v3020, %v3315
        %v3318 = vmul.f32 %v3021, %v3315
        %3322 = vrot.lane.b32.xlu0 %v3316, 127
        %v3323 = vpop.permute.xlu0 %3322
        %3324 = vrot.lane.b32.xlu0 %v3317, 127
        %v3325 = vpop.permute.xlu0 %3324
        %3326 = vrot.lane.b32.xlu0 %v3318, 127
        %v3327 = vpop.permute.xlu0 %3326
        %v3331 = vadd.f32 %v3151, %v3323
        %v3332 = vadd.f32 %v3152, %v3325
        %v3333 = vadd.f32 %v3153, %v3327
        %s3334 = sld [smem:[#allocation2 + $0x197]]
        %v3335 = vstv %s3334
        %v3336 = vmul.f32 %v3019, %v3335
        %v3337 = vmul.f32 %v3020, %v3335
        %v3338 = vmul.f32 %v3021, %v3335
        %3342 = vrot.lane.b32.xlu0 %v3336, 127
        %v3343 = vpop.permute.xlu0 %3342
        %3344 = vrot.lane.b32.xlu0 %v3337, 127
        %v3345 = vpop.permute.xlu0 %3344
        %3346 = vrot.lane.b32.xlu0 %v3338, 127
        %v3347 = vpop.permute.xlu0 %3346
        %v3351 = vadd.f32 %v3171, %v3343
        %v3352 = vadd.f32 %v3172, %v3345
        %v3353 = vadd.f32 %v3173, %v3347
        %s3354 = sld [smem:[#allocation2 + $0x217]]
        %v3355 = vstv %s3354
        %v3356 = vmul.f32 %v3019, %v3355
        %v3357 = vmul.f32 %v3020, %v3355
        %v3358 = vmul.f32 %v3021, %v3355
        %3362 = vrot.lane.b32.xlu0 %v3356, 127
        %v3363 = vpop.permute.xlu0 %3362
        %3364 = vrot.lane.b32.xlu0 %v3357, 127
        %v3365 = vpop.permute.xlu0 %3364
        %3366 = vrot.lane.b32.xlu0 %v3358, 127
        %v3367 = vpop.permute.xlu0 %3366
        %v3371 = vadd.f32 %v3191, %v3363
        %v3372 = vadd.f32 %v3192, %v3365
        %v3373 = vadd.f32 %v3193, %v3367
        %s3374 = sld [smem:[#allocation2 + $0x297]]
        %v3375 = vstv %s3374
        %v3376 = vmul.f32 %v3019, %v3375
        %v3377 = vmul.f32 %v3020, %v3375
        %v3378 = vmul.f32 %v3021, %v3375
        %3382 = vrot.lane.b32.xlu0 %v3376, 127
        %v3383 = vpop.permute.xlu0 %3382
        %3384 = vrot.lane.b32.xlu0 %v3377, 127
        %v3385 = vpop.permute.xlu0 %3384
        %3386 = vrot.lane.b32.xlu0 %v3378, 127
        %v3387 = vpop.permute.xlu0 %3386
        %v3391 = vadd.f32 %v3211, %v3383
        %v3392 = vadd.f32 %v3212, %v3385
        %v3393 = vadd.f32 %v3213, %v3387
        %s3394 = sld [smem:[#allocation2 + $0x317]]
        %v3395 = vstv %s3394
        %v3396 = vmul.f32 %v3019, %v3395
        %v3397 = vmul.f32 %v3020, %v3395
        %v3398 = vmul.f32 %v3021, %v3395
        %3402 = vrot.lane.b32.xlu0 %v3396, 127
        %v3403 = vpop.permute.xlu0 %3402
        %3404 = vrot.lane.b32.xlu0 %v3397, 127
        %v3405 = vpop.permute.xlu0 %3404
        %3406 = vrot.lane.b32.xlu0 %v3398, 127
        %v3407 = vpop.permute.xlu0 %3406
        %v3411 = vadd.f32 %v3231, %v3403
        %v3412 = vadd.f32 %v3232, %v3405
        %v3413 = vadd.f32 %v3233, %v3407
        %s3414 = sld [smem:[#allocation2 + $0x397]]
        %v3415 = vstv %s3414
        %v3416 = vmul.f32 %v3019, %v3415
        %v3417 = vmul.f32 %v3020, %v3415
        %v3418 = vmul.f32 %v3021, %v3415
        %3422 = vrot.lane.b32.xlu0 %v3416, 127
        %v3423 = vpop.permute.xlu0 %3422
        %3424 = vrot.lane.b32.xlu0 %v3417, 127
        %v3425 = vpop.permute.xlu0 %3424
        %3426 = vrot.lane.b32.xlu0 %v3418, 127
        %v3427 = vpop.permute.xlu0 %3426
        %v3431 = vadd.f32 %v3251, %v3423
        %v3432 = vadd.f32 %v3252, %v3425
        %v3433 = vadd.f32 %v3253, %v3427
        %s3434 = sld [smem:[#allocation2 + $0x417]]
        %v3435 = vstv %s3434
        %v3436 = vmul.f32 %v3019, %v3435
        %v3437 = vmul.f32 %v3020, %v3435
        %v3438 = vmul.f32 %v3021, %v3435
        %3442 = vrot.lane.b32.xlu0 %v3436, 127
        %v3443 = vpop.permute.xlu0 %3442
        %3444 = vrot.lane.b32.xlu0 %v3437, 127
        %v3445 = vpop.permute.xlu0 %3444
        %3446 = vrot.lane.b32.xlu0 %v3438, 127
        %v3447 = vpop.permute.xlu0 %3446
        %v3451 = vadd.f32 %v3271, %v3443
        %v3452 = vadd.f32 %v3272, %v3445
        %v3453 = vadd.f32 %v3273, %v3447
        %s3454 = sld [smem:[#allocation2 + $0x18]]
        %v3455 = vstv %s3454
        %v3456 = vmul.f32 %v2944, %v3455
        %v3457 = vmul.f32 %v2945, %v3455
        %v3458 = vmul.f32 %v2946, %v3455
        %3462 = vrot.lane.b32.xlu0 %v3456, 126
        %v3463 = vpop.permute.xlu0 %3462
        %3464 = vrot.lane.b32.xlu0 %v3457, 126
        %v3465 = vpop.permute.xlu0 %3464
        %3466 = vrot.lane.b32.xlu0 %v3458, 126
        %v3467 = vpop.permute.xlu0 %3466
        %v3471 = vadd.f32 %v3291, %v3463
        %v3472 = vadd.f32 %v3292, %v3465
        %v3473 = vadd.f32 %v3293, %v3467
        %s3474 = sld [smem:[#allocation2 + $0x98]]
        %v3475 = vstv %s3474
        %v3476 = vmul.f32 %v2944, %v3475
        %v3477 = vmul.f32 %v2945, %v3475
        %v3478 = vmul.f32 %v2946, %v3475
        %3482 = vrot.lane.b32.xlu0 %v3476, 126
        %v3483 = vpop.permute.xlu0 %3482
        %3484 = vrot.lane.b32.xlu0 %v3477, 126
        %v3485 = vpop.permute.xlu0 %3484
        %3486 = vrot.lane.b32.xlu0 %v3478, 126
        %v3487 = vpop.permute.xlu0 %3486
        %v3491 = vadd.f32 %v3311, %v3483
        %v3492 = vadd.f32 %v3312, %v3485
        %v3493 = vadd.f32 %v3313, %v3487
        %s3494 = sld [smem:[#allocation2 + $0x118]]
        %v3495 = vstv %s3494
        %v3496 = vmul.f32 %v2944, %v3495
        %v3497 = vmul.f32 %v2945, %v3495
        %v3498 = vmul.f32 %v2946, %v3495
        %3502 = vrot.lane.b32.xlu0 %v3496, 126
        %v3503 = vpop.permute.xlu0 %3502
        %3504 = vrot.lane.b32.xlu0 %v3497, 126
        %v3505 = vpop.permute.xlu0 %3504
        %3506 = vrot.lane.b32.xlu0 %v3498, 126
        %v3507 = vpop.permute.xlu0 %3506
        %v3511 = vadd.f32 %v3331, %v3503
        %v3512 = vadd.f32 %v3332, %v3505
        %v3513 = vadd.f32 %v3333, %v3507
        %s3514 = sld [smem:[#allocation2 + $0x198]]
        %v3515 = vstv %s3514
        %v3516 = vmul.f32 %v2944, %v3515
        %v3517 = vmul.f32 %v2945, %v3515
        %v3518 = vmul.f32 %v2946, %v3515
        %3522 = vrot.lane.b32.xlu0 %v3516, 126
        %v3523 = vpop.permute.xlu0 %3522
        %3524 = vrot.lane.b32.xlu0 %v3517, 126
        %v3525 = vpop.permute.xlu0 %3524
        %3526 = vrot.lane.b32.xlu0 %v3518, 126
        %v3527 = vpop.permute.xlu0 %3526
        %v3531 = vadd.f32 %v3351, %v3523
        %v3532 = vadd.f32 %v3352, %v3525
        %v3533 = vadd.f32 %v3353, %v3527
        %s3534 = sld [smem:[#allocation2 + $0x218]]
        %v3535 = vstv %s3534
        %v3536 = vmul.f32 %v2944, %v3535
        %v3537 = vmul.f32 %v2945, %v3535
        %v3538 = vmul.f32 %v2946, %v3535
        %3542 = vrot.lane.b32.xlu0 %v3536, 126
        %v3543 = vpop.permute.xlu0 %3542
        %3544 = vrot.lane.b32.xlu0 %v3537, 126
        %v3545 = vpop.permute.xlu0 %3544
        %3546 = vrot.lane.b32.xlu0 %v3538, 126
        %v3547 = vpop.permute.xlu0 %3546
        %v3551 = vadd.f32 %v3371, %v3543
        %v3552 = vadd.f32 %v3372, %v3545
        %v3553 = vadd.f32 %v3373, %v3547
        %s3554 = sld [smem:[#allocation2 + $0x298]]
        %v3555 = vstv %s3554
        %v3556 = vmul.f32 %v2944, %v3555
        %v3557 = vmul.f32 %v2945, %v3555
        %v3558 = vmul.f32 %v2946, %v3555
        %3562 = vrot.lane.b32.xlu0 %v3556, 126
        %v3563 = vpop.permute.xlu0 %3562
        %3564 = vrot.lane.b32.xlu0 %v3557, 126
        %v3565 = vpop.permute.xlu0 %3564
        %3566 = vrot.lane.b32.xlu0 %v3558, 126
        %v3567 = vpop.permute.xlu0 %3566
        %v3571 = vadd.f32 %v3391, %v3563
        %v3572 = vadd.f32 %v3392, %v3565
        %v3573 = vadd.f32 %v3393, %v3567
        %s3574 = sld [smem:[#allocation2 + $0x318]]
        %v3575 = vstv %s3574
        %v3576 = vmul.f32 %v2944, %v3575
        %v3577 = vmul.f32 %v2945, %v3575
        %v3578 = vmul.f32 %v2946, %v3575
        %3582 = vrot.lane.b32.xlu0 %v3576, 126
        %v3583 = vpop.permute.xlu0 %3582
        %3584 = vrot.lane.b32.xlu0 %v3577, 126
        %v3585 = vpop.permute.xlu0 %3584
        %3586 = vrot.lane.b32.xlu0 %v3578, 126
        %v3587 = vpop.permute.xlu0 %3586
        %v3591 = vadd.f32 %v3411, %v3583
        %v3592 = vadd.f32 %v3412, %v3585
        %v3593 = vadd.f32 %v3413, %v3587
        %s3594 = sld [smem:[#allocation2 + $0x398]]
        %v3595 = vstv %s3594
        %v3596 = vmul.f32 %v2944, %v3595
        %v3597 = vmul.f32 %v2945, %v3595
        %v3598 = vmul.f32 %v2946, %v3595
        %3602 = vrot.lane.b32.xlu0 %v3596, 126
        %v3603 = vpop.permute.xlu0 %3602
        %3604 = vrot.lane.b32.xlu0 %v3597, 126
        %v3605 = vpop.permute.xlu0 %3604
        %3606 = vrot.lane.b32.xlu0 %v3598, 126
        %v3607 = vpop.permute.xlu0 %3606
        %v3611 = vadd.f32 %v3431, %v3603
        %v3612 = vadd.f32 %v3432, %v3605
        %v3613 = vadd.f32 %v3433, %v3607
        %s3614 = sld [smem:[#allocation2 + $0x418]]
        %v3615 = vstv %s3614
        %v3616 = vmul.f32 %v2944, %v3615
        %v3617 = vmul.f32 %v2945, %v3615
        %v3618 = vmul.f32 %v2946, %v3615
        %3622 = vrot.lane.b32.xlu0 %v3616, 126
        %v3623 = vpop.permute.xlu0 %3622
        %3624 = vrot.lane.b32.xlu0 %v3617, 126
        %v3625 = vpop.permute.xlu0 %3624
        %3626 = vrot.lane.b32.xlu0 %v3618, 126
        %v3627 = vpop.permute.xlu0 %3626
        %v3631 = vadd.f32 %v3451, %v3623
        %v3632 = vadd.f32 %v3452, %v3625
        %v3633 = vadd.f32 %v3453, %v3627
        %s3634 = sld [smem:[#allocation4]]
        %v3635 = vstv %s3634
        %v3636 = vadd.f32 %v3471, %v3635
        %v3637 = vadd.f32 %v3472, %v3635
        %v3638 = vadd.f32 %v3473, %v3635
        %v3639 = vmax.f32 %v3636, 0.0
        %v3640 = vmax.f32 %v3637, 0.0
        %v3641 = vmax.f32 %v3638, 0.0
        %vm3642 = vcmask 64512
        %3643 = vst.msk [vmem:[%s206] sm:$0xff] %vm3642, %v3639
        %3644 = vst.msk [vmem:[%s206 + $0x48] sm:$0xff] %vm3642, %v3640
        %3645 = vst.msk [vmem:[%s206 + $0x90] sm:$0xff] %vm3642, %v3641
        %s3646 = sld [smem:[#allocation4 + $0x1]]
        %v3647 = vstv %s3646
        %v3648 = vadd.f32 %v3491, %v3647
        %v3649 = vadd.f32 %v3492, %v3647
        %v3650 = vadd.f32 %v3493, %v3647
        %v3651 = vmax.f32 %v3648, 0.0
        %v3652 = vmax.f32 %v3649, 0.0
        %v3653 = vmax.f32 %v3650, 0.0
        %s3654 = scalar_lea.vmem %s206, 8
        %3655 = vst.msk [vmem:[%s3654] sm:$0xff] %vm3642, %v3651
        %3656 = vst.msk [vmem:[%s3654 + $0x48] sm:$0xff] %vm3642, %v3652
        %3657 = vst.msk [vmem:[%s3654 + $0x90] sm:$0xff] %vm3642, %v3653
        %s3658 = sld [smem:[#allocation4 + $0x2]]
        %v3659 = vstv %s3658
        %v3660 = vadd.f32 %v3511, %v3659
        %v3661 = vadd.f32 %v3512, %v3659
        %v3662 = vadd.f32 %v3513, %v3659
        %v3663 = vmax.f32 %v3660, 0.0
        %v3664 = vmax.f32 %v3661, 0.0
        %v3665 = vmax.f32 %v3662, 0.0
        %s3666 = scalar_lea.vmem %s206, 16
        %3667 = vst.msk [vmem:[%s3666] sm:$0xff] %vm3642, %v3663
        %3668 = vst.msk [vmem:[%s3666 + $0x48] sm:$0xff] %vm3642, %v3664
        %3669 = vst.msk [vmem:[%s3666 + $0x90] sm:$0xff] %vm3642, %v3665
        %s3670 = sld [smem:[#allocation4 + $0x3]]
        %v3671 = vstv %s3670
        %v3672 = vadd.f32 %v3531, %v3671
        %v3673 = vadd.f32 %v3532, %v3671
        %v3674 = vadd.f32 %v3533, %v3671
        %v3675 = vmax.f32 %v3672, 0.0
        %v3676 = vmax.f32 %v3673, 0.0
        %v3677 = vmax.f32 %v3674, 0.0
        %s3678 = scalar_lea.vmem %s206, 24
        %3679 = vst.msk [vmem:[%s3678] sm:$0xff] %vm3642, %v3675
        %3680 = vst.msk [vmem:[%s3678 + $0x48] sm:$0xff] %vm3642, %v3676
        %3681 = vst.msk [vmem:[%s3678 + $0x90] sm:$0xff] %vm3642, %v3677
        %s3682 = sld [smem:[#allocation4 + $0x4]]
        %v3683 = vstv %s3682
        %v3684 = vadd.f32 %v3551, %v3683
        %v3685 = vadd.f32 %v3552, %v3683
        %v3686 = vadd.f32 %v3553, %v3683
        %v3687 = vmax.f32 %v3684, 0.0
        %v3688 = vmax.f32 %v3685, 0.0
        %v3689 = vmax.f32 %v3686, 0.0
        %s3690 = scalar_lea.vmem %s206, 32
        %3691 = vst.msk [vmem:[%s3690] sm:$0xff] %vm3642, %v3687
        %3692 = vst.msk [vmem:[%s3690 + $0x48] sm:$0xff] %vm3642, %v3688
        %3693 = vst.msk [vmem:[%s3690 + $0x90] sm:$0xff] %vm3642, %v3689
        %s3694 = sld [smem:[#allocation4 + $0x5]]
        %v3695 = vstv %s3694
        %v3696 = vadd.f32 %v3571, %v3695
        %v3697 = vadd.f32 %v3572, %v3695
        %v3698 = vadd.f32 %v3573, %v3695
        %v3699 = vmax.f32 %v3696, 0.0
        %v3700 = vmax.f32 %v3697, 0.0
        %v3701 = vmax.f32 %v3698, 0.0
        %s3702 = scalar_lea.vmem %s206, 40
        %3703 = vst.msk [vmem:[%s3702] sm:$0xff] %vm3642, %v3699
        %3704 = vst.msk [vmem:[%s3702 + $0x48] sm:$0xff] %vm3642, %v3700
        %3705 = vst.msk [vmem:[%s3702 + $0x90] sm:$0xff] %vm3642, %v3701
        %s3706 = sld [smem:[#allocation4 + $0x6]]
        %v3707 = vstv %s3706
        %v3708 = vadd.f32 %v3591, %v3707
        %v3709 = vadd.f32 %v3592, %v3707
        %v3710 = vadd.f32 %v3593, %v3707
        %v3711 = vmax.f32 %v3708, 0.0
        %v3712 = vmax.f32 %v3709, 0.0
        %v3713 = vmax.f32 %v3710, 0.0
        %s3714 = scalar_lea.vmem %s206, 48
        %3715 = vst.msk [vmem:[%s3714] sm:$0xff] %vm3642, %v3711
        %3716 = vst.msk [vmem:[%s3714 + $0x48] sm:$0xff] %vm3642, %v3712
        %3717 = vst.msk [vmem:[%s3714 + $0x90] sm:$0xff] %vm3642, %v3713
        %s3718 = sld [smem:[#allocation4 + $0x7]]
        %v3719 = vstv %s3718
        %v3720 = vadd.f32 %v3611, %v3719
        %v3721 = vadd.f32 %v3612, %v3719
        %v3722 = vadd.f32 %v3613, %v3719
        %v3723 = vmax.f32 %v3720, 0.0
        %v3724 = vmax.f32 %v3721, 0.0
        %v3725 = vmax.f32 %v3722, 0.0
        %s3726 = scalar_lea.vmem %s206, 56
        %3727 = vst.msk [vmem:[%s3726] sm:$0xff] %vm3642, %v3723
        %3728 = vst.msk [vmem:[%s3726 + $0x48] sm:$0xff] %vm3642, %v3724
        %3729 = vst.msk [vmem:[%s3726 + $0x90] sm:$0xff] %vm3642, %v3725
        %s3730 = sld [smem:[#allocation4 + $0x8]]
        %v3731 = vstv %s3730
        %v3732 = vadd.f32 %v3631, %v3731
        %v3733 = vadd.f32 %v3632, %v3731
        %v3734 = vadd.f32 %v3633, %v3731
        %v3735 = vmax.f32 %v3732, 0.0
        %v3736 = vmax.f32 %v3733, 0.0
        %v3737 = vmax.f32 %v3734, 0.0
        %s3738 = scalar_lea.vmem %s206, 64
        %3739 = vst.msk [vmem:[%s3738] sm:$0xff] %vm3642, %v3735
        %3740 = vst.msk [vmem:[%s3738 + $0x48] sm:$0xff] %vm3642, %v3736
        %3741 = vst.msk [vmem:[%s3738 + $0x90] sm:$0xff] %vm3642, %v3737
        %s3742 = smul.u32 3, %s16
        %p3743 = scmp.lt.s32.totalorder %s3742, 5
        %s3744 = scalar_select %p3743, %s3742, 5
        %s3745 = smul.addr %s3744, 9
        %s3746 = smul.addr %s3745, 8
        %s3747 = scalar_lea.vmem %s3, %s3746
        // Predicated region
        $region41: #{tpu_custom_call.1} parent=31 // pred_check
          %p3748 = pneg %p102
        $region42: #{tpu_custom_call.1} parent=31 // pred_check_branch
          %3750 = sbr.rel (%p3748) target = $region44
        $region43: #{tpu_custom_call.1} parent=31 // pred_region
          %s3751 = smul.u32 3, %s16
        $region44: #{tpu_custom_call.1} parent=31 // pred_fallthru
          _
      $region32: #{tpu_custom_call.1} parent=5 // pred_fallthru
        _
      %p3752 = scmp.le.s32.totalorder 2, %s11
      // Predicated region
      $region45: #{tpu_custom_call.1} parent=5 // pred_check
        %p3753 = pneg %p3752
      $region46: #{tpu_custom_call.1} parent=5 // pred_check_branch
        %3755 = sbr.rel (%p3753) target = $region48
      $region47: #{tpu_custom_call.1} parent=5 // pred_region
        %s3756 = ssub.s32 %s11, 2
        // Predicated region
        $region49: #{tpu_custom_call.1} parent=47 // pred_check
          %p3757 = pneg %p108
        $region50: #{tpu_custom_call.1} parent=47 // pred_check_branch
          %3759 = sbr.rel (%p3757) target = $region52
        $region51: #{tpu_custom_call.1} parent=47 // pred_region
          %s3760 = smul.u32 3, %s17
          %p3761 = scmp.lt.s32.totalorder %s3760, 5
          %s3762 = scalar_select %p3761, %s3760, 5
          %s3763 = smul.addr %s3762, 9
          %s3764 = smul.addr %s3763, 8
          %s3765 = scalar_lea.vmem %s3, %s3764
        $region52: #{tpu_custom_call.1} parent=47 // pred_fallthru
          _
      $region48: #{tpu_custom_call.1} parent=5 // pred_fallthru
        _
    $region6: #{tpu_custom_call.1} parent=1 // loop_footer
      %s15 = sadd.s32 1, %s11
    $region7: #{tpu_custom_call.1} parent=1 // loop_footer_branch
      %10 = sbr.rel target = $region3
    $region8: #{tpu_custom_call.1} parent=1 // loop_exit
      _
    %3766 = vsyncpa [#allocation3], 1
    %s3767 = scalar_lea.sflag [#allocation3], 1
    %3768 = vsyncpa %s3767, 1
    %3769 = vsyncpa [#allocation5], 1

</llo_original>
